<compile_context>
chip_gen: v7x
topology: tpu7x:2x2x1
jax: 0.10.0
libtpu: 0.0.40
codegen_flags: <defaults>
</compile_context>

<pallas_src>
import functools

import jax
import jax.numpy as jnp
import numpy as np
from jax.experimental import pallas as pl
from jax.experimental.pallas import tpu as pltpu


def _make_divisible(v, divisor=8):
    new_v = max(divisor, int(v + divisor / 2) // divisor * divisor)
    if new_v < 0.9 * v:
        new_v += divisor
    return new_v


# --------------------------------------------------------------------------
# Pallas kernel (one batch element per grid step, channel-major layout)
# --------------------------------------------------------------------------
def make_inverted_residual_kernel(K, S, P, H, W, Ho, Wo,
                                  has_expand, use_se, shortcut):
    Hp, Wp = H + 2 * P, W + 2 * P

    def kernel(x_ref, w_exp_ref, sc_exp_ref, b_exp_ref,
               w_dw_ref, sc_dw_ref, b_dw_ref,
               se_w1_ref, se_b1_ref, se_w2_ref, se_b2_ref,
               w_pr_ref, sc_pr_ref, b_pr_ref,
               o_ref, pad_ref):
        Cmid = w_dw_ref.shape[0]

        # Input tile: (Cin, H*W) — channels on sublanes, spatial on lanes.
        x = x_ref[0].astype(jnp.float32)

        # ---- 1x1 expand conv + folded BN + ReLU (skipped if mid == in) ----
        if has_expand:
            h = jnp.dot(w_exp_ref[...], x, preferred_element_type=jnp.float32)
            h = h * sc_exp_ref[...] + b_exp_ref[...]         # (Cmid,1) lane bcast
            h = jnp.maximum(h, 0.0)
        else:
            h = x                                            # Cmid == Cin

        # ---- depthwise KxK conv, stride S ---------------------------------
        # Zero only the halo strips (interior is fully overwritten every
        # step, so this stays correct with a "parallel" batch axis).
        if P > 0:
            zrow = jnp.zeros((Cmid, P, Wp), jnp.float32)
            zcol = jnp.zeros((Cmid, Hp, P), jnp.float32)
            pad_ref[:, pl.ds(0, P), :] = zrow
            pad_ref[:, pl.ds(P + H, P), :] = zrow
            pad_ref[:, :, pl.ds(0, P)] = zcol
            pad_ref[:, :, pl.ds(P + W, P)] = zcol
        pad_ref[:, pl.ds(P, H), pl.ds(P, W)] = h.reshape(Cmid, H, W)

        wdw = w_dw_ref[...]                                  # (Cmid, K*K), hoisted
        acc3 = jnp.zeros((Cmid, Ho, Wo), jnp.float32)
        for kh in range(K):
            for kw in range(K):
                if S == 1:
                    tap = pad_ref[:, pl.ds(kh, Ho), pl.ds(kw, Wo)]
                else:
                    tap = pad_ref[:, pl.ds(kh, Ho, stride=S),
                                  pl.ds(kw, Wo, stride=S)]
                kk = kh * K + kw
                w_tap = wdw[:, kk:kk + 1][:, :, None]        # (Cmid, 1, 1)
                acc3 = acc3 + tap * w_tap
        # Single relayout after the tap loop (not per tap).
        acc = acc3.reshape(Cmid, Ho * Wo)

        acc = acc * sc_dw_ref[...] + b_dw_ref[...]           # folded BN
        acc = jnp.maximum(acc, 0.0)                          # ReLU

        # ---- Squeeze-Excitation -------------------------------------------
        if use_se:
            pooled = jnp.mean(acc, axis=1, keepdims=True)    # (Cmid, 1)
            s1 = jnp.dot(se_w1_ref[...], pooled,
                         preferred_element_type=jnp.float32) + se_b1_ref[...]
            s1 = jnp.maximum(s1, 0.0)                        # ReLU
            s2 = jnp.dot(se_w2_ref[...], s1,
                         preferred_element_type=jnp.float32) + se_b2_ref[...]
            s2 = jnp.clip(s2 / 6.0 + 0.5, 0.0, 1.0)          # Hardsigmoid
            acc = acc * s2                                   # per-channel scale

        # ---- 1x1 project conv + folded BN (no activation) -----------------
        y = jnp.dot(w_pr_ref[...], acc, preferred_element_type=jnp.float32)
        y = y * sc_pr_ref[...] + b_pr_ref[...]

        if shortcut:
            y = y + x

        # Lane-dense store: (Cout, Ho*Wo), lane width = Ho*Wo (multiple of 128
        # at these sizes) -> unmasked vst.
        o_ref[0] = y.astype(o_ref.dtype)

    return kernel


# --------------------------------------------------------------------------
# Wrapper (pure reshapes at the boundary — no transposes)
# --------------------------------------------------------------------------
def inverted_residual_pallas(x_nchw, p, *, kernel_size, stride, use_se):
    N, Cin, H, W = x_nchw.shape
    Cmid = p["w_dw"].shape[0]
    Cout = p["w_pr"].shape[0]
    K, S = kernel_size, stride
    P = K // 2                                   # pad(k, d=1) == k // 2
    Ho = (H + 2 * P - K) // S + 1
    Wo = (W + 2 * P - K) // S + 1
    has_expand = (Cmid != Cin)
    shortcut = (S == 1 and Cin == Cout)

    # NCHW -> (N, C, H*W): pure reshape, channel-major for the kernel.
    x = x_nchw.reshape(N, Cin, H * W).astype(jnp.float32)

    param_list = [p["w_exp"], p["sc_exp"], p["b_exp"],
                  p["w_dw"], p["sc_dw"], p["b_dw"],
                  p["se_w1"], p["se_b1"], p["se_w2"], p["se_b2"],
                  p["w_pr"], p["sc_pr"], p["b_pr"]]

    def const_spec(arr):
        nd = arr.ndim
        return pl.BlockSpec(arr.shape, lambda n, _nd=nd: (0,) * _nd)

    in_specs = [pl.BlockSpec((1, Cin, H * W), lambda n: (n, 0, 0))]
    in_specs += [const_spec(a) for a in param_list]

    kernel = make_inverted_residual_kernel(K, S, P, H, W, Ho, Wo,
                                           has_expand, use_se, shortcut)

    out = pl.pallas_call(
        kernel,
        out_shape=jax.ShapeDtypeStruct((N, Cout, Ho * Wo), jnp.float32),
        grid_spec=pltpu.PrefetchScalarGridSpec(
            num_scalar_prefetch=0,
            grid=(N,),
            in_specs=in_specs,
            out_specs=pl.BlockSpec((1, Cout, Ho * Wo), lambda n: (n, 0, 0)),
            scratch_shapes=[
                pltpu.VMEM((Cmid, H + 2 * P, W + 2 * P), jnp.float32)],
        ),
        # Batch axis is independent -> "parallel" (shards across the 2 TCs
        # on v7x; harmless on v5e/v6e).
        compiler_params=pltpu.CompilerParams(
            dimension_semantics=("parallel",)),
    )(x, *param_list)

    return out.reshape(N, Cout, Ho, Wo)          # pure reshape back to NCHW


# --------------------------------------------------------------------------
# Plain-JAX reference (same math, used for correctness check)
# --------------------------------------------------------------------------
def ref_forward(x_nchw, p, *, kernel_size, stride, use_se):
    x = x_nchw.astype(jnp.float32)               # (N, Cin, H, W)
    N, Cin, H, W = x.shape
    Cmid = p["w_dw"].shape[0]
    Cout = p["w_pr"].shape[0]
    K, S = kernel_size, stride
    P = K // 2
    Ho = (H + 2 * P - K) // S + 1
    Wo = (W + 2 * P - K) // S + 1
    has_expand = (Cmid != Cin)
    shortcut = (S == 1 and Cin == Cout)

    def bn(t, sc, b):                            # sc, b: (C, 1)
        return t * sc[None, :, :, None] + b[None, :, :, None]

    h = x
    if has_expand:
        h = jnp.einsum("mc,nchw->nmhw", p["w_exp"], x)
        h = jnp.maximum(bn(h, p["sc_exp"], p["b_exp"]), 0.0)

    hp = jnp.pad(h, ((0, 0), (0, 0), (P, P), (P, P)))
    wk = p["w_dw"].reshape(Cmid, K, K)
    acc = jnp.zeros((N, Cmid, Ho, Wo), jnp.float32)
    for kh in range(K):
        for kw in range(K):
            acc = acc + (hp[:, :, kh:kh + (Ho - 1) * S + 1:S,
                            kw:kw + (Wo - 1) * S + 1:S]
                         * wk[:, kh, kw][None, :, None, None])
    acc = jnp.maximum(bn(acc, p["sc_dw"], p["b_dw"]), 0.0)

    if use_se:
        pooled = acc.mean(axis=(2, 3))                            # (N, Cmid)
        s1 = jnp.maximum(pooled @ p["se_w1"].T + p["se_b1"][:, 0], 0.0)
        s2 = s1 @ p["se_w2"].T + p["se_b2"][:, 0]
        s2 = jnp.clip(s2 / 6.0 + 0.5, 0.0, 1.0)
        acc = acc * s2[:, :, None, None]

    y = bn(jnp.einsum("om,nmhw->nohw", p["w_pr"], acc),
           p["sc_pr"], p["b_pr"])
    if shortcut:
        y = y + x
    return y


# --------------------------------------------------------------------------
# Deterministic parameter init (synthetic; BN folded into scale/bias).
# Conv weights are in PyTorch (out_ch, in_ch) orientation, per-channel
# scale/bias as (C, 1) — exactly the layout the C-major kernel consumes.
# --------------------------------------------------------------------------
def init_params(key, cin, cmid, cout, k):
    ks = jax.random.split(key, 20)

    def folded_bn(k0, k1, k2, k3, c, eps=1e-3):
        gamma = 1.0 + 0.1 * jax.random.normal(k0, (c,), jnp.float32)
        beta = 0.1 * jax.random.normal(k1, (c,), jnp.float32)
        mean = 0.1 * jax.random.normal(k2, (c,), jnp.float32)
        var = jax.random.uniform(k3, (c,), jnp.float32, 0.5, 1.5)
        scale = gamma / jnp.sqrt(var + eps)
        bias = beta - mean * scale
        return scale[:, None], bias[:, None]

    cse = _make_divisible(cmid // 4)
    p = {}
    p["w_exp"] = 0.2 * jax.random.normal(ks[0], (cmid, cin), jnp.float32)
    p["sc_exp"], p["b_exp"] = folded_bn(ks[1], ks[2], ks[3], ks[4], cmid)
    p["w_dw"] = 0.2 * jax.random.normal(ks[5], (cmid, k * k), jnp.float32)
    p["sc_dw"], p["b_dw"] = folded_bn(ks[6], ks[7], ks[8], ks[9], cmid)
    p["se_w1"] = 0.2 * jax.random.normal(ks[10], (cse, cmid), jnp.float32)
    p["se_b1"] = 0.1 * jax.random.normal(ks[11], (cse, 1), jnp.float32)
    p["se_w2"] = 0.2 * jax.random.normal(ks[12], (cmid, cse), jnp.float32)
    p["se_b2"] = 0.1 * jax.random.normal(ks[13], (cmid, 1), jnp.float32)
    p["w_pr"] = 0.2 * jax.random.normal(ks[14], (cout, cmid), jnp.float32)
    p["sc_pr"], p["b_pr"] = folded_bn(ks[15], ks[16], ks[17], ks[18], cout)
    return p


if __name__ == "__main__":
    # Config: InvertedResidual(in=8, mid=16, out=8, k=3, s=1, use_se=True, act=ReLU)
    N, Cin, Cmid, Cout = 2, 8, 16, 8
    K, S, USE_SE = 3, 1, True
    H = W = 16

    key = jax.random.PRNGKey(0)
    kx, kp = jax.random.split(key)
    x = jax.random.normal(kx, (N, Cin, H, W), jnp.float32)   # NCHW (PyTorch)
    params = init_params(kp, Cin, Cmid, Cout, K)

    run = jax.jit(functools.partial(inverted_residual_pallas,
                                    kernel_size=K, stride=S, use_se=USE_SE))
    out = jax.block_until_ready(run(x, params))

    ref = jax.block_until_ready(
        ref_forward(x, params, kernel_size=K, stride=S, use_se=USE_SE))

    assert out.shape == (N, Cout, H, W), out.shape
    np.testing.assert_allclose(np.asarray(out), np.asarray(ref),
                               rtol=1e-2, atol=1e-2)
    print("KERNEL_OK")
</pallas_src>

<mosaic_0001>
module attributes {stable_mosaic.version = 11 : i64} {
  func.func @kernel(%arg0: i32, %arg1: memref<1x8x256xf32, #tpu.memory_space<vmem>>, %arg2: memref<16x8xf32, #tpu.memory_space<vmem>>, %arg3: memref<16x1xf32, #tpu.memory_space<vmem>>, %arg4: memref<16x1xf32, #tpu.memory_space<vmem>>, %arg5: memref<16x9xf32, #tpu.memory_space<vmem>>, %arg6: memref<16x1xf32, #tpu.memory_space<vmem>>, %arg7: memref<16x1xf32, #tpu.memory_space<vmem>>, %arg8: memref<8x16xf32, #tpu.memory_space<vmem>>, %arg9: memref<8x1xf32, #tpu.memory_space<vmem>>, %arg10: memref<16x8xf32, #tpu.memory_space<vmem>>, %arg11: memref<16x1xf32, #tpu.memory_space<vmem>>, %arg12: memref<8x16xf32, #tpu.memory_space<vmem>>, %arg13: memref<8x1xf32, #tpu.memory_space<vmem>>, %arg14: memref<8x1xf32, #tpu.memory_space<vmem>>, %arg15: memref<1x8x256xf32, #tpu.memory_space<vmem>>, %arg16: memref<16x18x18xf32, #tpu.memory_space<vmem>>) attributes {dimension_semantics = [#tpu.dimension_semantics<parallel>], iteration_bounds = array<i64: 2>, scalar_prefetch = 0 : i64, scratch_operands = 1 : i64, tpu.core_type = #tpu.core_type<tc>, window_params = [{transform_indices = @transform_0, window_bounds = array<i64: 1, 8, 256>}, {pipeline_mode = #tpu.pipeline_mode<synchronous>, transform_indices = @transform_1, window_bounds = array<i64: 16, 8>}, {pipeline_mode = #tpu.pipeline_mode<synchronous>, transform_indices = @transform_2, window_bounds = array<i64: 16, 1>}, {pipeline_mode = #tpu.pipeline_mode<synchronous>, transform_indices = @transform_3, window_bounds = array<i64: 16, 1>}, {pipeline_mode = #tpu.pipeline_mode<synchronous>, transform_indices = @transform_4, window_bounds = array<i64: 16, 9>}, {pipeline_mode = #tpu.pipeline_mode<synchronous>, transform_indices = @transform_5, window_bounds = array<i64: 16, 1>}, {pipeline_mode = #tpu.pipeline_mode<synchronous>, transform_indices = @transform_6, window_bounds = array<i64: 16, 1>}, {pipeline_mode = #tpu.pipeline_mode<synchronous>, transform_indices = @transform_7, window_bounds = array<i64: 8, 16>}, {pipeline_mode = #tpu.pipeline_mode<synchronous>, transform_indices = @transform_8, window_bounds = array<i64: 8, 1>}, {pipeline_mode = #tpu.pipeline_mode<synchronous>, transform_indices = @transform_9, window_bounds = array<i64: 16, 8>}, {pipeline_mode = #tpu.pipeline_mode<synchronous>, transform_indices = @transform_10, window_bounds = array<i64: 16, 1>}, {pipeline_mode = #tpu.pipeline_mode<synchronous>, transform_indices = @transform_11, window_bounds = array<i64: 8, 16>}, {pipeline_mode = #tpu.pipeline_mode<synchronous>, transform_indices = @transform_12, window_bounds = array<i64: 8, 1>}, {pipeline_mode = #tpu.pipeline_mode<synchronous>, transform_indices = @transform_13, window_bounds = array<i64: 8, 1>}, {transform_indices = @transform_14, window_bounds = array<i64: 1, 8, 256>}]} {
    %c0 = arith.constant 0 : index
    %c0_0 = arith.constant 0 : index
    %c0_1 = arith.constant 0 : index
    %0 = vector.load %arg1[%c0, %c0_0, %c0_1] : memref<1x8x256xf32, #tpu.memory_space<vmem>>, vector<1x8x256xf32>
    %1 = vector.shape_cast %0 : vector<1x8x256xf32> to vector<8x256xf32>
    %c0_2 = arith.constant 0 : index
    %c0_3 = arith.constant 0 : index
    %2 = vector.load %arg2[%c0_2, %c0_3] : memref<16x8xf32, #tpu.memory_space<vmem>>, vector<16x8xf32>
    %cst = arith.constant dense<0.000000e+00> : vector<16x256xf32>
    %3 = tpu.matmul %2, %1, %cst {dimension_numbers = #tpu.dot_dimension_numbers<[1], [0], [0], [1], [0, 0, 1, 1], [], []>} : vector<16x8xf32>, vector<8x256xf32>, vector<16x256xf32> -> vector<16x256xf32>
    %c0_4 = arith.constant 0 : index
    %c0_5 = arith.constant 0 : index
    %4 = vector.load %arg3[%c0_4, %c0_5] : memref<16x1xf32, #tpu.memory_space<vmem>>, vector<16x1xf32>
    %5 = vector.broadcast %4 : vector<16x1xf32> to vector<16x256xf32>
    %6 = arith.mulf %3, %5 : vector<16x256xf32>
    %c0_6 = arith.constant 0 : index
    %c0_7 = arith.constant 0 : index
    %7 = vector.load %arg4[%c0_6, %c0_7] : memref<16x1xf32, #tpu.memory_space<vmem>>, vector<16x1xf32>
    %8 = vector.broadcast %7 : vector<16x1xf32> to vector<16x256xf32>
    %9 = arith.addf %6, %8 : vector<16x256xf32>
    %cst_8 = arith.constant 0.000000e+00 : f32
    %10 = vector.broadcast %cst_8 : f32 to vector<16x256xf32>
    %11 = arith.maximumf %9, %10 : vector<16x256xf32>
    %cst_9 = arith.constant 0.000000e+00 : f32
    %12 = vector.broadcast %cst_9 : f32 to vector<16x1x18xf32>
    %cst_10 = arith.constant 0.000000e+00 : f32
    %13 = vector.broadcast %cst_10 : f32 to vector<16x18x1xf32>
    %c0_11 = arith.constant 0 : index
    %c0_12 = arith.constant 0 : index
    %c0_13 = arith.constant 0 : index
    %14 = vector.load %arg16[%c0_11, %c0_12, %c0_13] : memref<16x18x18xf32, #tpu.memory_space<vmem>>, vector<16x1x18xf32>
    tpu.vector_store %arg16[%c0_11, %c0_12, %c0_13], %12 {strides = array<i32>} : memref<16x18x18xf32, #tpu.memory_space<vmem>>, vector<16x1x18xf32>,
    %c0_14 = arith.constant 0 : index
    %c17 = arith.constant 17 : index
    %c0_15 = arith.constant 0 : index
    %15 = vector.load %arg16[%c0_14, %c17, %c0_15] : memref<16x18x18xf32, #tpu.memory_space<vmem>>, vector<16x1x18xf32>
    tpu.vector_store %arg16[%c0_14, %c17, %c0_15], %12 {strides = array<i32>} : memref<16x18x18xf32, #tpu.memory_space<vmem>>, vector<16x1x18xf32>,
    %c0_16 = arith.constant 0 : index
    %c0_17 = arith.constant 0 : index
    %c0_18 = arith.constant 0 : index
    %16 = vector.load %arg16[%c0_16, %c0_17, %c0_18] : memref<16x18x18xf32, #tpu.memory_space<vmem>>, vector<16x18x1xf32>
    tpu.vector_store %arg16[%c0_16, %c0_17, %c0_18], %13 {strides = array<i32>} : memref<16x18x18xf32, #tpu.memory_space<vmem>>, vector<16x18x1xf32>,
    %c0_19 = arith.constant 0 : index
    %c0_20 = arith.constant 0 : index
    %c17_21 = arith.constant 17 : index
    %17 = vector.load %arg16[%c0_19, %c0_20, %c17_21] : memref<16x18x18xf32, #tpu.memory_space<vmem>>, vector<16x18x1xf32>
    tpu.vector_store %arg16[%c0_19, %c0_20, %c17_21], %13 {strides = array<i32>} : memref<16x18x18xf32, #tpu.memory_space<vmem>>, vector<16x18x1xf32>,
    %18 = vector.shape_cast %11 : vector<16x256xf32> to vector<16x16x16xf32>
    %c0_22 = arith.constant 0 : index
    %c1 = arith.constant 1 : index
    %c1_23 = arith.constant 1 : index
    %19 = vector.load %arg16[%c0_22, %c1, %c1_23] : memref<16x18x18xf32, #tpu.memory_space<vmem>>, vector<16x16x16xf32>
    tpu.vector_store %arg16[%c0_22, %c1, %c1_23], %18 {strides = array<i32>} : memref<16x18x18xf32, #tpu.memory_space<vmem>>, vector<16x16x16xf32>,
    %c0_24 = arith.constant 0 : index
    %c0_25 = arith.constant 0 : index
    %20 = vector.load %arg5[%c0_24, %c0_25] : memref<16x9xf32, #tpu.memory_space<vmem>>, vector<16x9xf32>
    %cst_26 = arith.constant 0.000000e+00 : f32
    %21 = vector.broadcast %cst_26 : f32 to vector<16x16x16xf32>
    %c0_27 = arith.constant 0 : index
    %c0_28 = arith.constant 0 : index
    %c0_29 = arith.constant 0 : index
    %22 = vector.load %arg16[%c0_27, %c0_28, %c0_29] : memref<16x18x18xf32, #tpu.memory_space<vmem>>, vector<16x16x16xf32>
    %23 = vector.extract_strided_slice %20 {offsets = [0, 0], sizes = [16, 1], strides = [1, 1]} : vector<16x9xf32> to vector<16x1xf32>
    %24 = vector.shape_cast %23 : vector<16x1xf32> to vector<16x1x1xf32>
    %25 = vector.broadcast %24 : vector<16x1x1xf32> to vector<16x16x16xf32>
    %26 = arith.mulf %22, %25 : vector<16x16x16xf32>
    %27 = arith.addf %21, %26 : vector<16x16x16xf32>
    %c0_30 = arith.constant 0 : index
    %c0_31 = arith.constant 0 : index
    %c1_32 = arith.constant 1 : index
    %28 = vector.load %arg16[%c0_30, %c0_31, %c1_32] : memref<16x18x18xf32, #tpu.memory_space<vmem>>, vector<16x16x16xf32>
    %29 = vector.extract_strided_slice %20 {offsets = [0, 1], sizes = [16, 1], strides = [1, 1]} : vector<16x9xf32> to vector<16x1xf32>
    %30 = vector.shape_cast %29 : vector<16x1xf32> to vector<16x1x1xf32>
    %31 = vector.broadcast %30 : vector<16x1x1xf32> to vector<16x16x16xf32>
    %32 = arith.mulf %28, %31 : vector<16x16x16xf32>
    %33 = arith.addf %27, %32 : vector<16x16x16xf32>
    %c0_33 = arith.constant 0 : index
    %c0_34 = arith.constant 0 : index
    %c2 = arith.constant 2 : index
    %34 = vector.load %arg16[%c0_33, %c0_34, %c2] : memref<16x18x18xf32, #tpu.memory_space<vmem>>, vector<16x16x16xf32>
    %35 = vector.extract_strided_slice %20 {offsets = [0, 2], sizes = [16, 1], strides = [1, 1]} : vector<16x9xf32> to vector<16x1xf32>
    %36 = vector.shape_cast %35 : vector<16x1xf32> to vector<16x1x1xf32>
    %37 = vector.broadcast %36 : vector<16x1x1xf32> to vector<16x16x16xf32>
    %38 = arith.mulf %34, %37 : vector<16x16x16xf32>
    %39 = arith.addf %33, %38 : vector<16x16x16xf32>
    %c0_35 = arith.constant 0 : index
    %c1_36 = arith.constant 1 : index
    %c0_37 = arith.constant 0 : index
    %40 = vector.load %arg16[%c0_35, %c1_36, %c0_37] : memref<16x18x18xf32, #tpu.memory_space<vmem>>, vector<16x16x16xf32>
    %41 = vector.extract_strided_slice %20 {offsets = [0, 3], sizes = [16, 1], strides = [1, 1]} : vector<16x9xf32> to vector<16x1xf32>
    %42 = vector.shape_cast %41 : vector<16x1xf32> to vector<16x1x1xf32>
    %43 = vector.broadcast %42 : vector<16x1x1xf32> to vector<16x16x16xf32>
    %44 = arith.mulf %40, %43 : vector<16x16x16xf32>
    %45 = arith.addf %39, %44 : vector<16x16x16xf32>
    %c0_38 = arith.constant 0 : index
    %c1_39 = arith.constant 1 : index
    %c1_40 = arith.constant 1 : index
    %46 = vector.load %arg16[%c0_38, %c1_39, %c1_40] : memref<16x18x18xf32, #tpu.memory_space<vmem>>, vector<16x16x16xf32>
    %47 = vector.extract_strided_slice %20 {offsets = [0, 4], sizes = [16, 1], strides = [1, 1]} : vector<16x9xf32> to vector<16x1xf32>
    %48 = vector.shape_cast %47 : vector<16x1xf32> to vector<16x1x1xf32>
    %49 = vector.broadcast %48 : vector<16x1x1xf32> to vector<16x16x16xf32>
    %50 = arith.mulf %46, %49 : vector<16x16x16xf32>
    %51 = arith.addf %45, %50 : vector<16x16x16xf32>
    %c0_41 = arith.constant 0 : index
    %c1_42 = arith.constant 1 : index
    %c2_43 = arith.constant 2 : index
    %52 = vector.load %arg16[%c0_41, %c1_42, %c2_43] : memref<16x18x18xf32, #tpu.memory_space<vmem>>, vector<16x16x16xf32>
    %53 = vector.extract_strided_slice %20 {offsets = [0, 5], sizes = [16, 1], strides = [1, 1]} : vector<16x9xf32> to vector<16x1xf32>
    %54 = vector.shape_cast %53 : vector<16x1xf32> to vector<16x1x1xf32>
    %55 = vector.broadcast %54 : vector<16x1x1xf32> to vector<16x16x16xf32>
    %56 = arith.mulf %52, %55 : vector<16x16x16xf32>
    %57 = arith.addf %51, %56 : vector<16x16x16xf32>
    %c0_44 = arith.constant 0 : index
    %c2_45 = arith.constant 2 : index
    %c0_46 = arith.constant 0 : index
    %58 = vector.load %arg16[%c0_44, %c2_45, %c0_46] : memref<16x18x18xf32, #tpu.memory_space<vmem>>, vector<16x16x16xf32>
    %59 = vector.extract_strided_slice %20 {offsets = [0, 6], sizes = [16, 1], strides = [1, 1]} : vector<16x9xf32> to vector<16x1xf32>
    %60 = vector.shape_cast %59 : vector<16x1xf32> to vector<16x1x1xf32>
    %61 = vector.broadcast %60 : vector<16x1x1xf32> to vector<16x16x16xf32>
    %62 = arith.mulf %58, %61 : vector<16x16x16xf32>
    %63 = arith.addf %57, %62 : vector<16x16x16xf32>
    %c0_47 = arith.constant 0 : index
    %c2_48 = arith.constant 2 : index
    %c1_49 = arith.constant 1 : index
    %64 = vector.load %arg16[%c0_47, %c2_48, %c1_49] : memref<16x18x18xf32, #tpu.memory_space<vmem>>, vector<16x16x16xf32>
    %65 = vector.extract_strided_slice %20 {offsets = [0, 7], sizes = [16, 1], strides = [1, 1]} : vector<16x9xf32> to vector<16x1xf32>
    %66 = vector.shape_cast %65 : vector<16x1xf32> to vector<16x1x1xf32>
    %67 = vector.broadcast %66 : vector<16x1x1xf32> to vector<16x16x16xf32>
    %68 = arith.mulf %64, %67 : vector<16x16x16xf32>
    %69 = arith.addf %63, %68 : vector<16x16x16xf32>
    %c0_50 = arith.constant 0 : index
    %c2_51 = arith.constant 2 : index
    %c2_52 = arith.constant 2 : index
    %70 = vector.load %arg16[%c0_50, %c2_51, %c2_52] : memref<16x18x18xf32, #tpu.memory_space<vmem>>, vector<16x16x16xf32>
    %71 = vector.extract_strided_slice %20 {offsets = [0, 8], sizes = [16, 1], strides = [1, 1]} : vector<16x9xf32> to vector<16x1xf32>
    %72 = vector.shape_cast %71 : vector<16x1xf32> to vector<16x1x1xf32>
    %73 = vector.broadcast %72 : vector<16x1x1xf32> to vector<16x16x16xf32>
    %74 = arith.mulf %70, %73 : vector<16x16x16xf32>
    %75 = arith.addf %69, %74 : vector<16x16x16xf32>
    %76 = vector.shape_cast %75 : vector<16x16x16xf32> to vector<16x256xf32>
    %c0_53 = arith.constant 0 : index
    %c0_54 = arith.constant 0 : index
    %77 = vector.load %arg6[%c0_53, %c0_54] : memref<16x1xf32, #tpu.memory_space<vmem>>, vector<16x1xf32>
    %78 = vector.broadcast %77 : vector<16x1xf32> to vector<16x256xf32>
    %79 = arith.mulf %76, %78 : vector<16x256xf32>
    %c0_55 = arith.constant 0 : index
    %c0_56 = arith.constant 0 : index
    %80 = vector.load %arg7[%c0_55, %c0_56] : memref<16x1xf32, #tpu.memory_space<vmem>>, vector<16x1xf32>
    %81 = vector.broadcast %80 : vector<16x1xf32> to vector<16x256xf32>
    %82 = arith.addf %79, %81 : vector<16x256xf32>
    %cst_57 = arith.constant 0.000000e+00 : f32
    %83 = vector.broadcast %cst_57 : f32 to vector<16x256xf32>
    %84 = arith.maximumf %82, %83 : vector<16x256xf32>
    %cst_58 = arith.constant dense<0.000000e+00> : vector<16xf32>
    %85 = vector.multi_reduction <add>, %84, %cst_58 [1] : vector<16x256xf32> to vector<16xf32>
    %86 = vector.shape_cast %85 : vector<16xf32> to vector<16x1xf32>
    %cst_59 = arith.constant 2.560000e+02 : f32
    %87 = vector.broadcast %cst_59 : f32 to vector<16x1xf32>
    %88 = arith.divf %86, %87 : vector<16x1xf32>
    %c0_60 = arith.constant 0 : index
    %c0_61 = arith.constant 0 : index
    %89 = vector.load %arg8[%c0_60, %c0_61] : memref<8x16xf32, #tpu.memory_space<vmem>>, vector<8x16xf32>
    %cst_62 = arith.constant dense<0.000000e+00> : vector<8x1xf32>
    %90 = tpu.matmul %89, %88, %cst_62 {dimension_numbers = #tpu.dot_dimension_numbers<[1], [0], [0], [1], [0, 0, 1, 1], [], []>} : vector<8x16xf32>, vector<16x1xf32>, vector<8x1xf32> -> vector<8x1xf32>
    %c0_63 = arith.constant 0 : index
    %c0_64 = arith.constant 0 : index
    %91 = vector.load %arg9[%c0_63, %c0_64] : memref<8x1xf32, #tpu.memory_space<vmem>>, vector<8x1xf32>
    %92 = arith.addf %90, %91 : vector<8x1xf32>
    %cst_65 = arith.constant 0.000000e+00 : f32
    %93 = vector.broadcast %cst_65 : f32 to vector<8x1xf32>
    %94 = arith.maximumf %92, %93 : vector<8x1xf32>
    %c0_66 = arith.constant 0 : index
    %c0_67 = arith.constant 0 : index
    %95 = vector.load %arg10[%c0_66, %c0_67] : memref<16x8xf32, #tpu.memory_space<vmem>>, vector<16x8xf32>
    %cst_68 = arith.constant dense<0.000000e+00> : vector<16x1xf32>
    %96 = tpu.matmul %95, %94, %cst_68 {dimension_numbers = #tpu.dot_dimension_numbers<[1], [0], [0], [1], [0, 0, 1, 1], [], []>} : vector<16x8xf32>, vector<8x1xf32>, vector<16x1xf32> -> vector<16x1xf32>
    %c0_69 = arith.constant 0 : index
    %c0_70 = arith.constant 0 : index
    %97 = vector.load %arg11[%c0_69, %c0_70] : memref<16x1xf32, #tpu.memory_space<vmem>>, vector<16x1xf32>
    %98 = arith.addf %96, %97 : vector<16x1xf32>
    %cst_71 = arith.constant 6.000000e+00 : f32
    %99 = vector.broadcast %cst_71 : f32 to vector<16x1xf32>
    %100 = arith.divf %98, %99 : vector<16x1xf32>
    %cst_72 = arith.constant 5.000000e-01 : f32
    %101 = vector.broadcast %cst_72 : f32 to vector<16x1xf32>
    %102 = arith.addf %100, %101 : vector<16x1xf32>
    %cst_73 = arith.constant 0.000000e+00 : f32
    %cst_74 = arith.constant 1.000000e+00 : f32
    %103 = vector.broadcast %cst_73 : f32 to vector<16x1xf32>
    %104 = arith.maximumf %103, %102 : vector<16x1xf32>
    %105 = vector.broadcast %cst_74 : f32 to vector<16x1xf32>
    %106 = arith.minimumf %105, %104 : vector<16x1xf32>
    %107 = vector.broadcast %106 : vector<16x1xf32> to vector<16x256xf32>
    %108 = arith.mulf %84, %107 : vector<16x256xf32>
    %c0_75 = arith.constant 0 : index
    %c0_76 = arith.constant 0 : index
    %109 = vector.load %arg12[%c0_75, %c0_76] : memref<8x16xf32, #tpu.memory_space<vmem>>, vector<8x16xf32>
    %cst_77 = arith.constant dense<0.000000e+00> : vector<8x256xf32>
    %110 = tpu.matmul %109, %108, %cst_77 {dimension_numbers = #tpu.dot_dimension_numbers<[1], [0], [0], [1], [0, 0, 1, 1], [], []>} : vector<8x16xf32>, vector<16x256xf32>, vector<8x256xf32> -> vector<8x256xf32>
    %c0_78 = arith.constant 0 : index
    %c0_79 = arith.constant 0 : index
    %111 = vector.load %arg13[%c0_78, %c0_79] : memref<8x1xf32, #tpu.memory_space<vmem>>, vector<8x1xf32>
    %112 = vector.broadcast %111 : vector<8x1xf32> to vector<8x256xf32>
    %113 = arith.mulf %110, %112 : vector<8x256xf32>
    %c0_80 = arith.constant 0 : index
    %c0_81 = arith.constant 0 : index
    %114 = vector.load %arg14[%c0_80, %c0_81] : memref<8x1xf32, #tpu.memory_space<vmem>>, vector<8x1xf32>
    %115 = vector.broadcast %114 : vector<8x1xf32> to vector<8x256xf32>
    %116 = arith.addf %113, %115 : vector<8x256xf32>
    %117 = arith.addf %116, %1 : vector<8x256xf32>
    %c0_82 = arith.constant 0 : index
    %c0_83 = arith.constant 0 : index
    %c0_84 = arith.constant 0 : index
    %118 = vector.load %arg15[%c0_82, %c0_83, %c0_84] : memref<1x8x256xf32, #tpu.memory_space<vmem>>, vector<1x8x256xf32>
    %119 = vector.shape_cast %118 : vector<1x8x256xf32> to vector<8x256xf32>
    %120 = vector.shape_cast %117 : vector<8x256xf32> to vector<1x8x256xf32>
    tpu.vector_store %arg15[%c0_82, %c0_83, %c0_84], %120 {strides = array<i32>} : memref<1x8x256xf32, #tpu.memory_space<vmem>>, vector<1x8x256xf32>,
    return
  }
  func.func @transform_0(%arg0: i32) -> (i32, i32, i32) {
    %c0_i32 = arith.constant 0 : i32
    %c0_i32_0 = arith.constant 0 : i32
    %c0_i32_1 = arith.constant 0 : i32
    return %arg0, %c0_i32, %c0_i32_0 : i32, i32, i32
  }
  func.func @transform_1(%arg0: i32) -> (i32, i32) {
    %c0_i32 = arith.constant 0 : i32
    %c0_i32_0 = arith.constant 0 : i32
    %c0_i32_1 = arith.constant 0 : i32
    return %c0_i32, %c0_i32_0 : i32, i32
  }
  func.func @transform_2(%arg0: i32) -> (i32, i32) {
    %c0_i32 = arith.constant 0 : i32
    %c0_i32_0 = arith.constant 0 : i32
    %c0_i32_1 = arith.constant 0 : i32
    return %c0_i32, %c0_i32_0 : i32, i32
  }
  func.func @transform_3(%arg0: i32) -> (i32, i32) {
    %c0_i32 = arith.constant 0 : i32
    %c0_i32_0 = arith.constant 0 : i32
    %c0_i32_1 = arith.constant 0 : i32
    return %c0_i32, %c0_i32_0 : i32, i32
  }
  func.func @transform_4(%arg0: i32) -> (i32, i32) {
    %c0_i32 = arith.constant 0 : i32
    %c0_i32_0 = arith.constant 0 : i32
    %c0_i32_1 = arith.constant 0 : i32
    return %c0_i32, %c0_i32_0 : i32, i32
  }
  func.func @transform_5(%arg0: i32) -> (i32, i32) {
    %c0_i32 = arith.constant 0 : i32
    %c0_i32_0 = arith.constant 0 : i32
    %c0_i32_1 = arith.constant 0 : i32
    return %c0_i32, %c0_i32_0 : i32, i32
  }
  func.func @transform_6(%arg0: i32) -> (i32, i32) {
    %c0_i32 = arith.constant 0 : i32
    %c0_i32_0 = arith.constant 0 : i32
    %c0_i32_1 = arith.constant 0 : i32
    return %c0_i32, %c0_i32_0 : i32, i32
  }
  func.func @transform_7(%arg0: i32) -> (i32, i32) {
    %c0_i32 = arith.constant 0 : i32
    %c0_i32_0 = arith.constant 0 : i32
    %c0_i32_1 = arith.constant 0 : i32
    return %c0_i32, %c0_i32_0 : i32, i32
  }
  func.func @transform_8(%arg0: i32) -> (i32, i32) {
    %c0_i32 = arith.constant 0 : i32
    %c0_i32_0 = arith.constant 0 : i32
    %c0_i32_1 = arith.constant 0 : i32
    return %c0_i32, %c0_i32_0 : i32, i32
  }
  func.func @transform_9(%arg0: i32) -> (i32, i32) {
    %c0_i32 = arith.constant 0 : i32
    %c0_i32_0 = arith.constant 0 : i32
    %c0_i32_1 = arith.constant 0 : i32
    return %c0_i32, %c0_i32_0 : i32, i32
  }
  func.func @transform_10(%arg0: i32) -> (i32, i32) {
    %c0_i32 = arith.constant 0 : i32
    %c0_i32_0 = arith.constant 0 : i32
    %c0_i32_1 = arith.constant 0 : i32
    return %c0_i32, %c0_i32_0 : i32, i32
  }
  func.func @transform_11(%arg0: i32) -> (i32, i32) {
    %c0_i32 = arith.constant 0 : i32
    %c0_i32_0 = arith.constant 0 : i32
    %c0_i32_1 = arith.constant 0 : i32
    return %c0_i32, %c0_i32_0 : i32, i32
  }
  func.func @transform_12(%arg0: i32) -> (i32, i32) {
    %c0_i32 = arith.constant 0 : i32
    %c0_i32_0 = arith.constant 0 : i32
    %c0_i32_1 = arith.constant 0 : i32
    return %c0_i32, %c0_i32_0 : i32, i32
  }
  func.func @transform_13(%arg0: i32) -> (i32, i32) {
    %c0_i32 = arith.constant 0 : i32
    %c0_i32_0 = arith.constant 0 : i32
    %c0_i32_1 = arith.constant 0 : i32
    return %c0_i32, %c0_i32_0 : i32, i32
  }
  func.func @transform_14(%arg0: i32) -> (i32, i32, i32) {
    %c0_i32 = arith.constant 0 : i32
    %c0_i32_0 = arith.constant 0 : i32
    %c0_i32_1 = arith.constant 0 : i32
    return %arg0, %c0_i32, %c0_i32_0 : i32, i32, i32
  }
}

</mosaic_0001>

<llo_original>
// kernel: inverted_residual_pallas.1
$region0: #{inverted_residual_pallas.1}
  #allocation0 [shape = 'u32[]', space=smem, size = 0x4, offset = 0x4, fixed_abs, tag = 'smem constant byte address 0x4 - core index']
  #allocation1 [shape = 'u32[144,128]{1,0:T(1,128)}', space=vmem, size = 0x12000, scoped, tag = 'internal scratch']
  #allocation2 [shape = 'f32[16,18,18]{2,1,0:T(8,128)}', space=vmem, size = 0x30000, scoped, tag = 'scratch operand']
  %s0 = inlined_call_operand.vmem [shape: f32[2,8,256], index: 0, kind: input, shape index: {}]
  %s1 = inlined_call_operand.vmem [shape: f32[16,8], index: 1, kind: input, shape index: {}]
  %s2 = inlined_call_operand.vmem [shape: f32[16,1], index: 2, kind: input, shape index: {}]
  %s3 = inlined_call_operand.vmem [shape: f32[16,1], index: 3, kind: input, shape index: {}]
  %s4 = inlined_call_operand.vmem [shape: f32[16,9], index: 4, kind: input, shape index: {}]
  %s5 = inlined_call_operand.vmem [shape: f32[16,1], index: 5, kind: input, shape index: {}]
  %s6 = inlined_call_operand.vmem [shape: f32[16,1], index: 6, kind: input, shape index: {}]
  %s7 = inlined_call_operand.vmem [shape: f32[8,16], index: 7, kind: input, shape index: {}]
  %s8 = inlined_call_operand.vmem [shape: f32[8,1], index: 8, kind: input, shape index: {}]
  %s9 = inlined_call_operand.vmem [shape: f32[16,8], index: 9, kind: input, shape index: {}]
  %s10 = inlined_call_operand.vmem [shape: f32[16,1], index: 10, kind: input, shape index: {}]
  %s11 = inlined_call_operand.vmem [shape: f32[8,16], index: 11, kind: input, shape index: {}]
  %s12 = inlined_call_operand.vmem [shape: f32[8,1], index: 12, kind: input, shape index: {}]
  %s13 = inlined_call_operand.vmem [shape: f32[8,1], index: 13, kind: input, shape index: {}]
  %s14 = inlined_call_operand.vmem [shape: f32[2,8,256], index: 14, kind: output, shape index: {}]
  %s15 = sld [smem:[#allocation0]]
  $region89: #{inverted_residual_pallas.1} parent=0
    _
  %s17 = ssub.s32 1, %s15
  %s18 = scalar_select 0, %s17, %s15
  loop: start=0, step=1, limit=4
  $region2: #{inverted_residual_pallas.1} parent=0 // loop_pre_header
    _
  $region3: #{inverted_residual_pallas.1} parent=0 // loop_header
    %s20 = sphi 0, %s24
    %p21 = scmp.ge.s32.totalorder %s20, 4
    %s30 = sphi 0, %s32
    %s33 = sphi 0, %s30
    %s34 = sphi 0, %s33
    %s50 = sphi 0, %s34
    %s54 = sphi 0, %s54
    %s56 = sphi 0, %s54
    %s57 = sphi 0, %s56
    %s71 = sphi 0, %s57
    %s75 = sphi 0, %s75
    %s77 = sphi 0, %s75
    %s78 = sphi 0, %s77
    %s92 = sphi 0, %s78
    %s96 = sphi 0, %s96
    %s98 = sphi 0, %s96
    %s99 = sphi 0, %s98
    %s113 = sphi 0, %s99
    %s117 = sphi 0, %s117
    %s119 = sphi 0, %s117
    %s120 = sphi 0, %s119
    %s134 = sphi 0, %s120
    %s138 = sphi 0, %s138
    %s140 = sphi 0, %s138
    %s141 = sphi 0, %s140
    %s155 = sphi 0, %s141
    %s159 = sphi 0, %s159
    %s161 = sphi 0, %s159
    %s162 = sphi 0, %s161
    %s176 = sphi 0, %s162
    %s180 = sphi 0, %s180
    %s182 = sphi 0, %s180
    %s183 = sphi 0, %s182
    %s197 = sphi 0, %s183
    %s201 = sphi 0, %s201
    %s203 = sphi 0, %s201
    %s204 = sphi 0, %s203
    %s218 = sphi 0, %s204
    %s222 = sphi 0, %s222
    %s224 = sphi 0, %s222
    %s225 = sphi 0, %s224
    %s239 = sphi 0, %s225
    %s243 = sphi 0, %s243
    %s245 = sphi 0, %s243
    %s246 = sphi 0, %s245
    %s260 = sphi 0, %s246
    %s264 = sphi 0, %s264
    %s266 = sphi 0, %s264
    %s267 = sphi 0, %s266
    %s281 = sphi 0, %s267
    %s285 = sphi 0, %s285
    %s287 = sphi 0, %s285
    %s288 = sphi 0, %s287
    %s302 = sphi 0, %s288
    %s306 = sphi 0, %s306
    %s308 = sphi 0, %s306
    %s309 = sphi 0, %s308
    %s323 = sphi 0, %s309
    %s329 = sphi 0, %s331
    %s332 = sphi 0, %s329
    %s333 = sphi 0, %s332
    %s349 = sphi 0, %s333
  $region4: #{inverted_residual_pallas.1} parent=0 // loop_header_branch
    %23 = sbr.rel (%p21) target = $region8
  $region5: #{inverted_residual_pallas.1} parent=0 // loop_body
    %s25 = ssub.s32 %s20, 1
    %s26 = ssub.s32 %s20, 2
    %s27 = sadd.s32 %s20, 1
    %s28 = ssub.s32 %s20, %s27
    %p29 = scmp.eq.s32.totalorder %s28, 0
    %s31 = sadd.s32 %s30, 1
    %s32 = scalar_select %p29, %s30, %s31
    %p35 = pneg %p29
    %p36 = scmp.eq.s32.totalorder %s20, 1
    %p37 = por %p35, %p36
    %p38 = scmp.ne.s32.totalorder %s30, %s33
    %p39 = scmp.eq.s32.totalorder %s20, 0
    %p40 = por %p38, %p39
    %p41 = scmp.ne.s32.totalorder %s30, %s33
    %p42 = scmp.eq.s32.totalorder %s25, 1
    %p43 = por %p41, %p42
    %p44 = scmp.ne.s32.totalorder %s33, %s34
    %p45 = scmp.eq.s32.totalorder %s25, 0
    %p46 = por %p44, %p45
    %p47 = scmp.ne.s32.totalorder %s33, %s34
    %p48 = scmp.eq.s32.totalorder %s26, 1
    %p49 = por %p47, %p48
    %p51 = scmp.ne.s32.totalorder %s34, %s50
    %p52 = scmp.eq.s32.totalorder %s26, 0
    %p53 = por %p51, %p52
    %s55 = sadd.s32 %s54, 1
    %p58 = scmp.eq.s32.totalorder %s20, 1
    %p59 = scmp.ne.s32.totalorder %s54, %s56
    %p60 = scmp.eq.s32.totalorder %s20, 0
    %p61 = por %p59, %p60
    %p62 = scmp.ne.s32.totalorder %s54, %s56
    %p63 = scmp.eq.s32.totalorder %s25, 1
    %p64 = por %p62, %p63
    %p65 = scmp.ne.s32.totalorder %s56, %s57
    %p66 = scmp.eq.s32.totalorder %s25, 0
    %p67 = por %p65, %p66
    %p68 = scmp.ne.s32.totalorder %s56, %s57
    %p69 = scmp.eq.s32.totalorder %s26, 1
    %p70 = por %p68, %p69
    %p72 = scmp.ne.s32.totalorder %s57, %s71
    %p73 = scmp.eq.s32.totalorder %s26, 0
    %p74 = por %p72, %p73
    %s76 = sadd.s32 %s75, 1
    %p79 = scmp.eq.s32.totalorder %s20, 1
    %p80 = scmp.ne.s32.totalorder %s75, %s77
    %p81 = scmp.eq.s32.totalorder %s20, 0
    %p82 = por %p80, %p81
    %p83 = scmp.ne.s32.totalorder %s75, %s77
    %p84 = scmp.eq.s32.totalorder %s25, 1
    %p85 = por %p83, %p84
    %p86 = scmp.ne.s32.totalorder %s77, %s78
    %p87 = scmp.eq.s32.totalorder %s25, 0
    %p88 = por %p86, %p87
    %p89 = scmp.ne.s32.totalorder %s77, %s78
    %p90 = scmp.eq.s32.totalorder %s26, 1
    %p91 = por %p89, %p90
    %p93 = scmp.ne.s32.totalorder %s78, %s92
    %p94 = scmp.eq.s32.totalorder %s26, 0
    %p95 = por %p93, %p94
    %s97 = sadd.s32 %s96, 1
    %p100 = scmp.eq.s32.totalorder %s20, 1
    %p101 = scmp.ne.s32.totalorder %s96, %s98
    %p102 = scmp.eq.s32.totalorder %s20, 0
    %p103 = por %p101, %p102
    %p104 = scmp.ne.s32.totalorder %s96, %s98
    %p105 = scmp.eq.s32.totalorder %s25, 1
    %p106 = por %p104, %p105
    %p107 = scmp.ne.s32.totalorder %s98, %s99
    %p108 = scmp.eq.s32.totalorder %s25, 0
    %p109 = por %p107, %p108
    %p110 = scmp.ne.s32.totalorder %s98, %s99
    %p111 = scmp.eq.s32.totalorder %s26, 1
    %p112 = por %p110, %p111
    %p114 = scmp.ne.s32.totalorder %s99, %s113
    %p115 = scmp.eq.s32.totalorder %s26, 0
    %p116 = por %p114, %p115
    %s118 = sadd.s32 %s117, 1
    %p121 = scmp.eq.s32.totalorder %s20, 1
    %p122 = scmp.ne.s32.totalorder %s117, %s119
    %p123 = scmp.eq.s32.totalorder %s20, 0
    %p124 = por %p122, %p123
    %p125 = scmp.ne.s32.totalorder %s117, %s119
    %p126 = scmp.eq.s32.totalorder %s25, 1
    %p127 = por %p125, %p126
    %p128 = scmp.ne.s32.totalorder %s119, %s120
    %p129 = scmp.eq.s32.totalorder %s25, 0
    %p130 = por %p128, %p129
    %p131 = scmp.ne.s32.totalorder %s119, %s120
    %p132 = scmp.eq.s32.totalorder %s26, 1
    %p133 = por %p131, %p132
    %p135 = scmp.ne.s32.totalorder %s120, %s134
    %p136 = scmp.eq.s32.totalorder %s26, 0
    %p137 = por %p135, %p136
    %s139 = sadd.s32 %s138, 1
    %p142 = scmp.eq.s32.totalorder %s20, 1
    %p143 = scmp.ne.s32.totalorder %s138, %s140
    %p144 = scmp.eq.s32.totalorder %s20, 0
    %p145 = por %p143, %p144
    %p146 = scmp.ne.s32.totalorder %s138, %s140
    %p147 = scmp.eq.s32.totalorder %s25, 1
    %p148 = por %p146, %p147
    %p149 = scmp.ne.s32.totalorder %s140, %s141
    %p150 = scmp.eq.s32.totalorder %s25, 0
    %p151 = por %p149, %p150
    %p152 = scmp.ne.s32.totalorder %s140, %s141
    %p153 = scmp.eq.s32.totalorder %s26, 1
    %p154 = por %p152, %p153
    %p156 = scmp.ne.s32.totalorder %s141, %s155
    %p157 = scmp.eq.s32.totalorder %s26, 0
    %p158 = por %p156, %p157
    %s160 = sadd.s32 %s159, 1
    %p163 = scmp.eq.s32.totalorder %s20, 1
    %p164 = scmp.ne.s32.totalorder %s159, %s161
    %p165 = scmp.eq.s32.totalorder %s20, 0
    %p166 = por %p164, %p165
    %p167 = scmp.ne.s32.totalorder %s159, %s161
    %p168 = scmp.eq.s32.totalorder %s25, 1
    %p169 = por %p167, %p168
    %p170 = scmp.ne.s32.totalorder %s161, %s162
    %p171 = scmp.eq.s32.totalorder %s25, 0
    %p172 = por %p170, %p171
    %p173 = scmp.ne.s32.totalorder %s161, %s162
    %p174 = scmp.eq.s32.totalorder %s26, 1
    %p175 = por %p173, %p174
    %p177 = scmp.ne.s32.totalorder %s162, %s176
    %p178 = scmp.eq.s32.totalorder %s26, 0
    %p179 = por %p177, %p178
    %s181 = sadd.s32 %s180, 1
    %p184 = scmp.eq.s32.totalorder %s20, 1
    %p185 = scmp.ne.s32.totalorder %s180, %s182
    %p186 = scmp.eq.s32.totalorder %s20, 0
    %p187 = por %p185, %p186
    %p188 = scmp.ne.s32.totalorder %s180, %s182
    %p189 = scmp.eq.s32.totalorder %s25, 1
    %p190 = por %p188, %p189
    %p191 = scmp.ne.s32.totalorder %s182, %s183
    %p192 = scmp.eq.s32.totalorder %s25, 0
    %p193 = por %p191, %p192
    %p194 = scmp.ne.s32.totalorder %s182, %s183
    %p195 = scmp.eq.s32.totalorder %s26, 1
    %p196 = por %p194, %p195
    %p198 = scmp.ne.s32.totalorder %s183, %s197
    %p199 = scmp.eq.s32.totalorder %s26, 0
    %p200 = por %p198, %p199
    %s202 = sadd.s32 %s201, 1
    %p205 = scmp.eq.s32.totalorder %s20, 1
    %p206 = scmp.ne.s32.totalorder %s201, %s203
    %p207 = scmp.eq.s32.totalorder %s20, 0
    %p208 = por %p206, %p207
    %p209 = scmp.ne.s32.totalorder %s201, %s203
    %p210 = scmp.eq.s32.totalorder %s25, 1
    %p211 = por %p209, %p210
    %p212 = scmp.ne.s32.totalorder %s203, %s204
    %p213 = scmp.eq.s32.totalorder %s25, 0
    %p214 = por %p212, %p213
    %p215 = scmp.ne.s32.totalorder %s203, %s204
    %p216 = scmp.eq.s32.totalorder %s26, 1
    %p217 = por %p215, %p216
    %p219 = scmp.ne.s32.totalorder %s204, %s218
    %p220 = scmp.eq.s32.totalorder %s26, 0
    %p221 = por %p219, %p220
    %s223 = sadd.s32 %s222, 1
    %p226 = scmp.eq.s32.totalorder %s20, 1
    %p227 = scmp.ne.s32.totalorder %s222, %s224
    %p228 = scmp.eq.s32.totalorder %s20, 0
    %p229 = por %p227, %p228
    %p230 = scmp.ne.s32.totalorder %s222, %s224
    %p231 = scmp.eq.s32.totalorder %s25, 1
    %p232 = por %p230, %p231
    %p233 = scmp.ne.s32.totalorder %s224, %s225
    %p234 = scmp.eq.s32.totalorder %s25, 0
    %p235 = por %p233, %p234
    %p236 = scmp.ne.s32.totalorder %s224, %s225
    %p237 = scmp.eq.s32.totalorder %s26, 1
    %p238 = por %p236, %p237
    %p240 = scmp.ne.s32.totalorder %s225, %s239
    %p241 = scmp.eq.s32.totalorder %s26, 0
    %p242 = por %p240, %p241
    %s244 = sadd.s32 %s243, 1
    %p247 = scmp.eq.s32.totalorder %s20, 1
    %p248 = scmp.ne.s32.totalorder %s243, %s245
    %p249 = scmp.eq.s32.totalorder %s20, 0
    %p250 = por %p248, %p249
    %p251 = scmp.ne.s32.totalorder %s243, %s245
    %p252 = scmp.eq.s32.totalorder %s25, 1
    %p253 = por %p251, %p252
    %p254 = scmp.ne.s32.totalorder %s245, %s246
    %p255 = scmp.eq.s32.totalorder %s25, 0
    %p256 = por %p254, %p255
    %p257 = scmp.ne.s32.totalorder %s245, %s246
    %p258 = scmp.eq.s32.totalorder %s26, 1
    %p259 = por %p257, %p258
    %p261 = scmp.ne.s32.totalorder %s246, %s260
    %p262 = scmp.eq.s32.totalorder %s26, 0
    %p263 = por %p261, %p262
    %s265 = sadd.s32 %s264, 1
    %p268 = scmp.eq.s32.totalorder %s20, 1
    %p269 = scmp.ne.s32.totalorder %s264, %s266
    %p270 = scmp.eq.s32.totalorder %s20, 0
    %p271 = por %p269, %p270
    %p272 = scmp.ne.s32.totalorder %s264, %s266
    %p273 = scmp.eq.s32.totalorder %s25, 1
    %p274 = por %p272, %p273
    %p275 = scmp.ne.s32.totalorder %s266, %s267
    %p276 = scmp.eq.s32.totalorder %s25, 0
    %p277 = por %p275, %p276
    %p278 = scmp.ne.s32.totalorder %s266, %s267
    %p279 = scmp.eq.s32.totalorder %s26, 1
    %p280 = por %p278, %p279
    %p282 = scmp.ne.s32.totalorder %s267, %s281
    %p283 = scmp.eq.s32.totalorder %s26, 0
    %p284 = por %p282, %p283
    %s286 = sadd.s32 %s285, 1
    %p289 = scmp.eq.s32.totalorder %s20, 1
    %p290 = scmp.ne.s32.totalorder %s285, %s287
    %p291 = scmp.eq.s32.totalorder %s20, 0
    %p292 = por %p290, %p291
    %p293 = scmp.ne.s32.totalorder %s285, %s287
    %p294 = scmp.eq.s32.totalorder %s25, 1
    %p295 = por %p293, %p294
    %p296 = scmp.ne.s32.totalorder %s287, %s288
    %p297 = scmp.eq.s32.totalorder %s25, 0
    %p298 = por %p296, %p297
    %p299 = scmp.ne.s32.totalorder %s287, %s288
    %p300 = scmp.eq.s32.totalorder %s26, 1
    %p301 = por %p299, %p300
    %p303 = scmp.ne.s32.totalorder %s288, %s302
    %p304 = scmp.eq.s32.totalorder %s26, 0
    %p305 = por %p303, %p304
    %s307 = sadd.s32 %s306, 1
    %p310 = scmp.eq.s32.totalorder %s20, 1
    %p311 = scmp.ne.s32.totalorder %s306, %s308
    %p312 = scmp.eq.s32.totalorder %s20, 0
    %p313 = por %p311, %p312
    %p314 = scmp.ne.s32.totalorder %s306, %s308
    %p315 = scmp.eq.s32.totalorder %s25, 1
    %p316 = por %p314, %p315
    %p317 = scmp.ne.s32.totalorder %s308, %s309
    %p318 = scmp.eq.s32.totalorder %s25, 0
    %p319 = por %p317, %p318
    %p320 = scmp.ne.s32.totalorder %s308, %s309
    %p321 = scmp.eq.s32.totalorder %s26, 1
    %p322 = por %p320, %p321
    %p324 = scmp.ne.s32.totalorder %s309, %s323
    %p325 = scmp.eq.s32.totalorder %s26, 0
    %p326 = por %p324, %p325
    %s327 = ssub.s32 %s20, %s27
    %p328 = scmp.eq.s32.totalorder %s327, 0
    %s330 = sadd.s32 %s329, 1
    %s331 = scalar_select %p328, %s329, %s330
    %p334 = pneg %p328
    %p335 = scmp.eq.s32.totalorder %s20, 1
    %p336 = por %p334, %p335
    %p337 = scmp.ne.s32.totalorder %s329, %s332
    %p338 = scmp.eq.s32.totalorder %s20, 0
    %p339 = por %p337, %p338
    %p340 = scmp.ne.s32.totalorder %s329, %s332
    %p341 = scmp.eq.s32.totalorder %s25, 1
    %p342 = por %p340, %p341
    %p343 = scmp.ne.s32.totalorder %s332, %s333
    %p344 = scmp.eq.s32.totalorder %s25, 0
    %p345 = por %p343, %p344
    %p346 = scmp.ne.s32.totalorder %s332, %s333
    %p347 = scmp.eq.s32.totalorder %s26, 1
    %p348 = por %p346, %p347
    %p350 = scmp.ne.s32.totalorder %s333, %s349
    %p351 = scmp.eq.s32.totalorder %s26, 0
    %p352 = por %p350, %p351
    %p353 = scmp.le.s32.totalorder 1, %s20
    %p354 = scmp.lt.s32.totalorder %s20, 3
    %p355 = pnand %p353, %p354
    %p356 = pneg %p355
    // Predicated region
    $region9: #{inverted_residual_pallas.1} parent=5 // pred_check
      _
    $region10: #{inverted_residual_pallas.1} parent=5 // pred_check_branch
      %358 = sbr.rel (%p355) target = $region12
    $region11: #{inverted_residual_pallas.1} parent=5 // pred_region
      %s359 = ssub.s32 %s20, 1
      // Predicated region
      $region13: #{inverted_residual_pallas.1} parent=11 // pred_check
        %p360 = pneg %p67
      $region14: #{inverted_residual_pallas.1} parent=11 // pred_check_branch
        %362 = sbr.rel (%p360) target = $region16
      $region15: #{inverted_residual_pallas.1} parent=11 // pred_region
        _
      $region16: #{inverted_residual_pallas.1} parent=11 // pred_fallthru
        _
      // Predicated region
      $region17: #{inverted_residual_pallas.1} parent=11 // pred_check
        %p363 = pneg %p88
      $region18: #{inverted_residual_pallas.1} parent=11 // pred_check_branch
        %365 = sbr.rel (%p363) target = $region20
      $region19: #{inverted_residual_pallas.1} parent=11 // pred_region
        _
      $region20: #{inverted_residual_pallas.1} parent=11 // pred_fallthru
        _
      // Predicated region
      $region21: #{inverted_residual_pallas.1} parent=11 // pred_check
        %p366 = pneg %p109
      $region22: #{inverted_residual_pallas.1} parent=11 // pred_check_branch
        %368 = sbr.rel (%p366) target = $region24
      $region23: #{inverted_residual_pallas.1} parent=11 // pred_region
        _
      $region24: #{inverted_residual_pallas.1} parent=11 // pred_fallthru
        _
      // Predicated region
      $region25: #{inverted_residual_pallas.1} parent=11 // pred_check
        %p369 = pneg %p130
      $region26: #{inverted_residual_pallas.1} parent=11 // pred_check_branch
        %371 = sbr.rel (%p369) target = $region28
      $region27: #{inverted_residual_pallas.1} parent=11 // pred_region
        _
      $region28: #{inverted_residual_pallas.1} parent=11 // pred_fallthru
        _
      // Predicated region
      $region29: #{inverted_residual_pallas.1} parent=11 // pred_check
        %p372 = pneg %p151
      $region30: #{inverted_residual_pallas.1} parent=11 // pred_check_branch
        %374 = sbr.rel (%p372) target = $region32
      $region31: #{inverted_residual_pallas.1} parent=11 // pred_region
        _
      $region32: #{inverted_residual_pallas.1} parent=11 // pred_fallthru
        _
      // Predicated region
      $region33: #{inverted_residual_pallas.1} parent=11 // pred_check
        %p375 = pneg %p172
      $region34: #{inverted_residual_pallas.1} parent=11 // pred_check_branch
        %377 = sbr.rel (%p375) target = $region36
      $region35: #{inverted_residual_pallas.1} parent=11 // pred_region
        _
      $region36: #{inverted_residual_pallas.1} parent=11 // pred_fallthru
        _
      // Predicated region
      $region37: #{inverted_residual_pallas.1} parent=11 // pred_check
        %p378 = pneg %p193
      $region38: #{inverted_residual_pallas.1} parent=11 // pred_check_branch
        %380 = sbr.rel (%p378) target = $region40
      $region39: #{inverted_residual_pallas.1} parent=11 // pred_region
        _
      $region40: #{inverted_residual_pallas.1} parent=11 // pred_fallthru
        _
      // Predicated region
      $region41: #{inverted_residual_pallas.1} parent=11 // pred_check
        %p381 = pneg %p214
      $region42: #{inverted_residual_pallas.1} parent=11 // pred_check_branch
        %383 = sbr.rel (%p381) target = $region44
      $region43: #{inverted_residual_pallas.1} parent=11 // pred_region
        _
      $region44: #{inverted_residual_pallas.1} parent=11 // pred_fallthru
        _
      // Predicated region
      $region45: #{inverted_residual_pallas.1} parent=11 // pred_check
        %p384 = pneg %p235
      $region46: #{inverted_residual_pallas.1} parent=11 // pred_check_branch
        %386 = sbr.rel (%p384) target = $region48
      $region47: #{inverted_residual_pallas.1} parent=11 // pred_region
        _
      $region48: #{inverted_residual_pallas.1} parent=11 // pred_fallthru
        _
      // Predicated region
      $region49: #{inverted_residual_pallas.1} parent=11 // pred_check
        %p387 = pneg %p256
      $region50: #{inverted_residual_pallas.1} parent=11 // pred_check_branch
        %389 = sbr.rel (%p387) target = $region52
      $region51: #{inverted_residual_pallas.1} parent=11 // pred_region
        _
      $region52: #{inverted_residual_pallas.1} parent=11 // pred_fallthru
        _
      // Predicated region
      $region53: #{inverted_residual_pallas.1} parent=11 // pred_check
        %p390 = pneg %p277
      $region54: #{inverted_residual_pallas.1} parent=11 // pred_check_branch
        %392 = sbr.rel (%p390) target = $region56
      $region55: #{inverted_residual_pallas.1} parent=11 // pred_region
        _
      $region56: #{inverted_residual_pallas.1} parent=11 // pred_fallthru
        _
      // Predicated region
      $region57: #{inverted_residual_pallas.1} parent=11 // pred_check
        %p393 = pneg %p298
      $region58: #{inverted_residual_pallas.1} parent=11 // pred_check_branch
        %395 = sbr.rel (%p393) target = $region60
      $region59: #{inverted_residual_pallas.1} parent=11 // pred_region
        _
      $region60: #{inverted_residual_pallas.1} parent=11 // pred_fallthru
        _
      // Predicated region
      $region61: #{inverted_residual_pallas.1} parent=11 // pred_check
        %p396 = pneg %p319
      $region62: #{inverted_residual_pallas.1} parent=11 // pred_check_branch
        %398 = sbr.rel (%p396) target = $region64
      $region63: #{inverted_residual_pallas.1} parent=11 // pred_region
        _
      $region64: #{inverted_residual_pallas.1} parent=11 // pred_fallthru
        _
    $region12: #{inverted_residual_pallas.1} parent=5 // pred_fallthru
      _
    %p399 = scmp.lt.s32.totalorder %s20, 2
    // Predicated region
    $region65: #{inverted_residual_pallas.1} parent=5 // pred_check
      %p400 = pneg %p399
    $region66: #{inverted_residual_pallas.1} parent=5 // pred_check_branch
      %402 = sbr.rel (%p400) target = $region68
    $region67: #{inverted_residual_pallas.1} parent=5 // pred_region
      // Predicated region
      $region69: #{inverted_residual_pallas.1} parent=67 // pred_check
        %p403 = pneg %p40
      $region70: #{inverted_residual_pallas.1} parent=67 // pred_check_branch
        %405 = sbr.rel (%p403) target = $region72
      $region71: #{inverted_residual_pallas.1} parent=67 // pred_region
        %p406 = scmp.lt.s32.totalorder %s20, 1
        %s407 = scalar_select %p406, %s20, 1
        %s408 = smul.addr %s407, 2
        %s409 = smul.addr %s408, 8
        %s410 = scalar_lea.vmem %s0, %s409
      $region72: #{inverted_residual_pallas.1} parent=67 // pred_fallthru
        _
    $region68: #{inverted_residual_pallas.1} parent=5 // pred_fallthru
      _
    %p411 = scmp.le.s32.totalorder 1, %s20
    %p412 = scmp.lt.s32.totalorder %s20, 3
    %p413 = pnand %p411, %p412
    %p414 = pneg %p413
    // Predicated region
    $region73: #{inverted_residual_pallas.1} parent=5 // pred_check
      _
    $region74: #{inverted_residual_pallas.1} parent=5 // pred_check_branch
      %416 = sbr.rel (%p413) target = $region76
    $region75: #{inverted_residual_pallas.1} parent=5 // pred_region
      %s417 = ssub.s32 %s20, 1
      %p418 = scmp.lt.s32.totalorder %s25, 1
      %s419 = scalar_select %p418, %s25, 1
      %s420 = smul.addr %s419, 2
      %s421 = smul.addr %s420, 8
      %s422 = scalar_lea.vmem %s0, %s421
      %p423 = pneg %p46
      %p424 = pneg %p43
      %p425 = pneg %p67
      %p426 = pneg %p64
      %p427 = pneg %p88
      %p428 = pneg %p85
      %p429 = pneg %p109
      %p430 = pneg %p106
      %p431 = pneg %p130
      %p432 = pneg %p127
      %p433 = pneg %p151
      %p434 = pneg %p148
      %p435 = pneg %p172
      %p436 = pneg %p169
      %p437 = pneg %p193
      %p438 = pneg %p190
      %p439 = pneg %p214
      %p440 = pneg %p211
      %p441 = pneg %p235
      %p442 = pneg %p232
      %p443 = pneg %p256
      %p444 = pneg %p253
      %p445 = pneg %p277
      %p446 = pneg %p274
      %p447 = pneg %p298
      %p448 = pneg %p295
      %p449 = pneg %p319
      %p450 = pneg %p316
      %p451 = pneg %p345
      %p452 = pneg %p342
      %p453 = scmp.lt.s32.totalorder %s25, 1
      %s454 = scalar_select %p453, %s25, 1
      %s455 = smul.addr %s454, 2
      %s456 = smul.addr %s455, 8
      %s457 = scalar_lea.vmem %s14, %s456
      %p458 = scmp.lt.s32.totalorder %s25, 1
      %s459 = scalar_select %p458, %s25, 1
      %s460 = smul.addr %s459, 2
      %s461 = smul.addr %s460, 8
      %s462 = scalar_lea.vmem %s0, %s461
      %p463 = scmp.lt.s32.totalorder %s25, 1
      %s464 = scalar_select %p463, %s25, 1
      %s465 = smul.addr %s464, 2
      %s466 = smul.addr %s465, 8
      %s467 = scalar_lea.vmem %s14, %s466
      %v468 = vld [vmem:[%s462] sm:$0xff]
      %v469 = vld [vmem:[%s462 + $0x8] sm:$0xff]
      %v470 = vld [vmem:[%s1] sm:$0xff]
      %v471 = vld [vmem:[%s1 + $0x8] sm:$0xff]
      %vm472 = vcmask 64512
      %v474 = vsel %vm472, %v470, 0
      %v477 = vsel %vm472, %v471, 0
      %479 = vmatprep.subr.mxu0 %v469
      %480 = vmatpush1.msra.mxu0 %v468
      %481 = vmatprep.subr.mxu0 0.0
      %482 = vmatpush1.msra.mxu0 0.0
      %483 = vmatprep.subr.mxu0 0.0
      %484 = vmatpush1.msra.mxu0 0.0
      %485 = vmatprep.subr.mxu0 0.0
      %486 = vmatpush1.msra.mxu0 0.0
      %487 = vmatprep.subr.mxu0 0.0
      %488 = vmatpush1.msra.mxu0 0.0
      %489 = vmatprep.subr.mxu0 0.0
      %490 = vmatpush1.msra.mxu0 0.0
      %491 = vmatprep.subr.mxu0 0.0
      %492 = vmatpush1.msra.mxu0 0.0
      %493 = vmatprep.subr.mxu0 0.0
      %494 = vmatpush1.msra.mxu0 0.0
      %495 = vmatprep.subr.mxu0 0.0
      %496 = vmatpush1.msra.mxu0 0.0
      %497 = vmatprep.subr.mxu0 0.0
      %498 = vmatpush1.msra.mxu0 0.0
      %499 = vmatprep.subr.mxu0 0.0
      %500 = vmatpush1.msra.mxu0 0.0
      %501 = vmatprep.subr.mxu0 0.0
      %502 = vmatpush1.msra.mxu0 0.0
      %503 = vmatprep.subr.mxu0 0.0
      %504 = vmatpush1.msra.mxu0 0.0
      %505 = vmatprep.subr.mxu0 0.0
      %506 = vmatpush1.msra.mxu0 0.0
      %507 = vmatprep.subr.mxu0 0.0
      %508 = vmatpush1.msra.mxu0 0.0
      %509 = vmatprep.subr.mxu0 0.0
      %510 = vmatpush1.msra.mxu0 0.0
      %511 = vmatprep.subr.mxu0 0.0
      %512 = vmatpush1.msra.mxu0 0.0
      %513 = vmatprep.subr.mxu0 0.0
      %514 = vmatpush1.msra.mxu0 0.0
      %515 = vmatprep.subr.mxu0 0.0
      %516 = vmatpush1.msra.mxu0 0.0
      %517 = vmatprep.subr.mxu0 0.0
      %518 = vmatpush1.msra.mxu0 0.0
      %519 = vmatprep.subr.mxu0 0.0
      %520 = vmatpush1.msra.mxu0 0.0
      %521 = vmatprep.subr.mxu0 0.0
      %522 = vmatpush1.msra.mxu0 0.0
      %523 = vmatprep.subr.mxu0 0.0
      %524 = vmatpush1.msra.mxu0 0.0
      %525 = vmatprep.subr.mxu0 0.0
      %526 = vmatpush1.msra.mxu0 0.0
      %527 = vmatprep.subr.mxu0 0.0
      %528 = vmatpush1.msra.mxu0 0.0
      %529 = vmatprep.subr.mxu0 0.0
      %530 = vmatpush1.msra.mxu0 0.0
      %531 = vmatprep.subr.mxu0 0.0
      %532 = vmatpush1.msra.mxu0 0.0
      %533 = vmatprep.subr.mxu0 0.0
      %534 = vmatpush1.msra.mxu0 0.0
      %535 = vmatprep.subr.mxu0 0.0
      %536 = vmatpush1.msra.mxu0 0.0
      %537 = vmatprep.subr.mxu0 0.0
      %538 = vmatpush1.msra.mxu0 0.0
      %539 = vmatprep.subr.mxu0 0.0
      %540 = vmatpush1.msra.mxu0 0.0
      %541 = vmatprep.subr.mxu0 0.0
      %542 = vmatpush1.msra.mxu0 0.0
      %543 = vmatprep.mubr.f32.mxu0 0.0
      %544 = vmatmul.mubr.f32.gmra.mrb[0].mxu0 %v474
      %v545 = vpop.f32.mrb[0].mxu0
      %v546 = vadd.f32 0.0, %v545
      %v547 = vpop.f32.mrb[0].mxu0
      %v548 = vadd.f32 0.0, %v547
      %549 = vmatprep.mubr.f32.mxu0 0.0
      %550 = vmatmul.mubr.f32.gmra.mrb[0].mxu0 %v477
      %v551 = vpop.f32.mrb[0].mxu0
      %v552 = vadd.f32 0.0, %v551
      %v553 = vpop.f32.mrb[0].mxu0
      %v554 = vadd.f32 0.0, %v553
      %555 = vdwg.mxu0
      %v556 = vld [vmem:[%s2] sm:$0xff]
      %v557 = vld [vmem:[%s2 + $0x8] sm:$0xff]
      %559 = vset.pattern.permute.xlu0 0
      %560 = vperm.xlu0 %559, %v556
      %v561 = vpop.permute.xlu0 %560
      %564 = vset.pattern.permute.xlu0 0
      %565 = vperm.xlu0 %564, %v557
      %v566 = vpop.permute.xlu0 %565
      %v568 = vmul.f32 %v546, %v561
      %v569 = vmul.f32 %v548, %v561
      %v570 = vmul.f32 %v552, %v566
      %v571 = vmul.f32 %v554, %v566
      %v572 = vld [vmem:[%s3] sm:$0xff]
      %v573 = vld [vmem:[%s3 + $0x8] sm:$0xff]
      %575 = vset.pattern.permute.xlu0 0
      %576 = vperm.xlu0 %575, %v572
      %v577 = vpop.permute.xlu0 %576
      %580 = vset.pattern.permute.xlu0 0
      %581 = vperm.xlu0 %580, %v573
      %v582 = vpop.permute.xlu0 %581
      %v584 = vadd.f32 %v568, %v577
      %v585 = vadd.f32 %v569, %v577
      %v586 = vadd.f32 %v570, %v582
      %v587 = vadd.f32 %v571, %v582
      %v588 = vmax.f32 %v584, 0.0
      %v589 = vmax.f32 %v585, 0.0
      %v590 = vmax.f32 %v586, 0.0
      %v591 = vmax.f32 %v587, 0.0
      %vm592 = vcmask 139264
      %593 = vst.msk [vmem:[#allocation2] sm:$0x1] %vm592, 0.0
      %594 = vst.msk [vmem:[#allocation2 + $0x18] sm:$0x1] %vm592, 0.0
      %595 = vst.msk [vmem:[#allocation2 + $0x30] sm:$0x1] %vm592, 0.0
      %596 = vst.msk [vmem:[#allocation2 + $0x48] sm:$0x1] %vm592, 0.0
      %597 = vst.msk [vmem:[#allocation2 + $0x60] sm:$0x1] %vm592, 0.0
      %598 = vst.msk [vmem:[#allocation2 + $0x78] sm:$0x1] %vm592, 0.0
      %599 = vst.msk [vmem:[#allocation2 + $0x90] sm:$0x1] %vm592, 0.0
      %600 = vst.msk [vmem:[#allocation2 + $0xa8] sm:$0x1] %vm592, 0.0
      %601 = vst.msk [vmem:[#allocation2 + $0xc0] sm:$0x1] %vm592, 0.0
      %602 = vst.msk [vmem:[#allocation2 + $0xd8] sm:$0x1] %vm592, 0.0
      %603 = vst.msk [vmem:[#allocation2 + $0xf0] sm:$0x1] %vm592, 0.0
      %604 = vst.msk [vmem:[#allocation2 + $0x108] sm:$0x1] %vm592, 0.0
      %605 = vst.msk [vmem:[#allocation2 + $0x120] sm:$0x1] %vm592, 0.0
      %606 = vst.msk [vmem:[#allocation2 + $0x138] sm:$0x1] %vm592, 0.0
      %607 = vst.msk [vmem:[#allocation2 + $0x150] sm:$0x1] %vm592, 0.0
      %608 = vst.msk [vmem:[#allocation2 + $0x168] sm:$0x1] %vm592, 0.0
      %609 = vst.msk [vmem:[#allocation2 + $0x11] sm:$0x1] %vm592, 0.0
      %610 = vst.msk [vmem:[#allocation2 + $0x29] sm:$0x1] %vm592, 0.0
      %611 = vst.msk [vmem:[#allocation2 + $0x41] sm:$0x1] %vm592, 0.0
      %612 = vst.msk [vmem:[#allocation2 + $0x59] sm:$0x1] %vm592, 0.0
      %613 = vst.msk [vmem:[#allocation2 + $0x71] sm:$0x1] %vm592, 0.0
      %614 = vst.msk [vmem:[#allocation2 + $0x89] sm:$0x1] %vm592, 0.0
      %615 = vst.msk [vmem:[#allocation2 + $0xa1] sm:$0x1] %vm592, 0.0
      %616 = vst.msk [vmem:[#allocation2 + $0xb9] sm:$0x1] %vm592, 0.0
      %617 = vst.msk [vmem:[#allocation2 + $0xd1] sm:$0x1] %vm592, 0.0
      %618 = vst.msk [vmem:[#allocation2 + $0xe9] sm:$0x1] %vm592, 0.0
      %619 = vst.msk [vmem:[#allocation2 + $0x101] sm:$0x1] %vm592, 0.0
      %620 = vst.msk [vmem:[#allocation2 + $0x119] sm:$0x1] %vm592, 0.0
      %621 = vst.msk [vmem:[#allocation2 + $0x131] sm:$0x1] %vm592, 0.0
      %622 = vst.msk [vmem:[#allocation2 + $0x149] sm:$0x1] %vm592, 0.0
      %623 = vst.msk [vmem:[#allocation2 + $0x161] sm:$0x1] %vm592, 0.0
      %624 = vst.msk [vmem:[#allocation2 + $0x179] sm:$0x1] %vm592, 0.0
      %vm625 = vcmask 7168
      %626 = vst.msk [vmem:[#allocation2] sm:$0xff] %vm625, 0.0
      %627 = vst.msk [vmem:[#allocation2 + $0x8] sm:$0xff] %vm625, 0.0
      %vm628 = vcmask 1024
      %629 = vst.msk [vmem:[#allocation2 + $0x10] sm:$0x3] %vm628, 0.0
      %630 = vst.msk [vmem:[#allocation2 + $0x18] sm:$0xff] %vm625, 0.0
      %631 = vst.msk [vmem:[#allocation2 + $0x20] sm:$0xff] %vm625, 0.0
      %632 = vst.msk [vmem:[#allocation2 + $0x28] sm:$0x3] %vm628, 0.0
      %633 = vst.msk [vmem:[#allocation2 + $0x30] sm:$0xff] %vm625, 0.0
      %634 = vst.msk [vmem:[#allocation2 + $0x38] sm:$0xff] %vm625, 0.0
      %635 = vst.msk [vmem:[#allocation2 + $0x40] sm:$0x3] %vm628, 0.0
      %636 = vst.msk [vmem:[#allocation2 + $0x48] sm:$0xff] %vm625, 0.0
      %637 = vst.msk [vmem:[#allocation2 + $0x50] sm:$0xff] %vm625, 0.0
      %638 = vst.msk [vmem:[#allocation2 + $0x58] sm:$0x3] %vm628, 0.0
      %639 = vst.msk [vmem:[#allocation2 + $0x60] sm:$0xff] %vm625, 0.0
      %640 = vst.msk [vmem:[#allocation2 + $0x68] sm:$0xff] %vm625, 0.0
      %641 = vst.msk [vmem:[#allocation2 + $0x70] sm:$0x3] %vm628, 0.0
      %642 = vst.msk [vmem:[#allocation2 + $0x78] sm:$0xff] %vm625, 0.0
      %643 = vst.msk [vmem:[#allocation2 + $0x80] sm:$0xff] %vm625, 0.0
      %644 = vst.msk [vmem:[#allocation2 + $0x88] sm:$0x3] %vm628, 0.0
      %645 = vst.msk [vmem:[#allocation2 + $0x90] sm:$0xff] %vm625, 0.0
      %646 = vst.msk [vmem:[#allocation2 + $0x98] sm:$0xff] %vm625, 0.0
      %647 = vst.msk [vmem:[#allocation2 + $0xa0] sm:$0x3] %vm628, 0.0
      %648 = vst.msk [vmem:[#allocation2 + $0xa8] sm:$0xff] %vm625, 0.0
      %649 = vst.msk [vmem:[#allocation2 + $0xb0] sm:$0xff] %vm625, 0.0
      %650 = vst.msk [vmem:[#allocation2 + $0xb8] sm:$0x3] %vm628, 0.0
      %651 = vst.msk [vmem:[#allocation2 + $0xc0] sm:$0xff] %vm625, 0.0
      %652 = vst.msk [vmem:[#allocation2 + $0xc8] sm:$0xff] %vm625, 0.0
      %653 = vst.msk [vmem:[#allocation2 + $0xd0] sm:$0x3] %vm628, 0.0
      %654 = vst.msk [vmem:[#allocation2 + $0xd8] sm:$0xff] %vm625, 0.0
      %655 = vst.msk [vmem:[#allocation2 + $0xe0] sm:$0xff] %vm625, 0.0
      %656 = vst.msk [vmem:[#allocation2 + $0xe8] sm:$0x3] %vm628, 0.0
      %657 = vst.msk [vmem:[#allocation2 + $0xf0] sm:$0xff] %vm625, 0.0
      %658 = vst.msk [vmem:[#allocation2 + $0xf8] sm:$0xff] %vm625, 0.0
      %659 = vst.msk [vmem:[#allocation2 + $0x100] sm:$0x3] %vm628, 0.0
      %660 = vst.msk [vmem:[#allocation2 + $0x108] sm:$0xff] %vm625, 0.0
      %661 = vst.msk [vmem:[#allocation2 + $0x110] sm:$0xff] %vm625, 0.0
      %662 = vst.msk [vmem:[#allocation2 + $0x118] sm:$0x3] %vm628, 0.0
      %663 = vst.msk [vmem:[#allocation2 + $0x120] sm:$0xff] %vm625, 0.0
      %664 = vst.msk [vmem:[#allocation2 + $0x128] sm:$0xff] %vm625, 0.0
      %665 = vst.msk [vmem:[#allocation2 + $0x130] sm:$0x3] %vm628, 0.0
      %666 = vst.msk [vmem:[#allocation2 + $0x138] sm:$0xff] %vm625, 0.0
      %667 = vst.msk [vmem:[#allocation2 + $0x140] sm:$0xff] %vm625, 0.0
      %668 = vst.msk [vmem:[#allocation2 + $0x148] sm:$0x3] %vm628, 0.0
      %669 = vst.msk [vmem:[#allocation2 + $0x150] sm:$0xff] %vm625, 0.0
      %670 = vst.msk [vmem:[#allocation2 + $0x158] sm:$0xff] %vm625, 0.0
      %671 = vst.msk [vmem:[#allocation2 + $0x160] sm:$0x3] %vm628, 0.0
      %672 = vst.msk [vmem:[#allocation2 + $0x168] sm:$0xff] %vm625, 0.0
      %673 = vst.msk [vmem:[#allocation2 + $0x170] sm:$0xff] %vm625, 0.0
      %674 = vst.msk [vmem:[#allocation2 + $0x178] sm:$0x3] %vm628, 0.0
      %vm675 = vcmask 146568
      %676 = vst.msk [vmem:[#allocation2] sm:$0xff] %vm675, 0.0
      %677 = vst.msk [vmem:[#allocation2 + $0x8] sm:$0xff] %vm675, 0.0
      %vm678 = vcmask 140424
      %679 = vst.msk [vmem:[#allocation2 + $0x10] sm:$0x3] %vm678, 0.0
      %680 = vst.msk [vmem:[#allocation2 + $0x18] sm:$0xff] %vm675, 0.0
      %681 = vst.msk [vmem:[#allocation2 + $0x20] sm:$0xff] %vm675, 0.0
      %682 = vst.msk [vmem:[#allocation2 + $0x28] sm:$0x3] %vm678, 0.0
      %683 = vst.msk [vmem:[#allocation2 + $0x30] sm:$0xff] %vm675, 0.0
      %684 = vst.msk [vmem:[#allocation2 + $0x38] sm:$0xff] %vm675, 0.0
      %685 = vst.msk [vmem:[#allocation2 + $0x40] sm:$0x3] %vm678, 0.0
      %686 = vst.msk [vmem:[#allocation2 + $0x48] sm:$0xff] %vm675, 0.0
      %687 = vst.msk [vmem:[#allocation2 + $0x50] sm:$0xff] %vm675, 0.0
      %688 = vst.msk [vmem:[#allocation2 + $0x58] sm:$0x3] %vm678, 0.0
      %689 = vst.msk [vmem:[#allocation2 + $0x60] sm:$0xff] %vm675, 0.0
      %690 = vst.msk [vmem:[#allocation2 + $0x68] sm:$0xff] %vm675, 0.0
      %691 = vst.msk [vmem:[#allocation2 + $0x70] sm:$0x3] %vm678, 0.0
      %692 = vst.msk [vmem:[#allocation2 + $0x78] sm:$0xff] %vm675, 0.0
      %693 = vst.msk [vmem:[#allocation2 + $0x80] sm:$0xff] %vm675, 0.0
      %694 = vst.msk [vmem:[#allocation2 + $0x88] sm:$0x3] %vm678, 0.0
      %695 = vst.msk [vmem:[#allocation2 + $0x90] sm:$0xff] %vm675, 0.0
      %696 = vst.msk [vmem:[#allocation2 + $0x98] sm:$0xff] %vm675, 0.0
      %697 = vst.msk [vmem:[#allocation2 + $0xa0] sm:$0x3] %vm678, 0.0
      %698 = vst.msk [vmem:[#allocation2 + $0xa8] sm:$0xff] %vm675, 0.0
      %699 = vst.msk [vmem:[#allocation2 + $0xb0] sm:$0xff] %vm675, 0.0
      %700 = vst.msk [vmem:[#allocation2 + $0xb8] sm:$0x3] %vm678, 0.0
      %701 = vst.msk [vmem:[#allocation2 + $0xc0] sm:$0xff] %vm675, 0.0
      %702 = vst.msk [vmem:[#allocation2 + $0xc8] sm:$0xff] %vm675, 0.0
      %703 = vst.msk [vmem:[#allocation2 + $0xd0] sm:$0x3] %vm678, 0.0
      %704 = vst.msk [vmem:[#allocation2 + $0xd8] sm:$0xff] %vm675, 0.0
      %705 = vst.msk [vmem:[#allocation2 + $0xe0] sm:$0xff] %vm675, 0.0
      %706 = vst.msk [vmem:[#allocation2 + $0xe8] sm:$0x3] %vm678, 0.0
      %707 = vst.msk [vmem:[#allocation2 + $0xf0] sm:$0xff] %vm675, 0.0
      %708 = vst.msk [vmem:[#allocation2 + $0xf8] sm:$0xff] %vm675, 0.0
      %709 = vst.msk [vmem:[#allocation2 + $0x100] sm:$0x3] %vm678, 0.0
      %710 = vst.msk [vmem:[#allocation2 + $0x108] sm:$0xff] %vm675, 0.0
      %711 = vst.msk [vmem:[#allocation2 + $0x110] sm:$0xff] %vm675, 0.0
      %712 = vst.msk [vmem:[#allocation2 + $0x118] sm:$0x3] %vm678, 0.0
      %713 = vst.msk [vmem:[#allocation2 + $0x120] sm:$0xff] %vm675, 0.0
      %714 = vst.msk [vmem:[#allocation2 + $0x128] sm:$0xff] %vm675, 0.0
      %715 = vst.msk [vmem:[#allocation2 + $0x130] sm:$0x3] %vm678, 0.0
      %716 = vst.msk [vmem:[#allocation2 + $0x138] sm:$0xff] %vm675, 0.0
      %717 = vst.msk [vmem:[#allocation2 + $0x140] sm:$0xff] %vm675, 0.0
      %718 = vst.msk [vmem:[#allocation2 + $0x148] sm:$0x3] %vm678, 0.0
      %719 = vst.msk [vmem:[#allocation2 + $0x150] sm:$0xff] %vm675, 0.0
      %720 = vst.msk [vmem:[#allocation2 + $0x158] sm:$0xff] %vm675, 0.0
      %721 = vst.msk [vmem:[#allocation2 + $0x160] sm:$0x3] %vm678, 0.0
      %722 = vst.msk [vmem:[#allocation2 + $0x168] sm:$0xff] %vm675, 0.0
      %723 = vst.msk [vmem:[#allocation2 + $0x170] sm:$0xff] %vm675, 0.0
      %724 = vst.msk [vmem:[#allocation2 + $0x178] sm:$0x3] %vm678, 0.0
      %727 = vrot.lane.b32.xlu0 %v588, 112
      %v728 = vpop.permute.xlu0 %727
      %729 = vrot.lane.b32.xlu0 %v590, 112
      %v730 = vpop.permute.xlu0 %729
      %733 = vrot.lane.b32.xlu0 %v588, 96
      %v734 = vpop.permute.xlu0 %733
      %735 = vrot.lane.b32.xlu0 %v590, 96
      %v736 = vpop.permute.xlu0 %735
      %739 = vrot.lane.b32.xlu0 %v588, 80
      %v740 = vpop.permute.xlu0 %739
      %741 = vrot.lane.b32.xlu0 %v590, 80
      %v742 = vpop.permute.xlu0 %741
      %745 = vrot.lane.b32.xlu0 %v588, 64
      %v746 = vpop.permute.xlu0 %745
      %747 = vrot.lane.b32.xlu0 %v590, 64
      %v748 = vpop.permute.xlu0 %747
      %751 = vrot.lane.b32.xlu0 %v588, 48
      %v752 = vpop.permute.xlu0 %751
      %753 = vrot.lane.b32.xlu0 %v590, 48
      %v754 = vpop.permute.xlu0 %753
      %757 = vrot.lane.b32.xlu0 %v588, 32
      %v758 = vpop.permute.xlu0 %757
      %759 = vrot.lane.b32.xlu0 %v590, 32
      %v760 = vpop.permute.xlu0 %759
      %763 = vrot.lane.b32.xlu0 %v588, 16
      %v764 = vpop.permute.xlu0 %763
      %765 = vrot.lane.b32.xlu0 %v590, 16
      %v766 = vpop.permute.xlu0 %765
      %771 = vrot.lane.b32.xlu0 %v589, 112
      %v772 = vpop.permute.xlu0 %771
      %773 = vrot.lane.b32.xlu0 %v591, 112
      %v774 = vpop.permute.xlu0 %773
      %777 = vrot.lane.b32.xlu0 %v589, 96
      %v778 = vpop.permute.xlu0 %777
      %779 = vrot.lane.b32.xlu0 %v591, 96
      %v780 = vpop.permute.xlu0 %779
      %783 = vrot.lane.b32.xlu0 %v589, 80
      %v784 = vpop.permute.xlu0 %783
      %785 = vrot.lane.b32.xlu0 %v591, 80
      %v786 = vpop.permute.xlu0 %785
      %789 = vrot.lane.b32.xlu0 %v589, 64
      %v790 = vpop.permute.xlu0 %789
      %791 = vrot.lane.b32.xlu0 %v591, 64
      %v792 = vpop.permute.xlu0 %791
      %795 = vrot.lane.b32.xlu0 %v589, 48
      %v796 = vpop.permute.xlu0 %795
      %797 = vrot.lane.b32.xlu0 %v591, 48
      %v798 = vpop.permute.xlu0 %797
      %801 = vrot.lane.b32.xlu0 %v589, 32
      %v802 = vpop.permute.xlu0 %801
      %803 = vrot.lane.b32.xlu0 %v591, 32
      %v804 = vpop.permute.xlu0 %803
      %807 = vrot.lane.b32.xlu0 %v589, 16
      %v808 = vpop.permute.xlu0 %807
      %809 = vrot.lane.b32.xlu0 %v591, 16
      %v810 = vpop.permute.xlu0 %809
      %v813 = vcombine.low %v588, %v734
      %v814 = vcombine.high %v588, %v734
      %v816 = vunpack.c.l.s4 1983009808
      %v817 = vunpack.c.0.s8 %v816
      %v818 = vlaneseq
      %v819 = vshrl.u32 %v818, 7
      %v820 = vsub.s32 %v817, %v819
      %v821 = vrot.slane %v813, %v820
      %v823 = vunpack.c.l.s4 1983009808
      %v824 = vunpack.c.0.s8 %v823
      %v825 = vlaneseq
      %v826 = vshrl.u32 %v825, 7
      %v827 = vsub.s32 %v824, %v826
      %v828 = vrot.slane %v814, %v827
      %v829 = vcombine.low %v728, %v740
      %v830 = vcombine.high %v728, %v740
      %v832 = vunpack.c.l.s4 1983009808
      %v833 = vunpack.c.0.s8 %v832
      %v834 = vlaneseq
      %v835 = vshrl.u32 %v834, 7
      %v836 = vsub.s32 %v833, %v835
      %v837 = vrot.slane %v829, %v836
      %v839 = vunpack.c.l.s4 1983009808
      %v840 = vunpack.c.0.s8 %v839
      %v841 = vlaneseq
      %v842 = vshrl.u32 %v841, 7
      %v843 = vsub.s32 %v840, %v842
      %v844 = vrot.slane %v830, %v843
      %v845 = vcombine.low %v746, %v758
      %v846 = vcombine.high %v746, %v758
      %v848 = vunpack.c.l.s4 1983009808
      %v849 = vunpack.c.0.s8 %v848
      %v850 = vlaneseq
      %v851 = vshrl.u32 %v850, 7
      %v852 = vsub.s32 %v849, %v851
      %v853 = vrot.slane %v845, %v852
      %v855 = vunpack.c.l.s4 1983009808
      %v856 = vunpack.c.0.s8 %v855
      %v857 = vlaneseq
      %v858 = vshrl.u32 %v857, 7
      %v859 = vsub.s32 %v856, %v858
      %v860 = vrot.slane %v846, %v859
      %v861 = vcombine.low %v752, %v764
      %v862 = vcombine.high %v752, %v764
      %v864 = vunpack.c.l.s4 1983009808
      %v865 = vunpack.c.0.s8 %v864
      %v866 = vlaneseq
      %v867 = vshrl.u32 %v866, 7
      %v868 = vsub.s32 %v865, %v867
      %v869 = vrot.slane %v861, %v868
      %v871 = vunpack.c.l.s4 1983009808
      %v872 = vunpack.c.0.s8 %v871
      %v873 = vlaneseq
      %v874 = vshrl.u32 %v873, 7
      %v875 = vsub.s32 %v872, %v874
      %v876 = vrot.slane %v862, %v875
      %v877 = vcombine.low %v821, %v837
      %v878 = vcombine.high %v821, %v837
      %v880 = vunpack.c.l.s4 1934713408
      %v881 = vunpack.c.0.s8 %v880
      %v882 = vlaneseq
      %v883 = vshrl.u32 %v882, 7
      %v884 = vsub.s32 %v881, %v883
      %v885 = vrot.slane %v877, %v884
      %v887 = vunpack.c.l.s4 1934713408
      %v888 = vunpack.c.0.s8 %v887
      %v889 = vlaneseq
      %v890 = vshrl.u32 %v889, 7
      %v891 = vsub.s32 %v888, %v890
      %v892 = vrot.slane %v878, %v891
      %v893 = vcombine.low %v828, %v844
      %v894 = vcombine.high %v828, %v844
      %v896 = vunpack.c.l.s4 1934713408
      %v897 = vunpack.c.0.s8 %v896
      %v898 = vlaneseq
      %v899 = vshrl.u32 %v898, 7
      %v900 = vsub.s32 %v897, %v899
      %v901 = vrot.slane %v893, %v900
      %v903 = vunpack.c.l.s4 1934713408
      %v904 = vunpack.c.0.s8 %v903
      %v905 = vlaneseq
      %v906 = vshrl.u32 %v905, 7
      %v907 = vsub.s32 %v904, %v906
      %v908 = vrot.slane %v894, %v907
      %v909 = vcombine.low %v853, %v869
      %v910 = vcombine.high %v853, %v869
      %v912 = vunpack.c.l.s4 1934713408
      %v913 = vunpack.c.0.s8 %v912
      %v914 = vlaneseq
      %v915 = vshrl.u32 %v914, 7
      %v916 = vsub.s32 %v913, %v915
      %v917 = vrot.slane %v909, %v916
      %v919 = vunpack.c.l.s4 1934713408
      %v920 = vunpack.c.0.s8 %v919
      %v921 = vlaneseq
      %v922 = vshrl.u32 %v921, 7
      %v923 = vsub.s32 %v920, %v922
      %v924 = vrot.slane %v910, %v923
      %v925 = vcombine.low %v860, %v876
      %v926 = vcombine.high %v860, %v876
      %v928 = vunpack.c.l.s4 1934713408
      %v929 = vunpack.c.0.s8 %v928
      %v930 = vlaneseq
      %v931 = vshrl.u32 %v930, 7
      %v932 = vsub.s32 %v929, %v931
      %v933 = vrot.slane %v925, %v932
      %v935 = vunpack.c.l.s4 1934713408
      %v936 = vunpack.c.0.s8 %v935
      %v937 = vlaneseq
      %v938 = vshrl.u32 %v937, 7
      %v939 = vsub.s32 %v936, %v938
      %v940 = vrot.slane %v926, %v939
      %v941 = vcombine.low %v885, %v917
      %v942 = vcombine.high %v885, %v917
      %v943 = vcombine.low %v892, %v924
      %v944 = vcombine.high %v892, %v924
      %v945 = vcombine.low %v901, %v933
      %v946 = vcombine.high %v901, %v933
      %v947 = vcombine.low %v908, %v940
      %v948 = vcombine.high %v908, %v940
      %v949 = vcombine.low %v589, %v778
      %v950 = vcombine.high %v589, %v778
      %v952 = vunpack.c.l.s4 1983009808
      %v953 = vunpack.c.0.s8 %v952
      %v954 = vlaneseq
      %v955 = vshrl.u32 %v954, 7
      %v956 = vsub.s32 %v953, %v955
      %v957 = vrot.slane %v949, %v956
      %v959 = vunpack.c.l.s4 1983009808
      %v960 = vunpack.c.0.s8 %v959
      %v961 = vlaneseq
      %v962 = vshrl.u32 %v961, 7
      %v963 = vsub.s32 %v960, %v962
      %v964 = vrot.slane %v950, %v963
      %v965 = vcombine.low %v772, %v784
      %v966 = vcombine.high %v772, %v784
      %v968 = vunpack.c.l.s4 1983009808
      %v969 = vunpack.c.0.s8 %v968
      %v970 = vlaneseq
      %v971 = vshrl.u32 %v970, 7
      %v972 = vsub.s32 %v969, %v971
      %v973 = vrot.slane %v965, %v972
      %v975 = vunpack.c.l.s4 1983009808
      %v976 = vunpack.c.0.s8 %v975
      %v977 = vlaneseq
      %v978 = vshrl.u32 %v977, 7
      %v979 = vsub.s32 %v976, %v978
      %v980 = vrot.slane %v966, %v979
      %v981 = vcombine.low %v790, %v802
      %v982 = vcombine.high %v790, %v802
      %v984 = vunpack.c.l.s4 1983009808
      %v985 = vunpack.c.0.s8 %v984
      %v986 = vlaneseq
      %v987 = vshrl.u32 %v986, 7
      %v988 = vsub.s32 %v985, %v987
      %v989 = vrot.slane %v981, %v988
      %v991 = vunpack.c.l.s4 1983009808
      %v992 = vunpack.c.0.s8 %v991
      %v993 = vlaneseq
      %v994 = vshrl.u32 %v993, 7
      %v995 = vsub.s32 %v992, %v994
      %v996 = vrot.slane %v982, %v995
      %v997 = vcombine.low %v796, %v808
      %v998 = vcombine.high %v796, %v808
      %v1000 = vunpack.c.l.s4 1983009808
      %v1001 = vunpack.c.0.s8 %v1000
      %v1002 = vlaneseq
      %v1003 = vshrl.u32 %v1002, 7
      %v1004 = vsub.s32 %v1001, %v1003
      %v1005 = vrot.slane %v997, %v1004
      %v1007 = vunpack.c.l.s4 1983009808
      %v1008 = vunpack.c.0.s8 %v1007
      %v1009 = vlaneseq
      %v1010 = vshrl.u32 %v1009, 7
      %v1011 = vsub.s32 %v1008, %v1010
      %v1012 = vrot.slane %v998, %v1011
      %v1013 = vcombine.low %v957, %v973
      %v1014 = vcombine.high %v957, %v973
      %v1016 = vunpack.c.l.s4 1934713408
      %v1017 = vunpack.c.0.s8 %v1016
      %v1018 = vlaneseq
      %v1019 = vshrl.u32 %v1018, 7
      %v1020 = vsub.s32 %v1017, %v1019
      %v1021 = vrot.slane %v1013, %v1020
      %v1023 = vunpack.c.l.s4 1934713408
      %v1024 = vunpack.c.0.s8 %v1023
      %v1025 = vlaneseq
      %v1026 = vshrl.u32 %v1025, 7
      %v1027 = vsub.s32 %v1024, %v1026
      %v1028 = vrot.slane %v1014, %v1027
      %v1029 = vcombine.low %v964, %v980
      %v1030 = vcombine.high %v964, %v980
      %v1032 = vunpack.c.l.s4 1934713408
      %v1033 = vunpack.c.0.s8 %v1032
      %v1034 = vlaneseq
      %v1035 = vshrl.u32 %v1034, 7
      %v1036 = vsub.s32 %v1033, %v1035
      %v1037 = vrot.slane %v1029, %v1036
      %v1039 = vunpack.c.l.s4 1934713408
      %v1040 = vunpack.c.0.s8 %v1039
      %v1041 = vlaneseq
      %v1042 = vshrl.u32 %v1041, 7
      %v1043 = vsub.s32 %v1040, %v1042
      %v1044 = vrot.slane %v1030, %v1043
      %v1045 = vcombine.low %v989, %v1005
      %v1046 = vcombine.high %v989, %v1005
      %v1048 = vunpack.c.l.s4 1934713408
      %v1049 = vunpack.c.0.s8 %v1048
      %v1050 = vlaneseq
      %v1051 = vshrl.u32 %v1050, 7
      %v1052 = vsub.s32 %v1049, %v1051
      %v1053 = vrot.slane %v1045, %v1052
      %v1055 = vunpack.c.l.s4 1934713408
      %v1056 = vunpack.c.0.s8 %v1055
      %v1057 = vlaneseq
      %v1058 = vshrl.u32 %v1057, 7
      %v1059 = vsub.s32 %v1056, %v1058
      %v1060 = vrot.slane %v1046, %v1059
      %v1061 = vcombine.low %v996, %v1012
      %v1062 = vcombine.high %v996, %v1012
      %v1064 = vunpack.c.l.s4 1934713408
      %v1065 = vunpack.c.0.s8 %v1064
      %v1066 = vlaneseq
      %v1067 = vshrl.u32 %v1066, 7
      %v1068 = vsub.s32 %v1065, %v1067
      %v1069 = vrot.slane %v1061, %v1068
      %v1071 = vunpack.c.l.s4 1934713408
      %v1072 = vunpack.c.0.s8 %v1071
      %v1073 = vlaneseq
      %v1074 = vshrl.u32 %v1073, 7
      %v1075 = vsub.s32 %v1072, %v1074
      %v1076 = vrot.slane %v1062, %v1075
      %v1077 = vcombine.low %v1021, %v1053
      %v1078 = vcombine.high %v1021, %v1053
      %v1079 = vcombine.low %v1028, %v1060
      %v1080 = vcombine.high %v1028, %v1060
      %v1081 = vcombine.low %v1037, %v1069
      %v1082 = vcombine.high %v1037, %v1069
      %v1083 = vcombine.low %v1044, %v1076
      %v1084 = vcombine.high %v1044, %v1076
      %v1085 = vcombine.low %v590, %v736
      %v1086 = vcombine.high %v590, %v736
      %v1088 = vunpack.c.l.s4 1983009808
      %v1089 = vunpack.c.0.s8 %v1088
      %v1090 = vlaneseq
      %v1091 = vshrl.u32 %v1090, 7
      %v1092 = vsub.s32 %v1089, %v1091
      %v1093 = vrot.slane %v1085, %v1092
      %v1095 = vunpack.c.l.s4 1983009808
      %v1096 = vunpack.c.0.s8 %v1095
      %v1097 = vlaneseq
      %v1098 = vshrl.u32 %v1097, 7
      %v1099 = vsub.s32 %v1096, %v1098
      %v1100 = vrot.slane %v1086, %v1099
      %v1101 = vcombine.low %v730, %v742
      %v1102 = vcombine.high %v730, %v742
      %v1104 = vunpack.c.l.s4 1983009808
      %v1105 = vunpack.c.0.s8 %v1104
      %v1106 = vlaneseq
      %v1107 = vshrl.u32 %v1106, 7
      %v1108 = vsub.s32 %v1105, %v1107
      %v1109 = vrot.slane %v1101, %v1108
      %v1111 = vunpack.c.l.s4 1983009808
      %v1112 = vunpack.c.0.s8 %v1111
      %v1113 = vlaneseq
      %v1114 = vshrl.u32 %v1113, 7
      %v1115 = vsub.s32 %v1112, %v1114
      %v1116 = vrot.slane %v1102, %v1115
      %v1117 = vcombine.low %v748, %v760
      %v1118 = vcombine.high %v748, %v760
      %v1120 = vunpack.c.l.s4 1983009808
      %v1121 = vunpack.c.0.s8 %v1120
      %v1122 = vlaneseq
      %v1123 = vshrl.u32 %v1122, 7
      %v1124 = vsub.s32 %v1121, %v1123
      %v1125 = vrot.slane %v1117, %v1124
      %v1127 = vunpack.c.l.s4 1983009808
      %v1128 = vunpack.c.0.s8 %v1127
      %v1129 = vlaneseq
      %v1130 = vshrl.u32 %v1129, 7
      %v1131 = vsub.s32 %v1128, %v1130
      %v1132 = vrot.slane %v1118, %v1131
      %v1133 = vcombine.low %v754, %v766
      %v1134 = vcombine.high %v754, %v766
      %v1136 = vunpack.c.l.s4 1983009808
      %v1137 = vunpack.c.0.s8 %v1136
      %v1138 = vlaneseq
      %v1139 = vshrl.u32 %v1138, 7
      %v1140 = vsub.s32 %v1137, %v1139
      %v1141 = vrot.slane %v1133, %v1140
      %v1143 = vunpack.c.l.s4 1983009808
      %v1144 = vunpack.c.0.s8 %v1143
      %v1145 = vlaneseq
      %v1146 = vshrl.u32 %v1145, 7
      %v1147 = vsub.s32 %v1144, %v1146
      %v1148 = vrot.slane %v1134, %v1147
      %v1149 = vcombine.low %v1093, %v1109
      %v1150 = vcombine.high %v1093, %v1109
      %v1152 = vunpack.c.l.s4 1934713408
      %v1153 = vunpack.c.0.s8 %v1152
      %v1154 = vlaneseq
      %v1155 = vshrl.u32 %v1154, 7
      %v1156 = vsub.s32 %v1153, %v1155
      %v1157 = vrot.slane %v1149, %v1156
      %v1159 = vunpack.c.l.s4 1934713408
      %v1160 = vunpack.c.0.s8 %v1159
      %v1161 = vlaneseq
      %v1162 = vshrl.u32 %v1161, 7
      %v1163 = vsub.s32 %v1160, %v1162
      %v1164 = vrot.slane %v1150, %v1163
      %v1165 = vcombine.low %v1100, %v1116
      %v1166 = vcombine.high %v1100, %v1116
      %v1168 = vunpack.c.l.s4 1934713408
      %v1169 = vunpack.c.0.s8 %v1168
      %v1170 = vlaneseq
      %v1171 = vshrl.u32 %v1170, 7
      %v1172 = vsub.s32 %v1169, %v1171
      %v1173 = vrot.slane %v1165, %v1172
      %v1175 = vunpack.c.l.s4 1934713408
      %v1176 = vunpack.c.0.s8 %v1175
      %v1177 = vlaneseq
      %v1178 = vshrl.u32 %v1177, 7
      %v1179 = vsub.s32 %v1176, %v1178
      %v1180 = vrot.slane %v1166, %v1179
      %v1181 = vcombine.low %v1125, %v1141
      %v1182 = vcombine.high %v1125, %v1141
      %v1184 = vunpack.c.l.s4 1934713408
      %v1185 = vunpack.c.0.s8 %v1184
      %v1186 = vlaneseq
      %v1187 = vshrl.u32 %v1186, 7
      %v1188 = vsub.s32 %v1185, %v1187
      %v1189 = vrot.slane %v1181, %v1188
      %v1191 = vunpack.c.l.s4 1934713408
      %v1192 = vunpack.c.0.s8 %v1191
      %v1193 = vlaneseq
      %v1194 = vshrl.u32 %v1193, 7
      %v1195 = vsub.s32 %v1192, %v1194
      %v1196 = vrot.slane %v1182, %v1195
      %v1197 = vcombine.low %v1132, %v1148
      %v1198 = vcombine.high %v1132, %v1148
      %v1200 = vunpack.c.l.s4 1934713408
      %v1201 = vunpack.c.0.s8 %v1200
      %v1202 = vlaneseq
      %v1203 = vshrl.u32 %v1202, 7
      %v1204 = vsub.s32 %v1201, %v1203
      %v1205 = vrot.slane %v1197, %v1204
      %v1207 = vunpack.c.l.s4 1934713408
      %v1208 = vunpack.c.0.s8 %v1207
      %v1209 = vlaneseq
      %v1210 = vshrl.u32 %v1209, 7
      %v1211 = vsub.s32 %v1208, %v1210
      %v1212 = vrot.slane %v1198, %v1211
      %v1213 = vcombine.low %v1157, %v1189
      %v1214 = vcombine.high %v1157, %v1189
      %v1215 = vcombine.low %v1164, %v1196
      %v1216 = vcombine.high %v1164, %v1196
      %v1217 = vcombine.low %v1173, %v1205
      %v1218 = vcombine.high %v1173, %v1205
      %v1219 = vcombine.low %v1180, %v1212
      %v1220 = vcombine.high %v1180, %v1212
      %v1221 = vcombine.low %v591, %v780
      %v1222 = vcombine.high %v591, %v780
      %v1224 = vunpack.c.l.s4 1983009808
      %v1225 = vunpack.c.0.s8 %v1224
      %v1226 = vlaneseq
      %v1227 = vshrl.u32 %v1226, 7
      %v1228 = vsub.s32 %v1225, %v1227
      %v1229 = vrot.slane %v1221, %v1228
      %v1231 = vunpack.c.l.s4 1983009808
      %v1232 = vunpack.c.0.s8 %v1231
      %v1233 = vlaneseq
      %v1234 = vshrl.u32 %v1233, 7
      %v1235 = vsub.s32 %v1232, %v1234
      %v1236 = vrot.slane %v1222, %v1235
      %v1237 = vcombine.low %v774, %v786
      %v1238 = vcombine.high %v774, %v786
      %v1240 = vunpack.c.l.s4 1983009808
      %v1241 = vunpack.c.0.s8 %v1240
      %v1242 = vlaneseq
      %v1243 = vshrl.u32 %v1242, 7
      %v1244 = vsub.s32 %v1241, %v1243
      %v1245 = vrot.slane %v1237, %v1244
      %v1247 = vunpack.c.l.s4 1983009808
      %v1248 = vunpack.c.0.s8 %v1247
      %v1249 = vlaneseq
      %v1250 = vshrl.u32 %v1249, 7
      %v1251 = vsub.s32 %v1248, %v1250
      %v1252 = vrot.slane %v1238, %v1251
      %v1253 = vcombine.low %v792, %v804
      %v1254 = vcombine.high %v792, %v804
      %v1256 = vunpack.c.l.s4 1983009808
      %v1257 = vunpack.c.0.s8 %v1256
      %v1258 = vlaneseq
      %v1259 = vshrl.u32 %v1258, 7
      %v1260 = vsub.s32 %v1257, %v1259
      %v1261 = vrot.slane %v1253, %v1260
      %v1263 = vunpack.c.l.s4 1983009808
      %v1264 = vunpack.c.0.s8 %v1263
      %v1265 = vlaneseq
      %v1266 = vshrl.u32 %v1265, 7
      %v1267 = vsub.s32 %v1264, %v1266
      %v1268 = vrot.slane %v1254, %v1267
      %v1269 = vcombine.low %v798, %v810
      %v1270 = vcombine.high %v798, %v810
      %v1272 = vunpack.c.l.s4 1983009808
      %v1273 = vunpack.c.0.s8 %v1272
      %v1274 = vlaneseq
      %v1275 = vshrl.u32 %v1274, 7
      %v1276 = vsub.s32 %v1273, %v1275
      %v1277 = vrot.slane %v1269, %v1276
      %v1279 = vunpack.c.l.s4 1983009808
      %v1280 = vunpack.c.0.s8 %v1279
      %v1281 = vlaneseq
      %v1282 = vshrl.u32 %v1281, 7
      %v1283 = vsub.s32 %v1280, %v1282
      %v1284 = vrot.slane %v1270, %v1283
      %v1285 = vcombine.low %v1229, %v1245
      %v1286 = vcombine.high %v1229, %v1245
      %v1288 = vunpack.c.l.s4 1934713408
      %v1289 = vunpack.c.0.s8 %v1288
      %v1290 = vlaneseq
      %v1291 = vshrl.u32 %v1290, 7
      %v1292 = vsub.s32 %v1289, %v1291
      %v1293 = vrot.slane %v1285, %v1292
      %v1295 = vunpack.c.l.s4 1934713408
      %v1296 = vunpack.c.0.s8 %v1295
      %v1297 = vlaneseq
      %v1298 = vshrl.u32 %v1297, 7
      %v1299 = vsub.s32 %v1296, %v1298
      %v1300 = vrot.slane %v1286, %v1299
      %v1301 = vcombine.low %v1236, %v1252
      %v1302 = vcombine.high %v1236, %v1252
      %v1304 = vunpack.c.l.s4 1934713408
      %v1305 = vunpack.c.0.s8 %v1304
      %v1306 = vlaneseq
      %v1307 = vshrl.u32 %v1306, 7
      %v1308 = vsub.s32 %v1305, %v1307
      %v1309 = vrot.slane %v1301, %v1308
      %v1311 = vunpack.c.l.s4 1934713408
      %v1312 = vunpack.c.0.s8 %v1311
      %v1313 = vlaneseq
      %v1314 = vshrl.u32 %v1313, 7
      %v1315 = vsub.s32 %v1312, %v1314
      %v1316 = vrot.slane %v1302, %v1315
      %v1317 = vcombine.low %v1261, %v1277
      %v1318 = vcombine.high %v1261, %v1277
      %v1320 = vunpack.c.l.s4 1934713408
      %v1321 = vunpack.c.0.s8 %v1320
      %v1322 = vlaneseq
      %v1323 = vshrl.u32 %v1322, 7
      %v1324 = vsub.s32 %v1321, %v1323
      %v1325 = vrot.slane %v1317, %v1324
      %v1327 = vunpack.c.l.s4 1934713408
      %v1328 = vunpack.c.0.s8 %v1327
      %v1329 = vlaneseq
      %v1330 = vshrl.u32 %v1329, 7
      %v1331 = vsub.s32 %v1328, %v1330
      %v1332 = vrot.slane %v1318, %v1331
      %v1333 = vcombine.low %v1268, %v1284
      %v1334 = vcombine.high %v1268, %v1284
      %v1336 = vunpack.c.l.s4 1934713408
      %v1337 = vunpack.c.0.s8 %v1336
      %v1338 = vlaneseq
      %v1339 = vshrl.u32 %v1338, 7
      %v1340 = vsub.s32 %v1337, %v1339
      %v1341 = vrot.slane %v1333, %v1340
      %v1343 = vunpack.c.l.s4 1934713408
      %v1344 = vunpack.c.0.s8 %v1343
      %v1345 = vlaneseq
      %v1346 = vshrl.u32 %v1345, 7
      %v1347 = vsub.s32 %v1344, %v1346
      %v1348 = vrot.slane %v1334, %v1347
      %v1349 = vcombine.low %v1293, %v1325
      %v1350 = vcombine.high %v1293, %v1325
      %v1351 = vcombine.low %v1300, %v1332
      %v1352 = vcombine.high %v1300, %v1332
      %v1353 = vcombine.low %v1309, %v1341
      %v1354 = vcombine.high %v1309, %v1341
      %v1355 = vcombine.low %v1316, %v1348
      %v1356 = vcombine.high %v1316, %v1348
      %1389 = vrot.lane.b32.xlu0 %v941, 1
      %v1390 = vpop.permute.xlu0 %1389
      %1391 = vrot.lane.b32.xlu0 %v1077, 1
      %v1392 = vpop.permute.xlu0 %1391
      %1393 = vrot.lane.b32.xlu0 %v942, 1
      %v1394 = vpop.permute.xlu0 %1393
      %1395 = vrot.lane.b32.xlu0 %v1078, 1
      %v1396 = vpop.permute.xlu0 %1395
      %1397 = vrot.lane.b32.xlu0 %v943, 1
      %v1398 = vpop.permute.xlu0 %1397
      %1399 = vrot.lane.b32.xlu0 %v1079, 1
      %v1400 = vpop.permute.xlu0 %1399
      %1401 = vrot.lane.b32.xlu0 %v944, 1
      %v1402 = vpop.permute.xlu0 %1401
      %1403 = vrot.lane.b32.xlu0 %v1080, 1
      %v1404 = vpop.permute.xlu0 %1403
      %1405 = vrot.lane.b32.xlu0 %v945, 1
      %v1406 = vpop.permute.xlu0 %1405
      %1407 = vrot.lane.b32.xlu0 %v1081, 1
      %v1408 = vpop.permute.xlu0 %1407
      %1409 = vrot.lane.b32.xlu0 %v946, 1
      %v1410 = vpop.permute.xlu0 %1409
      %1411 = vrot.lane.b32.xlu0 %v1082, 1
      %v1412 = vpop.permute.xlu0 %1411
      %1413 = vrot.lane.b32.xlu0 %v947, 1
      %v1414 = vpop.permute.xlu0 %1413
      %1415 = vrot.lane.b32.xlu0 %v1083, 1
      %v1416 = vpop.permute.xlu0 %1415
      %1417 = vrot.lane.b32.xlu0 %v948, 1
      %v1418 = vpop.permute.xlu0 %1417
      %1419 = vrot.lane.b32.xlu0 %v1084, 1
      %v1420 = vpop.permute.xlu0 %1419
      %1421 = vrot.lane.b32.xlu0 %v1213, 1
      %v1422 = vpop.permute.xlu0 %1421
      %1423 = vrot.lane.b32.xlu0 %v1349, 1
      %v1424 = vpop.permute.xlu0 %1423
      %1425 = vrot.lane.b32.xlu0 %v1214, 1
      %v1426 = vpop.permute.xlu0 %1425
      %1427 = vrot.lane.b32.xlu0 %v1350, 1
      %v1428 = vpop.permute.xlu0 %1427
      %1429 = vrot.lane.b32.xlu0 %v1215, 1
      %v1430 = vpop.permute.xlu0 %1429
      %1431 = vrot.lane.b32.xlu0 %v1351, 1
      %v1432 = vpop.permute.xlu0 %1431
      %1433 = vrot.lane.b32.xlu0 %v1216, 1
      %v1434 = vpop.permute.xlu0 %1433
      %1435 = vrot.lane.b32.xlu0 %v1352, 1
      %v1436 = vpop.permute.xlu0 %1435
      %1437 = vrot.lane.b32.xlu0 %v1217, 1
      %v1438 = vpop.permute.xlu0 %1437
      %1439 = vrot.lane.b32.xlu0 %v1353, 1
      %v1440 = vpop.permute.xlu0 %1439
      %1441 = vrot.lane.b32.xlu0 %v1218, 1
      %v1442 = vpop.permute.xlu0 %1441
      %1443 = vrot.lane.b32.xlu0 %v1354, 1
      %v1444 = vpop.permute.xlu0 %1443
      %1445 = vrot.lane.b32.xlu0 %v1219, 1
      %v1446 = vpop.permute.xlu0 %1445
      %1447 = vrot.lane.b32.xlu0 %v1355, 1
      %v1448 = vpop.permute.xlu0 %1447
      %1449 = vrot.lane.b32.xlu0 %v1220, 1
      %v1450 = vpop.permute.xlu0 %1449
      %1451 = vrot.lane.b32.xlu0 %v1356, 1
      %v1452 = vpop.permute.xlu0 %1451
      %vm1485 = vcmask 138248
      %1486 = vst.msk [vmem:[#allocation2 + $0x1] sm:$0xff] %vm1485, %v1390
      %1487 = vst.msk [vmem:[#allocation2 + $0x9] sm:$0xff] %vm1485, %v1392
      %1488 = vst.msk [vmem:[#allocation2 + $0x19] sm:$0xff] %vm1485, %v1394
      %1489 = vst.msk [vmem:[#allocation2 + $0x21] sm:$0xff] %vm1485, %v1396
      %1490 = vst.msk [vmem:[#allocation2 + $0x31] sm:$0xff] %vm1485, %v1398
      %1491 = vst.msk [vmem:[#allocation2 + $0x39] sm:$0xff] %vm1485, %v1400
      %1492 = vst.msk [vmem:[#allocation2 + $0x49] sm:$0xff] %vm1485, %v1402
      %1493 = vst.msk [vmem:[#allocation2 + $0x51] sm:$0xff] %vm1485, %v1404
      %1494 = vst.msk [vmem:[#allocation2 + $0x61] sm:$0xff] %vm1485, %v1406
      %1495 = vst.msk [vmem:[#allocation2 + $0x69] sm:$0xff] %vm1485, %v1408
      %1496 = vst.msk [vmem:[#allocation2 + $0x79] sm:$0xff] %vm1485, %v1410
      %1497 = vst.msk [vmem:[#allocation2 + $0x81] sm:$0xff] %vm1485, %v1412
      %1498 = vst.msk [vmem:[#allocation2 + $0x91] sm:$0xff] %vm1485, %v1414
      %1499 = vst.msk [vmem:[#allocation2 + $0x99] sm:$0xff] %vm1485, %v1416
      %1500 = vst.msk [vmem:[#allocation2 + $0xa9] sm:$0xff] %vm1485, %v1418
      %1501 = vst.msk [vmem:[#allocation2 + $0xb1] sm:$0xff] %vm1485, %v1420
      %1502 = vst.msk [vmem:[#allocation2 + $0xc1] sm:$0xff] %vm1485, %v1422
      %1503 = vst.msk [vmem:[#allocation2 + $0xc9] sm:$0xff] %vm1485, %v1424
      %1504 = vst.msk [vmem:[#allocation2 + $0xd9] sm:$0xff] %vm1485, %v1426
      %1505 = vst.msk [vmem:[#allocation2 + $0xe1] sm:$0xff] %vm1485, %v1428
      %1506 = vst.msk [vmem:[#allocation2 + $0xf1] sm:$0xff] %vm1485, %v1430
      %1507 = vst.msk [vmem:[#allocation2 + $0xf9] sm:$0xff] %vm1485, %v1432
      %1508 = vst.msk [vmem:[#allocation2 + $0x109] sm:$0xff] %vm1485, %v1434
      %1509 = vst.msk [vmem:[#allocation2 + $0x111] sm:$0xff] %vm1485, %v1436
      %1510 = vst.msk [vmem:[#allocation2 + $0x121] sm:$0xff] %vm1485, %v1438
      %1511 = vst.msk [vmem:[#allocation2 + $0x129] sm:$0xff] %vm1485, %v1440
      %1512 = vst.msk [vmem:[#allocation2 + $0x139] sm:$0xff] %vm1485, %v1442
      %1513 = vst.msk [vmem:[#allocation2 + $0x141] sm:$0xff] %vm1485, %v1444
      %1514 = vst.msk [vmem:[#allocation2 + $0x151] sm:$0xff] %vm1485, %v1446
      %1515 = vst.msk [vmem:[#allocation2 + $0x159] sm:$0xff] %vm1485, %v1448
      %1516 = vst.msk [vmem:[#allocation2 + $0x169] sm:$0xff] %vm1485, %v1450
      %1517 = vst.msk [vmem:[#allocation2 + $0x171] sm:$0xff] %vm1485, %v1452
      %v1518 = vld [vmem:[%s4] sm:$0xff]
      %v1519 = vld [vmem:[%s4 + $0x8] sm:$0xff]
      %v1520 = vld [vmem:[#allocation2] sm:$0xff]
      %v1521 = vld [vmem:[#allocation2 + $0x8] sm:$0xff]
      %v1522 = vld [vmem:[#allocation2 + $0x18] sm:$0xff]
      %v1523 = vld [vmem:[#allocation2 + $0x20] sm:$0xff]
      %v1524 = vld [vmem:[#allocation2 + $0x30] sm:$0xff]
      %v1525 = vld [vmem:[#allocation2 + $0x38] sm:$0xff]
      %v1526 = vld [vmem:[#allocation2 + $0x48] sm:$0xff]
      %v1527 = vld [vmem:[#allocation2 + $0x50] sm:$0xff]
      %v1528 = vld [vmem:[#allocation2 + $0x60] sm:$0xff]
      %v1529 = vld [vmem:[#allocation2 + $0x68] sm:$0xff]
      %v1530 = vld [vmem:[#allocation2 + $0x78] sm:$0xff]
      %v1531 = vld [vmem:[#allocation2 + $0x80] sm:$0xff]
      %v1532 = vld [vmem:[#allocation2 + $0x90] sm:$0xff]
      %v1533 = vld [vmem:[#allocation2 + $0x98] sm:$0xff]
      %v1534 = vld [vmem:[#allocation2 + $0xa8] sm:$0xff]
      %v1535 = vld [vmem:[#allocation2 + $0xb0] sm:$0xff]
      %v1536 = vld [vmem:[#allocation2 + $0xc0] sm:$0xff]
      %v1537 = vld [vmem:[#allocation2 + $0xc8] sm:$0xff]
      %v1538 = vld [vmem:[#allocation2 + $0xd8] sm:$0xff]
      %v1539 = vld [vmem:[#allocation2 + $0xe0] sm:$0xff]
      %v1540 = vld [vmem:[#allocation2 + $0xf0] sm:$0xff]
      %v1541 = vld [vmem:[#allocation2 + $0xf8] sm:$0xff]
      %v1542 = vld [vmem:[#allocation2 + $0x108] sm:$0xff]
      %v1543 = vld [vmem:[#allocation2 + $0x110] sm:$0xff]
      %v1544 = vld [vmem:[#allocation2 + $0x120] sm:$0xff]
      %v1545 = vld [vmem:[#allocation2 + $0x128] sm:$0xff]
      %v1546 = vld [vmem:[#allocation2 + $0x138] sm:$0xff]
      %v1547 = vld [vmem:[#allocation2 + $0x140] sm:$0xff]
      %v1548 = vld [vmem:[#allocation2 + $0x150] sm:$0xff]
      %v1549 = vld [vmem:[#allocation2 + $0x158] sm:$0xff]
      %v1550 = vld [vmem:[#allocation2 + $0x168] sm:$0xff]
      %v1551 = vld [vmem:[#allocation2 + $0x170] sm:$0xff]
      %v1554 = vcombine.high %v1518, %v1518
      %v1556 = vunpack.c.l.s4 1966171168
      %v1557 = vunpack.c.0.s8 %v1556
      %v1558 = vlaneseq
      %v1559 = vshrl.u32 %v1558, 7
      %v1560 = vsub.s32 %v1557, %v1559
      %v1561 = vrot.slane %v1518, %v1560
      %v1563 = vunpack.c.l.s4 1966171168
      %v1564 = vunpack.c.0.s8 %v1563
      %v1565 = vlaneseq
      %v1566 = vshrl.u32 %v1565, 7
      %v1567 = vsub.s32 %v1564, %v1566
      %v1568 = vrot.slane %v1554, %v1567
      %v1569 = vcombine.high %v1561, %v1561
      %v1570 = vcombine.high %v1568, %v1568
      %v1572 = vunpack.c.l.s4 1966171168
      %v1573 = vunpack.c.0.s8 %v1572
      %v1574 = vlaneseq
      %v1575 = vshrl.u32 %v1574, 7
      %v1576 = vsub.s32 %v1573, %v1575
      %v1577 = vrot.slane %v1561, %v1576
      %v1579 = vunpack.c.l.s4 1966171168
      %v1580 = vunpack.c.0.s8 %v1579
      %v1581 = vlaneseq
      %v1582 = vshrl.u32 %v1581, 7
      %v1583 = vsub.s32 %v1580, %v1582
      %v1584 = vrot.slane %v1568, %v1583
      %v1586 = vunpack.c.l.s4 1966171168
      %v1587 = vunpack.c.0.s8 %v1586
      %v1588 = vlaneseq
      %v1589 = vshrl.u32 %v1588, 7
      %v1590 = vsub.s32 %v1587, %v1589
      %v1591 = vrot.slane %v1569, %v1590
      %v1593 = vunpack.c.l.s4 1966171168
      %v1594 = vunpack.c.0.s8 %v1593
      %v1595 = vlaneseq
      %v1596 = vshrl.u32 %v1595, 7
      %v1597 = vsub.s32 %v1594, %v1596
      %v1598 = vrot.slane %v1570, %v1597
      %v1599 = vcombine.high %v1577, %v1577
      %v1600 = vcombine.high %v1584, %v1584
      %v1601 = vcombine.high %v1591, %v1591
      %v1602 = vcombine.high %v1598, %v1598
      %v1603 = vcombine.high %v1519, %v1519
      %v1605 = vunpack.c.l.s4 1966171168
      %v1606 = vunpack.c.0.s8 %v1605
      %v1607 = vlaneseq
      %v1608 = vshrl.u32 %v1607, 7
      %v1609 = vsub.s32 %v1606, %v1608
      %v1610 = vrot.slane %v1519, %v1609
      %v1612 = vunpack.c.l.s4 1966171168
      %v1613 = vunpack.c.0.s8 %v1612
      %v1614 = vlaneseq
      %v1615 = vshrl.u32 %v1614, 7
      %v1616 = vsub.s32 %v1613, %v1615
      %v1617 = vrot.slane %v1603, %v1616
      %v1618 = vcombine.high %v1610, %v1610
      %v1619 = vcombine.high %v1617, %v1617
      %v1621 = vunpack.c.l.s4 1966171168
      %v1622 = vunpack.c.0.s8 %v1621
      %v1623 = vlaneseq
      %v1624 = vshrl.u32 %v1623, 7
      %v1625 = vsub.s32 %v1622, %v1624
      %v1626 = vrot.slane %v1610, %v1625
      %v1628 = vunpack.c.l.s4 1966171168
      %v1629 = vunpack.c.0.s8 %v1628
      %v1630 = vlaneseq
      %v1631 = vshrl.u32 %v1630, 7
      %v1632 = vsub.s32 %v1629, %v1631
      %v1633 = vrot.slane %v1617, %v1632
      %v1635 = vunpack.c.l.s4 1966171168
      %v1636 = vunpack.c.0.s8 %v1635
      %v1637 = vlaneseq
      %v1638 = vshrl.u32 %v1637, 7
      %v1639 = vsub.s32 %v1636, %v1638
      %v1640 = vrot.slane %v1618, %v1639
      %v1642 = vunpack.c.l.s4 1966171168
      %v1643 = vunpack.c.0.s8 %v1642
      %v1644 = vlaneseq
      %v1645 = vshrl.u32 %v1644, 7
      %v1646 = vsub.s32 %v1643, %v1645
      %v1647 = vrot.slane %v1619, %v1646
      %v1648 = vcombine.high %v1626, %v1626
      %v1649 = vcombine.high %v1633, %v1633
      %v1650 = vcombine.high %v1640, %v1640
      %v1651 = vcombine.high %v1647, %v1647
      %v1652 = vlaneseq
      %v1653 = vshrl.u32 %v1652, 7
      %v1654 = vsub.s32 0, %v1653
      %v1655 = vrot.slane %v1577, %v1654
      %v1656 = vlaneseq
      %v1657 = vshrl.u32 %v1656, 7
      %v1658 = vsub.s32 0, %v1657
      %v1659 = vrot.slane %v1591, %v1658
      %v1660 = vlaneseq
      %v1661 = vshrl.u32 %v1660, 7
      %v1662 = vsub.s32 0, %v1661
      %v1663 = vrot.slane %v1599, %v1662
      %v1664 = vlaneseq
      %v1665 = vshrl.u32 %v1664, 7
      %v1666 = vsub.s32 0, %v1665
      %v1667 = vrot.slane %v1601, %v1666
      %v1668 = vlaneseq
      %v1669 = vshrl.u32 %v1668, 7
      %v1670 = vsub.s32 0, %v1669
      %v1671 = vrot.slane %v1584, %v1670
      %v1672 = vlaneseq
      %v1673 = vshrl.u32 %v1672, 7
      %v1674 = vsub.s32 0, %v1673
      %v1675 = vrot.slane %v1598, %v1674
      %v1676 = vlaneseq
      %v1677 = vshrl.u32 %v1676, 7
      %v1678 = vsub.s32 0, %v1677
      %v1679 = vrot.slane %v1600, %v1678
      %v1680 = vlaneseq
      %v1681 = vshrl.u32 %v1680, 7
      %v1682 = vsub.s32 0, %v1681
      %v1683 = vrot.slane %v1602, %v1682
      %v1684 = vlaneseq
      %v1685 = vshrl.u32 %v1684, 7
      %v1686 = vsub.s32 0, %v1685
      %v1687 = vrot.slane %v1626, %v1686
      %v1688 = vlaneseq
      %v1689 = vshrl.u32 %v1688, 7
      %v1690 = vsub.s32 0, %v1689
      %v1691 = vrot.slane %v1640, %v1690
      %v1692 = vlaneseq
      %v1693 = vshrl.u32 %v1692, 7
      %v1694 = vsub.s32 0, %v1693
      %v1695 = vrot.slane %v1648, %v1694
      %v1696 = vlaneseq
      %v1697 = vshrl.u32 %v1696, 7
      %v1698 = vsub.s32 0, %v1697
      %v1699 = vrot.slane %v1650, %v1698
      %v1700 = vlaneseq
      %v1701 = vshrl.u32 %v1700, 7
      %v1702 = vsub.s32 0, %v1701
      %v1703 = vrot.slane %v1633, %v1702
      %v1704 = vlaneseq
      %v1705 = vshrl.u32 %v1704, 7
      %v1706 = vsub.s32 0, %v1705
      %v1707 = vrot.slane %v1647, %v1706
      %v1708 = vlaneseq
      %v1709 = vshrl.u32 %v1708, 7
      %v1710 = vsub.s32 0, %v1709
      %v1711 = vrot.slane %v1649, %v1710
      %v1712 = vlaneseq
      %v1713 = vshrl.u32 %v1712, 7
      %v1714 = vsub.s32 0, %v1713
      %v1715 = vrot.slane %v1651, %v1714
      %1716 = vset.pattern.permute.xlu0 0
      %1717 = vperm.xlu0 %1716, %v1655
      %v1718 = vpop.permute.xlu0 %1717
      %1720 = vset.pattern.permute.xlu0 0
      %1721 = vperm.xlu0 %1720, %v1659
      %v1722 = vpop.permute.xlu0 %1721
      %1724 = vset.pattern.permute.xlu0 0
      %1725 = vperm.xlu0 %1724, %v1663
      %v1726 = vpop.permute.xlu0 %1725
      %1728 = vset.pattern.permute.xlu0 0
      %1729 = vperm.xlu0 %1728, %v1667
      %v1730 = vpop.permute.xlu0 %1729
      %1732 = vset.pattern.permute.xlu0 0
      %1733 = vperm.xlu0 %1732, %v1671
      %v1734 = vpop.permute.xlu0 %1733
      %1736 = vset.pattern.permute.xlu0 0
      %1737 = vperm.xlu0 %1736, %v1675
      %v1738 = vpop.permute.xlu0 %1737
      %1740 = vset.pattern.permute.xlu0 0
      %1741 = vperm.xlu0 %1740, %v1679
      %v1742 = vpop.permute.xlu0 %1741
      %1744 = vset.pattern.permute.xlu0 0
      %1745 = vperm.xlu0 %1744, %v1683
      %v1746 = vpop.permute.xlu0 %1745
      %1748 = vset.pattern.permute.xlu0 0
      %1749 = vperm.xlu0 %1748, %v1687
      %v1750 = vpop.permute.xlu0 %1749
      %1752 = vset.pattern.permute.xlu0 0
      %1753 = vperm.xlu0 %1752, %v1691
      %v1754 = vpop.permute.xlu0 %1753
      %1756 = vset.pattern.permute.xlu0 0
      %1757 = vperm.xlu0 %1756, %v1695
      %v1758 = vpop.permute.xlu0 %1757
      %1760 = vset.pattern.permute.xlu0 0
      %1761 = vperm.xlu0 %1760, %v1699
      %v1762 = vpop.permute.xlu0 %1761
      %1764 = vset.pattern.permute.xlu0 0
      %1765 = vperm.xlu0 %1764, %v1703
      %v1766 = vpop.permute.xlu0 %1765
      %1768 = vset.pattern.permute.xlu0 0
      %1769 = vperm.xlu0 %1768, %v1707
      %v1770 = vpop.permute.xlu0 %1769
      %1772 = vset.pattern.permute.xlu0 0
      %1773 = vperm.xlu0 %1772, %v1711
      %v1774 = vpop.permute.xlu0 %1773
      %1776 = vset.pattern.permute.xlu0 0
      %1777 = vperm.xlu0 %1776, %v1715
      %v1778 = vpop.permute.xlu0 %1777
      %v1780 = vmul.f32 %v1520, %v1718
      %v1781 = vmul.f32 %v1521, %v1718
      %v1782 = vmul.f32 %v1522, %v1722
      %v1783 = vmul.f32 %v1523, %v1722
      %v1784 = vmul.f32 %v1524, %v1726
      %v1785 = vmul.f32 %v1525, %v1726
      %v1786 = vmul.f32 %v1526, %v1730
      %v1787 = vmul.f32 %v1527, %v1730
      %v1788 = vmul.f32 %v1528, %v1734
      %v1789 = vmul.f32 %v1529, %v1734
      %v1790 = vmul.f32 %v1530, %v1738
      %v1791 = vmul.f32 %v1531, %v1738
      %v1792 = vmul.f32 %v1532, %v1742
      %v1793 = vmul.f32 %v1533, %v1742
      %v1794 = vmul.f32 %v1534, %v1746
      %v1795 = vmul.f32 %v1535, %v1746
      %v1796 = vmul.f32 %v1536, %v1750
      %v1797 = vmul.f32 %v1537, %v1750
      %v1798 = vmul.f32 %v1538, %v1754
      %v1799 = vmul.f32 %v1539, %v1754
      %v1800 = vmul.f32 %v1540, %v1758
      %v1801 = vmul.f32 %v1541, %v1758
      %v1802 = vmul.f32 %v1542, %v1762
      %v1803 = vmul.f32 %v1543, %v1762
      %v1804 = vmul.f32 %v1544, %v1766
      %v1805 = vmul.f32 %v1545, %v1766
      %v1806 = vmul.f32 %v1546, %v1770
      %v1807 = vmul.f32 %v1547, %v1770
      %v1808 = vmul.f32 %v1548, %v1774
      %v1809 = vmul.f32 %v1549, %v1774
      %v1810 = vmul.f32 %v1550, %v1778
      %v1811 = vmul.f32 %v1551, %v1778
      %v1812 = vadd.f32 %v1780, 0.0
      %v1813 = vadd.f32 %v1781, 0.0
      %v1814 = vadd.f32 %v1782, 0.0
      %v1815 = vadd.f32 %v1783, 0.0
      %v1816 = vadd.f32 %v1784, 0.0
      %v1817 = vadd.f32 %v1785, 0.0
      %v1818 = vadd.f32 %v1786, 0.0
      %v1819 = vadd.f32 %v1787, 0.0
      %v1820 = vadd.f32 %v1788, 0.0
      %v1821 = vadd.f32 %v1789, 0.0
      %v1822 = vadd.f32 %v1790, 0.0
      %v1823 = vadd.f32 %v1791, 0.0
      %v1824 = vadd.f32 %v1792, 0.0
      %v1825 = vadd.f32 %v1793, 0.0
      %v1826 = vadd.f32 %v1794, 0.0
      %v1827 = vadd.f32 %v1795, 0.0
      %v1828 = vadd.f32 %v1796, 0.0
      %v1829 = vadd.f32 %v1797, 0.0
      %v1830 = vadd.f32 %v1798, 0.0
      %v1831 = vadd.f32 %v1799, 0.0
      %v1832 = vadd.f32 %v1800, 0.0
      %v1833 = vadd.f32 %v1801, 0.0
      %v1834 = vadd.f32 %v1802, 0.0
      %v1835 = vadd.f32 %v1803, 0.0
      %v1836 = vadd.f32 %v1804, 0.0
      %v1837 = vadd.f32 %v1805, 0.0
      %v1838 = vadd.f32 %v1806, 0.0
      %v1839 = vadd.f32 %v1807, 0.0
      %v1840 = vadd.f32 %v1808, 0.0
      %v1841 = vadd.f32 %v1809, 0.0
      %v1842 = vadd.f32 %v1810, 0.0
      %v1843 = vadd.f32 %v1811, 0.0
      %v1844 = vld [vmem:[#allocation2] sm:$0xff]
      %v1845 = vld [vmem:[#allocation2 + $0x8] sm:$0xff]
      %v1846 = vld [vmem:[#allocation2 + $0x18] sm:$0xff]
      %v1847 = vld [vmem:[#allocation2 + $0x20] sm:$0xff]
      %v1848 = vld [vmem:[#allocation2 + $0x30] sm:$0xff]
      %v1849 = vld [vmem:[#allocation2 + $0x38] sm:$0xff]
      %v1850 = vld [vmem:[#allocation2 + $0x48] sm:$0xff]
      %v1851 = vld [vmem:[#allocation2 + $0x50] sm:$0xff]
      %v1852 = vld [vmem:[#allocation2 + $0x60] sm:$0xff]
      %v1853 = vld [vmem:[#allocation2 + $0x68] sm:$0xff]
      %v1854 = vld [vmem:[#allocation2 + $0x78] sm:$0xff]
      %v1855 = vld [vmem:[#allocation2 + $0x80] sm:$0xff]
      %v1856 = vld [vmem:[#allocation2 + $0x90] sm:$0xff]
      %v1857 = vld [vmem:[#allocation2 + $0x98] sm:$0xff]
      %v1858 = vld [vmem:[#allocation2 + $0xa8] sm:$0xff]
      %v1859 = vld [vmem:[#allocation2 + $0xb0] sm:$0xff]
      %v1860 = vld [vmem:[#allocation2 + $0xc0] sm:$0xff]
      %v1861 = vld [vmem:[#allocation2 + $0xc8] sm:$0xff]
      %v1862 = vld [vmem:[#allocation2 + $0xd8] sm:$0xff]
      %v1863 = vld [vmem:[#allocation2 + $0xe0] sm:$0xff]
      %v1864 = vld [vmem:[#allocation2 + $0xf0] sm:$0xff]
      %v1865 = vld [vmem:[#allocation2 + $0xf8] sm:$0xff]
      %v1866 = vld [vmem:[#allocation2 + $0x108] sm:$0xff]
      %v1867 = vld [vmem:[#allocation2 + $0x110] sm:$0xff]
      %v1868 = vld [vmem:[#allocation2 + $0x120] sm:$0xff]
      %v1869 = vld [vmem:[#allocation2 + $0x128] sm:$0xff]
      %v1870 = vld [vmem:[#allocation2 + $0x138] sm:$0xff]
      %v1871 = vld [vmem:[#allocation2 + $0x140] sm:$0xff]
      %v1872 = vld [vmem:[#allocation2 + $0x150] sm:$0xff]
      %v1873 = vld [vmem:[#allocation2 + $0x158] sm:$0xff]
      %v1874 = vld [vmem:[#allocation2 + $0x168] sm:$0xff]
      %v1875 = vld [vmem:[#allocation2 + $0x170] sm:$0xff]
      %1876 = vset.pattern.permute.xlu0 1
      %1877 = vperm.xlu0 %1876, %v1655
      %v1878 = vpop.permute.xlu0 %1877
      %1880 = vset.pattern.permute.xlu0 1
      %1881 = vperm.xlu0 %1880, %v1659
      %v1882 = vpop.permute.xlu0 %1881
      %1884 = vset.pattern.permute.xlu0 1
      %1885 = vperm.xlu0 %1884, %v1663
      %v1886 = vpop.permute.xlu0 %1885
      %1888 = vset.pattern.permute.xlu0 1
      %1889 = vperm.xlu0 %1888, %v1667
      %v1890 = vpop.permute.xlu0 %1889
      %1892 = vset.pattern.permute.xlu0 1
      %1893 = vperm.xlu0 %1892, %v1671
      %v1894 = vpop.permute.xlu0 %1893
      %1896 = vset.pattern.permute.xlu0 1
      %1897 = vperm.xlu0 %1896, %v1675
      %v1898 = vpop.permute.xlu0 %1897
      %1900 = vset.pattern.permute.xlu0 1
      %1901 = vperm.xlu0 %1900, %v1679
      %v1902 = vpop.permute.xlu0 %1901
      %1904 = vset.pattern.permute.xlu0 1
      %1905 = vperm.xlu0 %1904, %v1683
      %v1906 = vpop.permute.xlu0 %1905
      %1908 = vset.pattern.permute.xlu0 1
      %1909 = vperm.xlu0 %1908, %v1687
      %v1910 = vpop.permute.xlu0 %1909
      %1912 = vset.pattern.permute.xlu0 1
      %1913 = vperm.xlu0 %1912, %v1691
      %v1914 = vpop.permute.xlu0 %1913
      %1916 = vset.pattern.permute.xlu0 1
      %1917 = vperm.xlu0 %1916, %v1695
      %v1918 = vpop.permute.xlu0 %1917
      %1920 = vset.pattern.permute.xlu0 1
      %1921 = vperm.xlu0 %1920, %v1699
      %v1922 = vpop.permute.xlu0 %1921
      %1924 = vset.pattern.permute.xlu0 1
      %1925 = vperm.xlu0 %1924, %v1703
      %v1926 = vpop.permute.xlu0 %1925
      %1928 = vset.pattern.permute.xlu0 1
      %1929 = vperm.xlu0 %1928, %v1707
      %v1930 = vpop.permute.xlu0 %1929
      %1932 = vset.pattern.permute.xlu0 1
      %1933 = vperm.xlu0 %1932, %v1711
      %v1934 = vpop.permute.xlu0 %1933
      %1936 = vset.pattern.permute.xlu0 1
      %1937 = vperm.xlu0 %1936, %v1715
      %v1938 = vpop.permute.xlu0 %1937
      %v1940 = vmul.f32 %v1844, %v1878
      %v1941 = vmul.f32 %v1845, %v1878
      %v1942 = vmul.f32 %v1846, %v1882
      %v1943 = vmul.f32 %v1847, %v1882
      %v1944 = vmul.f32 %v1848, %v1886
      %v1945 = vmul.f32 %v1849, %v1886
      %v1946 = vmul.f32 %v1850, %v1890
      %v1947 = vmul.f32 %v1851, %v1890
      %v1948 = vmul.f32 %v1852, %v1894
      %v1949 = vmul.f32 %v1853, %v1894
      %v1950 = vmul.f32 %v1854, %v1898
      %v1951 = vmul.f32 %v1855, %v1898
      %v1952 = vmul.f32 %v1856, %v1902
      %v1953 = vmul.f32 %v1857, %v1902
      %v1954 = vmul.f32 %v1858, %v1906
      %v1955 = vmul.f32 %v1859, %v1906
      %v1956 = vmul.f32 %v1860, %v1910
      %v1957 = vmul.f32 %v1861, %v1910
      %v1958 = vmul.f32 %v1862, %v1914
      %v1959 = vmul.f32 %v1863, %v1914
      %v1960 = vmul.f32 %v1864, %v1918
      %v1961 = vmul.f32 %v1865, %v1918
      %v1962 = vmul.f32 %v1866, %v1922
      %v1963 = vmul.f32 %v1867, %v1922
      %v1964 = vmul.f32 %v1868, %v1926
      %v1965 = vmul.f32 %v1869, %v1926
      %v1966 = vmul.f32 %v1870, %v1930
      %v1967 = vmul.f32 %v1871, %v1930
      %v1968 = vmul.f32 %v1872, %v1934
      %v1969 = vmul.f32 %v1873, %v1934
      %v1970 = vmul.f32 %v1874, %v1938
      %v1971 = vmul.f32 %v1875, %v1938
      %2004 = vrot.lane.b32.xlu0 %v1940, 127
      %v2005 = vpop.permute.xlu0 %2004
      %2006 = vrot.lane.b32.xlu0 %v1941, 127
      %v2007 = vpop.permute.xlu0 %2006
      %2008 = vrot.lane.b32.xlu0 %v1942, 127
      %v2009 = vpop.permute.xlu0 %2008
      %2010 = vrot.lane.b32.xlu0 %v1943, 127
      %v2011 = vpop.permute.xlu0 %2010
      %2012 = vrot.lane.b32.xlu0 %v1944, 127
      %v2013 = vpop.permute.xlu0 %2012
      %2014 = vrot.lane.b32.xlu0 %v1945, 127
      %v2015 = vpop.permute.xlu0 %2014
      %2016 = vrot.lane.b32.xlu0 %v1946, 127
      %v2017 = vpop.permute.xlu0 %2016
      %2018 = vrot.lane.b32.xlu0 %v1947, 127
      %v2019 = vpop.permute.xlu0 %2018
      %2020 = vrot.lane.b32.xlu0 %v1948, 127
      %v2021 = vpop.permute.xlu0 %2020
      %2022 = vrot.lane.b32.xlu0 %v1949, 127
      %v2023 = vpop.permute.xlu0 %2022
      %2024 = vrot.lane.b32.xlu0 %v1950, 127
      %v2025 = vpop.permute.xlu0 %2024
      %2026 = vrot.lane.b32.xlu0 %v1951, 127
      %v2027 = vpop.permute.xlu0 %2026
      %2028 = vrot.lane.b32.xlu0 %v1952, 127
      %v2029 = vpop.permute.xlu0 %2028
      %2030 = vrot.lane.b32.xlu0 %v1953, 127
      %v2031 = vpop.permute.xlu0 %2030
      %2032 = vrot.lane.b32.xlu0 %v1954, 127
      %v2033 = vpop.permute.xlu0 %2032
      %2034 = vrot.lane.b32.xlu0 %v1955, 127
      %v2035 = vpop.permute.xlu0 %2034
      %2036 = vrot.lane.b32.xlu0 %v1956, 127
      %v2037 = vpop.permute.xlu0 %2036
      %2038 = vrot.lane.b32.xlu0 %v1957, 127
      %v2039 = vpop.permute.xlu0 %2038
      %2040 = vrot.lane.b32.xlu0 %v1958, 127
      %v2041 = vpop.permute.xlu0 %2040
      %2042 = vrot.lane.b32.xlu0 %v1959, 127
      %v2043 = vpop.permute.xlu0 %2042
      %2044 = vrot.lane.b32.xlu0 %v1960, 127
      %v2045 = vpop.permute.xlu0 %2044
      %2046 = vrot.lane.b32.xlu0 %v1961, 127
      %v2047 = vpop.permute.xlu0 %2046
      %2048 = vrot.lane.b32.xlu0 %v1962, 127
      %v2049 = vpop.permute.xlu0 %2048
      %2050 = vrot.lane.b32.xlu0 %v1963, 127
      %v2051 = vpop.permute.xlu0 %2050
      %2052 = vrot.lane.b32.xlu0 %v1964, 127
      %v2053 = vpop.permute.xlu0 %2052
      %2054 = vrot.lane.b32.xlu0 %v1965, 127
      %v2055 = vpop.permute.xlu0 %2054
      %2056 = vrot.lane.b32.xlu0 %v1966, 127
      %v2057 = vpop.permute.xlu0 %2056
      %2058 = vrot.lane.b32.xlu0 %v1967, 127
      %v2059 = vpop.permute.xlu0 %2058
      %2060 = vrot.lane.b32.xlu0 %v1968, 127
      %v2061 = vpop.permute.xlu0 %2060
      %2062 = vrot.lane.b32.xlu0 %v1969, 127
      %v2063 = vpop.permute.xlu0 %2062
      %2064 = vrot.lane.b32.xlu0 %v1970, 127
      %v2065 = vpop.permute.xlu0 %2064
      %2066 = vrot.lane.b32.xlu0 %v1971, 127
      %v2067 = vpop.permute.xlu0 %2066
      %v2100 = vadd.f32 %v1812, %v2005
      %v2101 = vadd.f32 %v1813, %v2007
      %v2102 = vadd.f32 %v1814, %v2009
      %v2103 = vadd.f32 %v1815, %v2011
      %v2104 = vadd.f32 %v1816, %v2013
      %v2105 = vadd.f32 %v1817, %v2015
      %v2106 = vadd.f32 %v1818, %v2017
      %v2107 = vadd.f32 %v1819, %v2019
      %v2108 = vadd.f32 %v1820, %v2021
      %v2109 = vadd.f32 %v1821, %v2023
      %v2110 = vadd.f32 %v1822, %v2025
      %v2111 = vadd.f32 %v1823, %v2027
      %v2112 = vadd.f32 %v1824, %v2029
      %v2113 = vadd.f32 %v1825, %v2031
      %v2114 = vadd.f32 %v1826, %v2033
      %v2115 = vadd.f32 %v1827, %v2035
      %v2116 = vadd.f32 %v1828, %v2037
      %v2117 = vadd.f32 %v1829, %v2039
      %v2118 = vadd.f32 %v1830, %v2041
      %v2119 = vadd.f32 %v1831, %v2043
      %v2120 = vadd.f32 %v1832, %v2045
      %v2121 = vadd.f32 %v1833, %v2047
      %v2122 = vadd.f32 %v1834, %v2049
      %v2123 = vadd.f32 %v1835, %v2051
      %v2124 = vadd.f32 %v1836, %v2053
      %v2125 = vadd.f32 %v1837, %v2055
      %v2126 = vadd.f32 %v1838, %v2057
      %v2127 = vadd.f32 %v1839, %v2059
      %v2128 = vadd.f32 %v1840, %v2061
      %v2129 = vadd.f32 %v1841, %v2063
      %v2130 = vadd.f32 %v1842, %v2065
      %v2131 = vadd.f32 %v1843, %v2067
      %v2132 = vld [vmem:[#allocation2] sm:$0xff]
      %v2133 = vld [vmem:[#allocation2 + $0x8] sm:$0xff]
      %v2134 = vld [vmem:[#allocation2 + $0x18] sm:$0xff]
      %v2135 = vld [vmem:[#allocation2 + $0x20] sm:$0xff]
      %v2136 = vld [vmem:[#allocation2 + $0x30] sm:$0xff]
      %v2137 = vld [vmem:[#allocation2 + $0x38] sm:$0xff]
      %v2138 = vld [vmem:[#allocation2 + $0x48] sm:$0xff]
      %v2139 = vld [vmem:[#allocation2 + $0x50] sm:$0xff]
      %v2140 = vld [vmem:[#allocation2 + $0x60] sm:$0xff]
      %v2141 = vld [vmem:[#allocation2 + $0x68] sm:$0xff]
      %v2142 = vld [vmem:[#allocation2 + $0x78] sm:$0xff]
      %v2143 = vld [vmem:[#allocation2 + $0x80] sm:$0xff]
      %v2144 = vld [vmem:[#allocation2 + $0x90] sm:$0xff]
      %v2145 = vld [vmem:[#allocation2 + $0x98] sm:$0xff]
      %v2146 = vld [vmem:[#allocation2 + $0xa8] sm:$0xff]
      %v2147 = vld [vmem:[#allocation2 + $0xb0] sm:$0xff]
      %v2148 = vld [vmem:[#allocation2 + $0xc0] sm:$0xff]
      %v2149 = vld [vmem:[#allocation2 + $0xc8] sm:$0xff]
      %v2150 = vld [vmem:[#allocation2 + $0xd8] sm:$0xff]
      %v2151 = vld [vmem:[#allocation2 + $0xe0] sm:$0xff]
      %v2152 = vld [vmem:[#allocation2 + $0xf0] sm:$0xff]
      %v2153 = vld [vmem:[#allocation2 + $0xf8] sm:$0xff]
      %v2154 = vld [vmem:[#allocation2 + $0x108] sm:$0xff]
      %v2155 = vld [vmem:[#allocation2 + $0x110] sm:$0xff]
      %v2156 = vld [vmem:[#allocation2 + $0x120] sm:$0xff]
      %v2157 = vld [vmem:[#allocation2 + $0x128] sm:$0xff]
      %v2158 = vld [vmem:[#allocation2 + $0x138] sm:$0xff]
      %v2159 = vld [vmem:[#allocation2 + $0x140] sm:$0xff]
      %v2160 = vld [vmem:[#allocation2 + $0x150] sm:$0xff]
      %v2161 = vld [vmem:[#allocation2 + $0x158] sm:$0xff]
      %v2162 = vld [vmem:[#allocation2 + $0x168] sm:$0xff]
      %v2163 = vld [vmem:[#allocation2 + $0x170] sm:$0xff]
      %2164 = vset.pattern.permute.xlu0 2
      %2165 = vperm.xlu0 %2164, %v1655
      %v2166 = vpop.permute.xlu0 %2165
      %2168 = vset.pattern.permute.xlu0 2
      %2169 = vperm.xlu0 %2168, %v1659
      %v2170 = vpop.permute.xlu0 %2169
      %2172 = vset.pattern.permute.xlu0 2
      %2173 = vperm.xlu0 %2172, %v1663
      %v2174 = vpop.permute.xlu0 %2173
      %2176 = vset.pattern.permute.xlu0 2
      %2177 = vperm.xlu0 %2176, %v1667
      %v2178 = vpop.permute.xlu0 %2177
      %2180 = vset.pattern.permute.xlu0 2
      %2181 = vperm.xlu0 %2180, %v1671
      %v2182 = vpop.permute.xlu0 %2181
      %2184 = vset.pattern.permute.xlu0 2
      %2185 = vperm.xlu0 %2184, %v1675
      %v2186 = vpop.permute.xlu0 %2185
      %2188 = vset.pattern.permute.xlu0 2
      %2189 = vperm.xlu0 %2188, %v1679
      %v2190 = vpop.permute.xlu0 %2189
      %2192 = vset.pattern.permute.xlu0 2
      %2193 = vperm.xlu0 %2192, %v1683
      %v2194 = vpop.permute.xlu0 %2193
      %2196 = vset.pattern.permute.xlu0 2
      %2197 = vperm.xlu0 %2196, %v1687
      %v2198 = vpop.permute.xlu0 %2197
      %2200 = vset.pattern.permute.xlu0 2
      %2201 = vperm.xlu0 %2200, %v1691
      %v2202 = vpop.permute.xlu0 %2201
      %2204 = vset.pattern.permute.xlu0 2
      %2205 = vperm.xlu0 %2204, %v1695
      %v2206 = vpop.permute.xlu0 %2205
      %2208 = vset.pattern.permute.xlu0 2
      %2209 = vperm.xlu0 %2208, %v1699
      %v2210 = vpop.permute.xlu0 %2209
      %2212 = vset.pattern.permute.xlu0 2
      %2213 = vperm.xlu0 %2212, %v1703
      %v2214 = vpop.permute.xlu0 %2213
      %2216 = vset.pattern.permute.xlu0 2
      %2217 = vperm.xlu0 %2216, %v1707
      %v2218 = vpop.permute.xlu0 %2217
      %2220 = vset.pattern.permute.xlu0 2
      %2221 = vperm.xlu0 %2220, %v1711
      %v2222 = vpop.permute.xlu0 %2221
      %2224 = vset.pattern.permute.xlu0 2
      %2225 = vperm.xlu0 %2224, %v1715
      %v2226 = vpop.permute.xlu0 %2225
      %v2228 = vmul.f32 %v2132, %v2166
      %v2229 = vmul.f32 %v2133, %v2166
      %v2230 = vmul.f32 %v2134, %v2170
      %v2231 = vmul.f32 %v2135, %v2170
      %v2232 = vmul.f32 %v2136, %v2174
      %v2233 = vmul.f32 %v2137, %v2174
      %v2234 = vmul.f32 %v2138, %v2178
      %v2235 = vmul.f32 %v2139, %v2178
      %v2236 = vmul.f32 %v2140, %v2182
      %v2237 = vmul.f32 %v2141, %v2182
      %v2238 = vmul.f32 %v2142, %v2186
      %v2239 = vmul.f32 %v2143, %v2186
      %v2240 = vmul.f32 %v2144, %v2190
      %v2241 = vmul.f32 %v2145, %v2190
      %v2242 = vmul.f32 %v2146, %v2194
      %v2243 = vmul.f32 %v2147, %v2194
      %v2244 = vmul.f32 %v2148, %v2198
      %v2245 = vmul.f32 %v2149, %v2198
      %v2246 = vmul.f32 %v2150, %v2202
      %v2247 = vmul.f32 %v2151, %v2202
      %v2248 = vmul.f32 %v2152, %v2206
      %v2249 = vmul.f32 %v2153, %v2206
      %v2250 = vmul.f32 %v2154, %v2210
      %v2251 = vmul.f32 %v2155, %v2210
      %v2252 = vmul.f32 %v2156, %v2214
      %v2253 = vmul.f32 %v2157, %v2214
      %v2254 = vmul.f32 %v2158, %v2218
      %v2255 = vmul.f32 %v2159, %v2218
      %v2256 = vmul.f32 %v2160, %v2222
      %v2257 = vmul.f32 %v2161, %v2222
      %v2258 = vmul.f32 %v2162, %v2226
      %v2259 = vmul.f32 %v2163, %v2226
      %2292 = vrot.lane.b32.xlu0 %v2228, 126
      %v2293 = vpop.permute.xlu0 %2292
      %2294 = vrot.lane.b32.xlu0 %v2229, 126
      %v2295 = vpop.permute.xlu0 %2294
      %2296 = vrot.lane.b32.xlu0 %v2230, 126
      %v2297 = vpop.permute.xlu0 %2296
      %2298 = vrot.lane.b32.xlu0 %v2231, 126
      %v2299 = vpop.permute.xlu0 %2298
      %2300 = vrot.lane.b32.xlu0 %v2232, 126
      %v2301 = vpop.permute.xlu0 %2300
      %2302 = vrot.lane.b32.xlu0 %v2233, 126
      %v2303 = vpop.permute.xlu0 %2302
      %2304 = vrot.lane.b32.xlu0 %v2234, 126
      %v2305 = vpop.permute.xlu0 %2304
      %2306 = vrot.lane.b32.xlu0 %v2235, 126
      %v2307 = vpop.permute.xlu0 %2306
      %2308 = vrot.lane.b32.xlu0 %v2236, 126
      %v2309 = vpop.permute.xlu0 %2308
      %2310 = vrot.lane.b32.xlu0 %v2237, 126
      %v2311 = vpop.permute.xlu0 %2310
      %2312 = vrot.lane.b32.xlu0 %v2238, 126
      %v2313 = vpop.permute.xlu0 %2312
      %2314 = vrot.lane.b32.xlu0 %v2239, 126
      %v2315 = vpop.permute.xlu0 %2314
      %2316 = vrot.lane.b32.xlu0 %v2240, 126
      %v2317 = vpop.permute.xlu0 %2316
      %2318 = vrot.lane.b32.xlu0 %v2241, 126
      %v2319 = vpop.permute.xlu0 %2318
      %2320 = vrot.lane.b32.xlu0 %v2242, 126
      %v2321 = vpop.permute.xlu0 %2320
      %2322 = vrot.lane.b32.xlu0 %v2243, 126
      %v2323 = vpop.permute.xlu0 %2322
      %2324 = vrot.lane.b32.xlu0 %v2244, 126
      %v2325 = vpop.permute.xlu0 %2324
      %2326 = vrot.lane.b32.xlu0 %v2245, 126
      %v2327 = vpop.permute.xlu0 %2326
      %2328 = vrot.lane.b32.xlu0 %v2246, 126
      %v2329 = vpop.permute.xlu0 %2328
      %2330 = vrot.lane.b32.xlu0 %v2247, 126
      %v2331 = vpop.permute.xlu0 %2330
      %2332 = vrot.lane.b32.xlu0 %v2248, 126
      %v2333 = vpop.permute.xlu0 %2332
      %2334 = vrot.lane.b32.xlu0 %v2249, 126
      %v2335 = vpop.permute.xlu0 %2334
      %2336 = vrot.lane.b32.xlu0 %v2250, 126
      %v2337 = vpop.permute.xlu0 %2336
      %2338 = vrot.lane.b32.xlu0 %v2251, 126
      %v2339 = vpop.permute.xlu0 %2338
      %2340 = vrot.lane.b32.xlu0 %v2252, 126
      %v2341 = vpop.permute.xlu0 %2340
      %2342 = vrot.lane.b32.xlu0 %v2253, 126
      %v2343 = vpop.permute.xlu0 %2342
      %2344 = vrot.lane.b32.xlu0 %v2254, 126
      %v2345 = vpop.permute.xlu0 %2344
      %2346 = vrot.lane.b32.xlu0 %v2255, 126
      %v2347 = vpop.permute.xlu0 %2346
      %2348 = vrot.lane.b32.xlu0 %v2256, 126
      %v2349 = vpop.permute.xlu0 %2348
      %2350 = vrot.lane.b32.xlu0 %v2257, 126
      %v2351 = vpop.permute.xlu0 %2350
      %2352 = vrot.lane.b32.xlu0 %v2258, 126
      %v2353 = vpop.permute.xlu0 %2352
      %2354 = vrot.lane.b32.xlu0 %v2259, 126
      %v2355 = vpop.permute.xlu0 %2354
      %v2388 = vadd.f32 %v2100, %v2293
      %v2389 = vadd.f32 %v2101, %v2295
      %v2390 = vadd.f32 %v2102, %v2297
      %v2391 = vadd.f32 %v2103, %v2299
      %v2392 = vadd.f32 %v2104, %v2301
      %v2393 = vadd.f32 %v2105, %v2303
      %v2394 = vadd.f32 %v2106, %v2305
      %v2395 = vadd.f32 %v2107, %v2307
      %v2396 = vadd.f32 %v2108, %v2309
      %v2397 = vadd.f32 %v2109, %v2311
      %v2398 = vadd.f32 %v2110, %v2313
      %v2399 = vadd.f32 %v2111, %v2315
      %v2400 = vadd.f32 %v2112, %v2317
      %v2401 = vadd.f32 %v2113, %v2319
      %v2402 = vadd.f32 %v2114, %v2321
      %v2403 = vadd.f32 %v2115, %v2323
      %v2404 = vadd.f32 %v2116, %v2325
      %v2405 = vadd.f32 %v2117, %v2327
      %v2406 = vadd.f32 %v2118, %v2329
      %v2407 = vadd.f32 %v2119, %v2331
      %v2408 = vadd.f32 %v2120, %v2333
      %v2409 = vadd.f32 %v2121, %v2335
      %v2410 = vadd.f32 %v2122, %v2337
      %v2411 = vadd.f32 %v2123, %v2339
      %v2412 = vadd.f32 %v2124, %v2341
      %v2413 = vadd.f32 %v2125, %v2343
      %v2414 = vadd.f32 %v2126, %v2345
      %v2415 = vadd.f32 %v2127, %v2347
      %v2416 = vadd.f32 %v2128, %v2349
      %v2417 = vadd.f32 %v2129, %v2351
      %v2418 = vadd.f32 %v2130, %v2353
      %v2419 = vadd.f32 %v2131, %v2355
      %v2420 = vld [vmem:[#allocation2 + $0x1] sm:$0xff]
      %v2421 = vld [vmem:[#allocation2 + $0x9] sm:$0xff]
      %v2422 = vld [vmem:[#allocation2 + $0x19] sm:$0xff]
      %v2423 = vld [vmem:[#allocation2 + $0x21] sm:$0xff]
      %v2424 = vld [vmem:[#allocation2 + $0x31] sm:$0xff]
      %v2425 = vld [vmem:[#allocation2 + $0x39] sm:$0xff]
      %v2426 = vld [vmem:[#allocation2 + $0x49] sm:$0xff]
      %v2427 = vld [vmem:[#allocation2 + $0x51] sm:$0xff]
      %v2428 = vld [vmem:[#allocation2 + $0x61] sm:$0xff]
      %v2429 = vld [vmem:[#allocation2 + $0x69] sm:$0xff]
      %v2430 = vld [vmem:[#allocation2 + $0x79] sm:$0xff]
      %v2431 = vld [vmem:[#allocation2 + $0x81] sm:$0xff]
      %v2432 = vld [vmem:[#allocation2 + $0x91] sm:$0xff]
      %v2433 = vld [vmem:[#allocation2 + $0x99] sm:$0xff]
      %v2434 = vld [vmem:[#allocation2 + $0xa9] sm:$0xff]
      %v2435 = vld [vmem:[#allocation2 + $0xb1] sm:$0xff]
      %v2436 = vld [vmem:[#allocation2 + $0xc1] sm:$0xff]
      %v2437 = vld [vmem:[#allocation2 + $0xc9] sm:$0xff]
      %v2438 = vld [vmem:[#allocation2 + $0xd9] sm:$0xff]
      %v2439 = vld [vmem:[#allocation2 + $0xe1] sm:$0xff]
      %v2440 = vld [vmem:[#allocation2 + $0xf1] sm:$0xff]
      %v2441 = vld [vmem:[#allocation2 + $0xf9] sm:$0xff]
      %v2442 = vld [vmem:[#allocation2 + $0x109] sm:$0xff]
      %v2443 = vld [vmem:[#allocation2 + $0x111] sm:$0xff]
      %v2444 = vld [vmem:[#allocation2 + $0x121] sm:$0xff]
      %v2445 = vld [vmem:[#allocation2 + $0x129] sm:$0xff]
      %v2446 = vld [vmem:[#allocation2 + $0x139] sm:$0xff]
      %v2447 = vld [vmem:[#allocation2 + $0x141] sm:$0xff]
      %v2448 = vld [vmem:[#allocation2 + $0x151] sm:$0xff]
      %v2449 = vld [vmem:[#allocation2 + $0x159] sm:$0xff]
      %v2450 = vld [vmem:[#allocation2 + $0x169] sm:$0xff]
      %v2451 = vld [vmem:[#allocation2 + $0x171] sm:$0xff]
      %2452 = vset.pattern.permute.xlu0 3
      %2453 = vperm.xlu0 %2452, %v1655
      %v2454 = vpop.permute.xlu0 %2453
      %2456 = vset.pattern.permute.xlu0 3
      %2457 = vperm.xlu0 %2456, %v1659
      %v2458 = vpop.permute.xlu0 %2457
      %2460 = vset.pattern.permute.xlu0 3
      %2461 = vperm.xlu0 %2460, %v1663
      %v2462 = vpop.permute.xlu0 %2461
      %2464 = vset.pattern.permute.xlu0 3
      %2465 = vperm.xlu0 %2464, %v1667
      %v2466 = vpop.permute.xlu0 %2465
      %2468 = vset.pattern.permute.xlu0 3
      %2469 = vperm.xlu0 %2468, %v1671
      %v2470 = vpop.permute.xlu0 %2469
      %2472 = vset.pattern.permute.xlu0 3
      %2473 = vperm.xlu0 %2472, %v1675
      %v2474 = vpop.permute.xlu0 %2473
      %2476 = vset.pattern.permute.xlu0 3
      %2477 = vperm.xlu0 %2476, %v1679
      %v2478 = vpop.permute.xlu0 %2477
      %2480 = vset.pattern.permute.xlu0 3
      %2481 = vperm.xlu0 %2480, %v1683
      %v2482 = vpop.permute.xlu0 %2481
      %2484 = vset.pattern.permute.xlu0 3
      %2485 = vperm.xlu0 %2484, %v1687
      %v2486 = vpop.permute.xlu0 %2485
      %2488 = vset.pattern.permute.xlu0 3
      %2489 = vperm.xlu0 %2488, %v1691
      %v2490 = vpop.permute.xlu0 %2489
      %2492 = vset.pattern.permute.xlu0 3
      %2493 = vperm.xlu0 %2492, %v1695
      %v2494 = vpop.permute.xlu0 %2493
      %2496 = vset.pattern.permute.xlu0 3
      %2497 = vperm.xlu0 %2496, %v1699
      %v2498 = vpop.permute.xlu0 %2497
      %2500 = vset.pattern.permute.xlu0 3
      %2501 = vperm.xlu0 %2500, %v1703
      %v2502 = vpop.permute.xlu0 %2501
      %2504 = vset.pattern.permute.xlu0 3
      %2505 = vperm.xlu0 %2504, %v1707
      %v2506 = vpop.permute.xlu0 %2505
      %2508 = vset.pattern.permute.xlu0 3
      %2509 = vperm.xlu0 %2508, %v1711
      %v2510 = vpop.permute.xlu0 %2509
      %2512 = vset.pattern.permute.xlu0 3
      %2513 = vperm.xlu0 %2512, %v1715
      %v2514 = vpop.permute.xlu0 %2513
      %v2516 = vmul.f32 %v2420, %v2454
      %v2517 = vmul.f32 %v2421, %v2454
      %v2518 = vmul.f32 %v2422, %v2458
      %v2519 = vmul.f32 %v2423, %v2458
      %v2520 = vmul.f32 %v2424, %v2462
      %v2521 = vmul.f32 %v2425, %v2462
      %v2522 = vmul.f32 %v2426, %v2466
      %v2523 = vmul.f32 %v2427, %v2466
      %v2524 = vmul.f32 %v2428, %v2470
      %v2525 = vmul.f32 %v2429, %v2470
      %v2526 = vmul.f32 %v2430, %v2474
      %v2527 = vmul.f32 %v2431, %v2474
      %v2528 = vmul.f32 %v2432, %v2478
      %v2529 = vmul.f32 %v2433, %v2478
      %v2530 = vmul.f32 %v2434, %v2482
      %v2531 = vmul.f32 %v2435, %v2482
      %v2532 = vmul.f32 %v2436, %v2486
      %v2533 = vmul.f32 %v2437, %v2486
      %v2534 = vmul.f32 %v2438, %v2490
      %v2535 = vmul.f32 %v2439, %v2490
      %v2536 = vmul.f32 %v2440, %v2494
      %v2537 = vmul.f32 %v2441, %v2494
      %v2538 = vmul.f32 %v2442, %v2498
      %v2539 = vmul.f32 %v2443, %v2498
      %v2540 = vmul.f32 %v2444, %v2502
      %v2541 = vmul.f32 %v2445, %v2502
      %v2542 = vmul.f32 %v2446, %v2506
      %v2543 = vmul.f32 %v2447, %v2506
      %v2544 = vmul.f32 %v2448, %v2510
      %v2545 = vmul.f32 %v2449, %v2510
      %v2546 = vmul.f32 %v2450, %v2514
      %v2547 = vmul.f32 %v2451, %v2514
      %v2548 = vadd.f32 %v2388, %v2516
      %v2549 = vadd.f32 %v2389, %v2517
      %v2550 = vadd.f32 %v2390, %v2518
      %v2551 = vadd.f32 %v2391, %v2519
      %v2552 = vadd.f32 %v2392, %v2520
      %v2553 = vadd.f32 %v2393, %v2521
      %v2554 = vadd.f32 %v2394, %v2522
      %v2555 = vadd.f32 %v2395, %v2523
      %v2556 = vadd.f32 %v2396, %v2524
      %v2557 = vadd.f32 %v2397, %v2525
      %v2558 = vadd.f32 %v2398, %v2526
      %v2559 = vadd.f32 %v2399, %v2527
      %v2560 = vadd.f32 %v2400, %v2528
      %v2561 = vadd.f32 %v2401, %v2529
      %v2562 = vadd.f32 %v2402, %v2530
      %v2563 = vadd.f32 %v2403, %v2531
      %v2564 = vadd.f32 %v2404, %v2532
      %v2565 = vadd.f32 %v2405, %v2533
      %v2566 = vadd.f32 %v2406, %v2534
      %v2567 = vadd.f32 %v2407, %v2535
      %v2568 = vadd.f32 %v2408, %v2536
      %v2569 = vadd.f32 %v2409, %v2537
      %v2570 = vadd.f32 %v2410, %v2538
      %v2571 = vadd.f32 %v2411, %v2539
      %v2572 = vadd.f32 %v2412, %v2540
      %v2573 = vadd.f32 %v2413, %v2541
      %v2574 = vadd.f32 %v2414, %v2542
      %v2575 = vadd.f32 %v2415, %v2543
      %v2576 = vadd.f32 %v2416, %v2544
      %v2577 = vadd.f32 %v2417, %v2545
      %v2578 = vadd.f32 %v2418, %v2546
      %v2579 = vadd.f32 %v2419, %v2547
      %v2580 = vld [vmem:[#allocation2 + $0x1] sm:$0xff]
      %v2581 = vld [vmem:[#allocation2 + $0x9] sm:$0xff]
      %v2582 = vld [vmem:[#allocation2 + $0x19] sm:$0xff]
      %v2583 = vld [vmem:[#allocation2 + $0x21] sm:$0xff]
      %v2584 = vld [vmem:[#allocation2 + $0x31] sm:$0xff]
      %v2585 = vld [vmem:[#allocation2 + $0x39] sm:$0xff]
      %v2586 = vld [vmem:[#allocation2 + $0x49] sm:$0xff]
      %v2587 = vld [vmem:[#allocation2 + $0x51] sm:$0xff]
      %v2588 = vld [vmem:[#allocation2 + $0x61] sm:$0xff]
      %v2589 = vld [vmem:[#allocation2 + $0x69] sm:$0xff]
      %v2590 = vld [vmem:[#allocation2 + $0x79] sm:$0xff]
      %v2591 = vld [vmem:[#allocation2 + $0x81] sm:$0xff]
      %v2592 = vld [vmem:[#allocation2 + $0x91] sm:$0xff]
      %v2593 = vld [vmem:[#allocation2 + $0x99] sm:$0xff]
      %v2594 = vld [vmem:[#allocation2 + $0xa9] sm:$0xff]
      %v2595 = vld [vmem:[#allocation2 + $0xb1] sm:$0xff]
      %v2596 = vld [vmem:[#allocation2 + $0xc1] sm:$0xff]
      %v2597 = vld [vmem:[#allocation2 + $0xc9] sm:$0xff]
      %v2598 = vld [vmem:[#allocation2 + $0xd9] sm:$0xff]
      %v2599 = vld [vmem:[#allocation2 + $0xe1] sm:$0xff]
      %v2600 = vld [vmem:[#allocation2 + $0xf1] sm:$0xff]
      %v2601 = vld [vmem:[#allocation2 + $0xf9] sm:$0xff]
      %v2602 = vld [vmem:[#allocation2 + $0x109] sm:$0xff]
      %v2603 = vld [vmem:[#allocation2 + $0x111] sm:$0xff]
      %v2604 = vld [vmem:[#allocation2 + $0x121] sm:$0xff]
      %v2605 = vld [vmem:[#allocation2 + $0x129] sm:$0xff]
      %v2606 = vld [vmem:[#allocation2 + $0x139] sm:$0xff]
      %v2607 = vld [vmem:[#allocation2 + $0x141] sm:$0xff]
      %v2608 = vld [vmem:[#allocation2 + $0x151] sm:$0xff]
      %v2609 = vld [vmem:[#allocation2 + $0x159] sm:$0xff]
      %v2610 = vld [vmem:[#allocation2 + $0x169] sm:$0xff]
      %v2611 = vld [vmem:[#allocation2 + $0x171] sm:$0xff]
      %2612 = vset.pattern.permute.xlu0 4
      %2613 = vperm.xlu0 %2612, %v1655
      %v2614 = vpop.permute.xlu0 %2613
      %2616 = vset.pattern.permute.xlu0 4
      %2617 = vperm.xlu0 %2616, %v1659
      %v2618 = vpop.permute.xlu0 %2617
      %2620 = vset.pattern.permute.xlu0 4
      %2621 = vperm.xlu0 %2620, %v1663
      %v2622 = vpop.permute.xlu0 %2621
      %2624 = vset.pattern.permute.xlu0 4
      %2625 = vperm.xlu0 %2624, %v1667
      %v2626 = vpop.permute.xlu0 %2625
      %2628 = vset.pattern.permute.xlu0 4
      %2629 = vperm.xlu0 %2628, %v1671
      %v2630 = vpop.permute.xlu0 %2629
      %2632 = vset.pattern.permute.xlu0 4
      %2633 = vperm.xlu0 %2632, %v1675
      %v2634 = vpop.permute.xlu0 %2633
      %2636 = vset.pattern.permute.xlu0 4
      %2637 = vperm.xlu0 %2636, %v1679
      %v2638 = vpop.permute.xlu0 %2637
      %2640 = vset.pattern.permute.xlu0 4
      %2641 = vperm.xlu0 %2640, %v1683
      %v2642 = vpop.permute.xlu0 %2641
      %2644 = vset.pattern.permute.xlu0 4
      %2645 = vperm.xlu0 %2644, %v1687
      %v2646 = vpop.permute.xlu0 %2645
      %2648 = vset.pattern.permute.xlu0 4
      %2649 = vperm.xlu0 %2648, %v1691
      %v2650 = vpop.permute.xlu0 %2649
      %2652 = vset.pattern.permute.xlu0 4
      %2653 = vperm.xlu0 %2652, %v1695
      %v2654 = vpop.permute.xlu0 %2653
      %2656 = vset.pattern.permute.xlu0 4
      %2657 = vperm.xlu0 %2656, %v1699
      %v2658 = vpop.permute.xlu0 %2657
      %2660 = vset.pattern.permute.xlu0 4
      %2661 = vperm.xlu0 %2660, %v1703
      %v2662 = vpop.permute.xlu0 %2661
      %2664 = vset.pattern.permute.xlu0 4
      %2665 = vperm.xlu0 %2664, %v1707
      %v2666 = vpop.permute.xlu0 %2665
      %2668 = vset.pattern.permute.xlu0 4
      %2669 = vperm.xlu0 %2668, %v1711
      %v2670 = vpop.permute.xlu0 %2669
      %2672 = vset.pattern.permute.xlu0 4
      %2673 = vperm.xlu0 %2672, %v1715
      %v2674 = vpop.permute.xlu0 %2673
      %v2676 = vmul.f32 %v2580, %v2614
      %v2677 = vmul.f32 %v2581, %v2614
      %v2678 = vmul.f32 %v2582, %v2618
      %v2679 = vmul.f32 %v2583, %v2618
      %v2680 = vmul.f32 %v2584, %v2622
      %v2681 = vmul.f32 %v2585, %v2622
      %v2682 = vmul.f32 %v2586, %v2626
      %v2683 = vmul.f32 %v2587, %v2626
      %v2684 = vmul.f32 %v2588, %v2630
      %v2685 = vmul.f32 %v2589, %v2630
      %v2686 = vmul.f32 %v2590, %v2634
      %v2687 = vmul.f32 %v2591, %v2634
      %v2688 = vmul.f32 %v2592, %v2638
      %v2689 = vmul.f32 %v2593, %v2638
      %v2690 = vmul.f32 %v2594, %v2642
      %v2691 = vmul.f32 %v2595, %v2642
      %v2692 = vmul.f32 %v2596, %v2646
      %v2693 = vmul.f32 %v2597, %v2646
      %v2694 = vmul.f32 %v2598, %v2650
      %v2695 = vmul.f32 %v2599, %v2650
      %v2696 = vmul.f32 %v2600, %v2654
      %v2697 = vmul.f32 %v2601, %v2654
      %v2698 = vmul.f32 %v2602, %v2658
      %v2699 = vmul.f32 %v2603, %v2658
      %v2700 = vmul.f32 %v2604, %v2662
      %v2701 = vmul.f32 %v2605, %v2662
      %v2702 = vmul.f32 %v2606, %v2666
      %v2703 = vmul.f32 %v2607, %v2666
      %v2704 = vmul.f32 %v2608, %v2670
      %v2705 = vmul.f32 %v2609, %v2670
      %v2706 = vmul.f32 %v2610, %v2674
      %v2707 = vmul.f32 %v2611, %v2674
      %2740 = vrot.lane.b32.xlu0 %v2676, 127
      %v2741 = vpop.permute.xlu0 %2740
      %2742 = vrot.lane.b32.xlu0 %v2677, 127
      %v2743 = vpop.permute.xlu0 %2742
      %2744 = vrot.lane.b32.xlu0 %v2678, 127
      %v2745 = vpop.permute.xlu0 %2744
      %2746 = vrot.lane.b32.xlu0 %v2679, 127
      %v2747 = vpop.permute.xlu0 %2746
      %2748 = vrot.lane.b32.xlu0 %v2680, 127
      %v2749 = vpop.permute.xlu0 %2748
      %2750 = vrot.lane.b32.xlu0 %v2681, 127
      %v2751 = vpop.permute.xlu0 %2750
      %2752 = vrot.lane.b32.xlu0 %v2682, 127
      %v2753 = vpop.permute.xlu0 %2752
      %2754 = vrot.lane.b32.xlu0 %v2683, 127
      %v2755 = vpop.permute.xlu0 %2754
      %2756 = vrot.lane.b32.xlu0 %v2684, 127
      %v2757 = vpop.permute.xlu0 %2756
      %2758 = vrot.lane.b32.xlu0 %v2685, 127
      %v2759 = vpop.permute.xlu0 %2758
      %2760 = vrot.lane.b32.xlu0 %v2686, 127
      %v2761 = vpop.permute.xlu0 %2760
      %2762 = vrot.lane.b32.xlu0 %v2687, 127
      %v2763 = vpop.permute.xlu0 %2762
      %2764 = vrot.lane.b32.xlu0 %v2688, 127
      %v2765 = vpop.permute.xlu0 %2764
      %2766 = vrot.lane.b32.xlu0 %v2689, 127
      %v2767 = vpop.permute.xlu0 %2766
      %2768 = vrot.lane.b32.xlu0 %v2690, 127
      %v2769 = vpop.permute.xlu0 %2768
      %2770 = vrot.lane.b32.xlu0 %v2691, 127
      %v2771 = vpop.permute.xlu0 %2770
      %2772 = vrot.lane.b32.xlu0 %v2692, 127
      %v2773 = vpop.permute.xlu0 %2772
      %2774 = vrot.lane.b32.xlu0 %v2693, 127
      %v2775 = vpop.permute.xlu0 %2774
      %2776 = vrot.lane.b32.xlu0 %v2694, 127
      %v2777 = vpop.permute.xlu0 %2776
      %2778 = vrot.lane.b32.xlu0 %v2695, 127
      %v2779 = vpop.permute.xlu0 %2778
      %2780 = vrot.lane.b32.xlu0 %v2696, 127
      %v2781 = vpop.permute.xlu0 %2780
      %2782 = vrot.lane.b32.xlu0 %v2697, 127
      %v2783 = vpop.permute.xlu0 %2782
      %2784 = vrot.lane.b32.xlu0 %v2698, 127
      %v2785 = vpop.permute.xlu0 %2784
      %2786 = vrot.lane.b32.xlu0 %v2699, 127
      %v2787 = vpop.permute.xlu0 %2786
      %2788 = vrot.lane.b32.xlu0 %v2700, 127
      %v2789 = vpop.permute.xlu0 %2788
      %2790 = vrot.lane.b32.xlu0 %v2701, 127
      %v2791 = vpop.permute.xlu0 %2790
      %2792 = vrot.lane.b32.xlu0 %v2702, 127
      %v2793 = vpop.permute.xlu0 %2792
      %2794 = vrot.lane.b32.xlu0 %v2703, 127
      %v2795 = vpop.permute.xlu0 %2794
      %2796 = vrot.lane.b32.xlu0 %v2704, 127
      %v2797 = vpop.permute.xlu0 %2796
      %2798 = vrot.lane.b32.xlu0 %v2705, 127
      %v2799 = vpop.permute.xlu0 %2798
      %2800 = vrot.lane.b32.xlu0 %v2706, 127
      %v2801 = vpop.permute.xlu0 %2800
      %2802 = vrot.lane.b32.xlu0 %v2707, 127
      %v2803 = vpop.permute.xlu0 %2802
      %v2836 = vadd.f32 %v2548, %v2741
      %v2837 = vadd.f32 %v2549, %v2743
      %v2838 = vadd.f32 %v2550, %v2745
      %v2839 = vadd.f32 %v2551, %v2747
      %v2840 = vadd.f32 %v2552, %v2749
      %v2841 = vadd.f32 %v2553, %v2751
      %v2842 = vadd.f32 %v2554, %v2753
      %v2843 = vadd.f32 %v2555, %v2755
      %v2844 = vadd.f32 %v2556, %v2757
      %v2845 = vadd.f32 %v2557, %v2759
      %v2846 = vadd.f32 %v2558, %v2761
      %v2847 = vadd.f32 %v2559, %v2763
      %v2848 = vadd.f32 %v2560, %v2765
      %v2849 = vadd.f32 %v2561, %v2767
      %v2850 = vadd.f32 %v2562, %v2769
      %v2851 = vadd.f32 %v2563, %v2771
      %v2852 = vadd.f32 %v2564, %v2773
      %v2853 = vadd.f32 %v2565, %v2775
      %v2854 = vadd.f32 %v2566, %v2777
      %v2855 = vadd.f32 %v2567, %v2779
      %v2856 = vadd.f32 %v2568, %v2781
      %v2857 = vadd.f32 %v2569, %v2783
      %v2858 = vadd.f32 %v2570, %v2785
      %v2859 = vadd.f32 %v2571, %v2787
      %v2860 = vadd.f32 %v2572, %v2789
      %v2861 = vadd.f32 %v2573, %v2791
      %v2862 = vadd.f32 %v2574, %v2793
      %v2863 = vadd.f32 %v2575, %v2795
      %v2864 = vadd.f32 %v2576, %v2797
      %v2865 = vadd.f32 %v2577, %v2799
      %v2866 = vadd.f32 %v2578, %v2801
      %v2867 = vadd.f32 %v2579, %v2803
      %v2868 = vld [vmem:[#allocation2 + $0x1] sm:$0xff]
      %v2869 = vld [vmem:[#allocation2 + $0x9] sm:$0xff]
      %v2870 = vld [vmem:[#allocation2 + $0x19] sm:$0xff]
      %v2871 = vld [vmem:[#allocation2 + $0x21] sm:$0xff]
      %v2872 = vld [vmem:[#allocation2 + $0x31] sm:$0xff]
      %v2873 = vld [vmem:[#allocation2 + $0x39] sm:$0xff]
      %v2874 = vld [vmem:[#allocation2 + $0x49] sm:$0xff]
      %v2875 = vld [vmem:[#allocation2 + $0x51] sm:$0xff]
      %v2876 = vld [vmem:[#allocation2 + $0x61] sm:$0xff]
      %v2877 = vld [vmem:[#allocation2 + $0x69] sm:$0xff]
      %v2878 = vld [vmem:[#allocation2 + $0x79] sm:$0xff]
      %v2879 = vld [vmem:[#allocation2 + $0x81] sm:$0xff]
      %v2880 = vld [vmem:[#allocation2 + $0x91] sm:$0xff]
      %v2881 = vld [vmem:[#allocation2 + $0x99] sm:$0xff]
      %v2882 = vld [vmem:[#allocation2 + $0xa9] sm:$0xff]
      %v2883 = vld [vmem:[#allocation2 + $0xb1] sm:$0xff]
      %v2884 = vld [vmem:[#allocation2 + $0xc1] sm:$0xff]
      %v2885 = vld [vmem:[#allocation2 + $0xc9] sm:$0xff]
      %v2886 = vld [vmem:[#allocation2 + $0xd9] sm:$0xff]
      %v2887 = vld [vmem:[#allocation2 + $0xe1] sm:$0xff]
      %v2888 = vld [vmem:[#allocation2 + $0xf1] sm:$0xff]
      %v2889 = vld [vmem:[#allocation2 + $0xf9] sm:$0xff]
      %v2890 = vld [vmem:[#allocation2 + $0x109] sm:$0xff]
      %v2891 = vld [vmem:[#allocation2 + $0x111] sm:$0xff]
      %v2892 = vld [vmem:[#allocation2 + $0x121] sm:$0xff]
      %v2893 = vld [vmem:[#allocation2 + $0x129] sm:$0xff]
      %v2894 = vld [vmem:[#allocation2 + $0x139] sm:$0xff]
      %v2895 = vld [vmem:[#allocation2 + $0x141] sm:$0xff]
      %v2896 = vld [vmem:[#allocation2 + $0x151] sm:$0xff]
      %v2897 = vld [vmem:[#allocation2 + $0x159] sm:$0xff]
      %v2898 = vld [vmem:[#allocation2 + $0x169] sm:$0xff]
      %v2899 = vld [vmem:[#allocation2 + $0x171] sm:$0xff]
      %2900 = vset.pattern.permute.xlu0 5
      %2901 = vperm.xlu0 %2900, %v1655
      %v2902 = vpop.permute.xlu0 %2901
      %2904 = vset.pattern.permute.xlu0 5
      %2905 = vperm.xlu0 %2904, %v1659
      %v2906 = vpop.permute.xlu0 %2905
      %2908 = vset.pattern.permute.xlu0 5
      %2909 = vperm.xlu0 %2908, %v1663
      %v2910 = vpop.permute.xlu0 %2909
      %2912 = vset.pattern.permute.xlu0 5
      %2913 = vperm.xlu0 %2912, %v1667
      %v2914 = vpop.permute.xlu0 %2913
      %2916 = vset.pattern.permute.xlu0 5
      %2917 = vperm.xlu0 %2916, %v1671
      %v2918 = vpop.permute.xlu0 %2917
      %2920 = vset.pattern.permute.xlu0 5
      %2921 = vperm.xlu0 %2920, %v1675
      %v2922 = vpop.permute.xlu0 %2921
      %2924 = vset.pattern.permute.xlu0 5
      %2925 = vperm.xlu0 %2924, %v1679
      %v2926 = vpop.permute.xlu0 %2925
      %2928 = vset.pattern.permute.xlu0 5
      %2929 = vperm.xlu0 %2928, %v1683
      %v2930 = vpop.permute.xlu0 %2929
      %2932 = vset.pattern.permute.xlu0 5
      %2933 = vperm.xlu0 %2932, %v1687
      %v2934 = vpop.permute.xlu0 %2933
      %2936 = vset.pattern.permute.xlu0 5
      %2937 = vperm.xlu0 %2936, %v1691
      %v2938 = vpop.permute.xlu0 %2937
      %2940 = vset.pattern.permute.xlu0 5
      %2941 = vperm.xlu0 %2940, %v1695
      %v2942 = vpop.permute.xlu0 %2941
      %2944 = vset.pattern.permute.xlu0 5
      %2945 = vperm.xlu0 %2944, %v1699
      %v2946 = vpop.permute.xlu0 %2945
      %2948 = vset.pattern.permute.xlu0 5
      %2949 = vperm.xlu0 %2948, %v1703
      %v2950 = vpop.permute.xlu0 %2949
      %2952 = vset.pattern.permute.xlu0 5
      %2953 = vperm.xlu0 %2952, %v1707
      %v2954 = vpop.permute.xlu0 %2953
      %2956 = vset.pattern.permute.xlu0 5
      %2957 = vperm.xlu0 %2956, %v1711
      %v2958 = vpop.permute.xlu0 %2957
      %2960 = vset.pattern.permute.xlu0 5
      %2961 = vperm.xlu0 %2960, %v1715
      %v2962 = vpop.permute.xlu0 %2961
      %v2964 = vmul.f32 %v2868, %v2902
      %v2965 = vmul.f32 %v2869, %v2902
      %v2966 = vmul.f32 %v2870, %v2906
      %v2967 = vmul.f32 %v2871, %v2906
      %v2968 = vmul.f32 %v2872, %v2910
      %v2969 = vmul.f32 %v2873, %v2910
      %v2970 = vmul.f32 %v2874, %v2914
      %v2971 = vmul.f32 %v2875, %v2914
      %v2972 = vmul.f32 %v2876, %v2918
      %v2973 = vmul.f32 %v2877, %v2918
      %v2974 = vmul.f32 %v2878, %v2922
      %v2975 = vmul.f32 %v2879, %v2922
      %v2976 = vmul.f32 %v2880, %v2926
      %v2977 = vmul.f32 %v2881, %v2926
      %v2978 = vmul.f32 %v2882, %v2930
      %v2979 = vmul.f32 %v2883, %v2930
      %v2980 = vmul.f32 %v2884, %v2934
      %v2981 = vmul.f32 %v2885, %v2934
      %v2982 = vmul.f32 %v2886, %v2938
      %v2983 = vmul.f32 %v2887, %v2938
      %v2984 = vmul.f32 %v2888, %v2942
      %v2985 = vmul.f32 %v2889, %v2942
      %v2986 = vmul.f32 %v2890, %v2946
      %v2987 = vmul.f32 %v2891, %v2946
      %v2988 = vmul.f32 %v2892, %v2950
      %v2989 = vmul.f32 %v2893, %v2950
      %v2990 = vmul.f32 %v2894, %v2954
      %v2991 = vmul.f32 %v2895, %v2954
      %v2992 = vmul.f32 %v2896, %v2958
      %v2993 = vmul.f32 %v2897, %v2958
      %v2994 = vmul.f32 %v2898, %v2962
      %v2995 = vmul.f32 %v2899, %v2962
      %3028 = vrot.lane.b32.xlu0 %v2964, 126
      %v3029 = vpop.permute.xlu0 %3028
      %3030 = vrot.lane.b32.xlu0 %v2965, 126
      %v3031 = vpop.permute.xlu0 %3030
      %3032 = vrot.lane.b32.xlu0 %v2966, 126
      %v3033 = vpop.permute.xlu0 %3032
      %3034 = vrot.lane.b32.xlu0 %v2967, 126
      %v3035 = vpop.permute.xlu0 %3034
      %3036 = vrot.lane.b32.xlu0 %v2968, 126
      %v3037 = vpop.permute.xlu0 %3036
      %3038 = vrot.lane.b32.xlu0 %v2969, 126
      %v3039 = vpop.permute.xlu0 %3038
      %3040 = vrot.lane.b32.xlu0 %v2970, 126
      %v3041 = vpop.permute.xlu0 %3040
      %3042 = vrot.lane.b32.xlu0 %v2971, 126
      %v3043 = vpop.permute.xlu0 %3042
      %3044 = vrot.lane.b32.xlu0 %v2972, 126
      %v3045 = vpop.permute.xlu0 %3044
      %3046 = vrot.lane.b32.xlu0 %v2973, 126
      %v3047 = vpop.permute.xlu0 %3046
      %3048 = vrot.lane.b32.xlu0 %v2974, 126
      %v3049 = vpop.permute.xlu0 %3048
      %3050 = vrot.lane.b32.xlu0 %v2975, 126
      %v3051 = vpop.permute.xlu0 %3050
      %3052 = vrot.lane.b32.xlu0 %v2976, 126
      %v3053 = vpop.permute.xlu0 %3052
      %3054 = vrot.lane.b32.xlu0 %v2977, 126
      %v3055 = vpop.permute.xlu0 %3054
      %3056 = vrot.lane.b32.xlu0 %v2978, 126
      %v3057 = vpop.permute.xlu0 %3056
      %3058 = vrot.lane.b32.xlu0 %v2979, 126
      %v3059 = vpop.permute.xlu0 %3058
      %3060 = vrot.lane.b32.xlu0 %v2980, 126
      %v3061 = vpop.permute.xlu0 %3060
      %3062 = vrot.lane.b32.xlu0 %v2981, 126
      %v3063 = vpop.permute.xlu0 %3062
      %3064 = vrot.lane.b32.xlu0 %v2982, 126
      %v3065 = vpop.permute.xlu0 %3064
      %3066 = vrot.lane.b32.xlu0 %v2983, 126
      %v3067 = vpop.permute.xlu0 %3066
      %3068 = vrot.lane.b32.xlu0 %v2984, 126
      %v3069 = vpop.permute.xlu0 %3068
      %3070 = vrot.lane.b32.xlu0 %v2985, 126
      %v3071 = vpop.permute.xlu0 %3070
      %3072 = vrot.lane.b32.xlu0 %v2986, 126
      %v3073 = vpop.permute.xlu0 %3072
      %3074 = vrot.lane.b32.xlu0 %v2987, 126
      %v3075 = vpop.permute.xlu0 %3074
      %3076 = vrot.lane.b32.xlu0 %v2988, 126
      %v3077 = vpop.permute.xlu0 %3076
      %3078 = vrot.lane.b32.xlu0 %v2989, 126
      %v3079 = vpop.permute.xlu0 %3078
      %3080 = vrot.lane.b32.xlu0 %v2990, 126
      %v3081 = vpop.permute.xlu0 %3080
      %3082 = vrot.lane.b32.xlu0 %v2991, 126
      %v3083 = vpop.permute.xlu0 %3082
      %3084 = vrot.lane.b32.xlu0 %v2992, 126
      %v3085 = vpop.permute.xlu0 %3084
      %3086 = vrot.lane.b32.xlu0 %v2993, 126
      %v3087 = vpop.permute.xlu0 %3086
      %3088 = vrot.lane.b32.xlu0 %v2994, 126
      %v3089 = vpop.permute.xlu0 %3088
      %3090 = vrot.lane.b32.xlu0 %v2995, 126
      %v3091 = vpop.permute.xlu0 %3090
      %v3124 = vadd.f32 %v2836, %v3029
      %v3125 = vadd.f32 %v2837, %v3031
      %v3126 = vadd.f32 %v2838, %v3033
      %v3127 = vadd.f32 %v2839, %v3035
      %v3128 = vadd.f32 %v2840, %v3037
      %v3129 = vadd.f32 %v2841, %v3039
      %v3130 = vadd.f32 %v2842, %v3041
      %v3131 = vadd.f32 %v2843, %v3043
      %v3132 = vadd.f32 %v2844, %v3045
      %v3133 = vadd.f32 %v2845, %v3047
      %v3134 = vadd.f32 %v2846, %v3049
      %v3135 = vadd.f32 %v2847, %v3051
      %v3136 = vadd.f32 %v2848, %v3053
      %v3137 = vadd.f32 %v2849, %v3055
      %v3138 = vadd.f32 %v2850, %v3057
      %v3139 = vadd.f32 %v2851, %v3059
      %v3140 = vadd.f32 %v2852, %v3061
      %v3141 = vadd.f32 %v2853, %v3063
      %v3142 = vadd.f32 %v2854, %v3065
      %v3143 = vadd.f32 %v2855, %v3067
      %v3144 = vadd.f32 %v2856, %v3069
      %v3145 = vadd.f32 %v2857, %v3071
      %v3146 = vadd.f32 %v2858, %v3073
      %v3147 = vadd.f32 %v2859, %v3075
      %v3148 = vadd.f32 %v2860, %v3077
      %v3149 = vadd.f32 %v2861, %v3079
      %v3150 = vadd.f32 %v2862, %v3081
      %v3151 = vadd.f32 %v2863, %v3083
      %v3152 = vadd.f32 %v2864, %v3085
      %v3153 = vadd.f32 %v2865, %v3087
      %v3154 = vadd.f32 %v2866, %v3089
      %v3155 = vadd.f32 %v2867, %v3091
      %v3156 = vld [vmem:[#allocation2 + $0x2] sm:$0xff]
      %v3157 = vld [vmem:[#allocation2 + $0xa] sm:$0xff]
      %v3158 = vld [vmem:[#allocation2 + $0x1a] sm:$0xff]
      %v3159 = vld [vmem:[#allocation2 + $0x22] sm:$0xff]
      %v3160 = vld [vmem:[#allocation2 + $0x32] sm:$0xff]
      %v3161 = vld [vmem:[#allocation2 + $0x3a] sm:$0xff]
      %v3162 = vld [vmem:[#allocation2 + $0x4a] sm:$0xff]
      %v3163 = vld [vmem:[#allocation2 + $0x52] sm:$0xff]
      %v3164 = vld [vmem:[#allocation2 + $0x62] sm:$0xff]
      %v3165 = vld [vmem:[#allocation2 + $0x6a] sm:$0xff]
      %v3166 = vld [vmem:[#allocation2 + $0x7a] sm:$0xff]
      %v3167 = vld [vmem:[#allocation2 + $0x82] sm:$0xff]
      %v3168 = vld [vmem:[#allocation2 + $0x92] sm:$0xff]
      %v3169 = vld [vmem:[#allocation2 + $0x9a] sm:$0xff]
      %v3170 = vld [vmem:[#allocation2 + $0xaa] sm:$0xff]
      %v3171 = vld [vmem:[#allocation2 + $0xb2] sm:$0xff]
      %v3172 = vld [vmem:[#allocation2 + $0xc2] sm:$0xff]
      %v3173 = vld [vmem:[#allocation2 + $0xca] sm:$0xff]
      %v3174 = vld [vmem:[#allocation2 + $0xda] sm:$0xff]
      %v3175 = vld [vmem:[#allocation2 + $0xe2] sm:$0xff]
      %v3176 = vld [vmem:[#allocation2 + $0xf2] sm:$0xff]
      %v3177 = vld [vmem:[#allocation2 + $0xfa] sm:$0xff]
      %v3178 = vld [vmem:[#allocation2 + $0x10a] sm:$0xff]
      %v3179 = vld [vmem:[#allocation2 + $0x112] sm:$0xff]
      %v3180 = vld [vmem:[#allocation2 + $0x122] sm:$0xff]
      %v3181 = vld [vmem:[#allocation2 + $0x12a] sm:$0xff]
      %v3182 = vld [vmem:[#allocation2 + $0x13a] sm:$0xff]
      %v3183 = vld [vmem:[#allocation2 + $0x142] sm:$0xff]
      %v3184 = vld [vmem:[#allocation2 + $0x152] sm:$0xff]
      %v3185 = vld [vmem:[#allocation2 + $0x15a] sm:$0xff]
      %v3186 = vld [vmem:[#allocation2 + $0x16a] sm:$0xff]
      %v3187 = vld [vmem:[#allocation2 + $0x172] sm:$0xff]
      %3188 = vset.pattern.permute.xlu0 6
      %3189 = vperm.xlu0 %3188, %v1655
      %v3190 = vpop.permute.xlu0 %3189
      %3192 = vset.pattern.permute.xlu0 6
      %3193 = vperm.xlu0 %3192, %v1659
      %v3194 = vpop.permute.xlu0 %3193
      %3196 = vset.pattern.permute.xlu0 6
      %3197 = vperm.xlu0 %3196, %v1663
      %v3198 = vpop.permute.xlu0 %3197
      %3200 = vset.pattern.permute.xlu0 6
      %3201 = vperm.xlu0 %3200, %v1667
      %v3202 = vpop.permute.xlu0 %3201
      %3204 = vset.pattern.permute.xlu0 6
      %3205 = vperm.xlu0 %3204, %v1671
      %v3206 = vpop.permute.xlu0 %3205
      %3208 = vset.pattern.permute.xlu0 6
      %3209 = vperm.xlu0 %3208, %v1675
      %v3210 = vpop.permute.xlu0 %3209
      %3212 = vset.pattern.permute.xlu0 6
      %3213 = vperm.xlu0 %3212, %v1679
      %v3214 = vpop.permute.xlu0 %3213
      %3216 = vset.pattern.permute.xlu0 6
      %3217 = vperm.xlu0 %3216, %v1683
      %v3218 = vpop.permute.xlu0 %3217
      %3220 = vset.pattern.permute.xlu0 6
      %3221 = vperm.xlu0 %3220, %v1687
      %v3222 = vpop.permute.xlu0 %3221
      %3224 = vset.pattern.permute.xlu0 6
      %3225 = vperm.xlu0 %3224, %v1691
      %v3226 = vpop.permute.xlu0 %3225
      %3228 = vset.pattern.permute.xlu0 6
      %3229 = vperm.xlu0 %3228, %v1695
      %v3230 = vpop.permute.xlu0 %3229
      %3232 = vset.pattern.permute.xlu0 6
      %3233 = vperm.xlu0 %3232, %v1699
      %v3234 = vpop.permute.xlu0 %3233
      %3236 = vset.pattern.permute.xlu0 6
      %3237 = vperm.xlu0 %3236, %v1703
      %v3238 = vpop.permute.xlu0 %3237
      %3240 = vset.pattern.permute.xlu0 6
      %3241 = vperm.xlu0 %3240, %v1707
      %v3242 = vpop.permute.xlu0 %3241
      %3244 = vset.pattern.permute.xlu0 6
      %3245 = vperm.xlu0 %3244, %v1711
      %v3246 = vpop.permute.xlu0 %3245
      %3248 = vset.pattern.permute.xlu0 6
      %3249 = vperm.xlu0 %3248, %v1715
      %v3250 = vpop.permute.xlu0 %3249
      %v3252 = vmul.f32 %v3156, %v3190
      %v3253 = vmul.f32 %v3157, %v3190
      %v3254 = vmul.f32 %v3158, %v3194
      %v3255 = vmul.f32 %v3159, %v3194
      %v3256 = vmul.f32 %v3160, %v3198
      %v3257 = vmul.f32 %v3161, %v3198
      %v3258 = vmul.f32 %v3162, %v3202
      %v3259 = vmul.f32 %v3163, %v3202
      %v3260 = vmul.f32 %v3164, %v3206
      %v3261 = vmul.f32 %v3165, %v3206
      %v3262 = vmul.f32 %v3166, %v3210
      %v3263 = vmul.f32 %v3167, %v3210
      %v3264 = vmul.f32 %v3168, %v3214
      %v3265 = vmul.f32 %v3169, %v3214
      %v3266 = vmul.f32 %v3170, %v3218
      %v3267 = vmul.f32 %v3171, %v3218
      %v3268 = vmul.f32 %v3172, %v3222
      %v3269 = vmul.f32 %v3173, %v3222
      %v3270 = vmul.f32 %v3174, %v3226
      %v3271 = vmul.f32 %v3175, %v3226
      %v3272 = vmul.f32 %v3176, %v3230
      %v3273 = vmul.f32 %v3177, %v3230
      %v3274 = vmul.f32 %v3178, %v3234
      %v3275 = vmul.f32 %v3179, %v3234
      %v3276 = vmul.f32 %v3180, %v3238
      %v3277 = vmul.f32 %v3181, %v3238
      %v3278 = vmul.f32 %v3182, %v3242
      %v3279 = vmul.f32 %v3183, %v3242
      %v3280 = vmul.f32 %v3184, %v3246
      %v3281 = vmul.f32 %v3185, %v3246
      %v3282 = vmul.f32 %v3186, %v3250
      %v3283 = vmul.f32 %v3187, %v3250
      %v3284 = vadd.f32 %v3124, %v3252
      %v3285 = vadd.f32 %v3125, %v3253
      %v3286 = vadd.f32 %v3126, %v3254
      %v3287 = vadd.f32 %v3127, %v3255
      %v3288 = vadd.f32 %v3128, %v3256
      %v3289 = vadd.f32 %v3129, %v3257
      %v3290 = vadd.f32 %v3130, %v3258
      %v3291 = vadd.f32 %v3131, %v3259
      %v3292 = vadd.f32 %v3132, %v3260
      %v3293 = vadd.f32 %v3133, %v3261
      %v3294 = vadd.f32 %v3134, %v3262
      %v3295 = vadd.f32 %v3135, %v3263
      %v3296 = vadd.f32 %v3136, %v3264
      %v3297 = vadd.f32 %v3137, %v3265
      %v3298 = vadd.f32 %v3138, %v3266
      %v3299 = vadd.f32 %v3139, %v3267
      %v3300 = vadd.f32 %v3140, %v3268
      %v3301 = vadd.f32 %v3141, %v3269
      %v3302 = vadd.f32 %v3142, %v3270
      %v3303 = vadd.f32 %v3143, %v3271
      %v3304 = vadd.f32 %v3144, %v3272
      %v3305 = vadd.f32 %v3145, %v3273
      %v3306 = vadd.f32 %v3146, %v3274
      %v3307 = vadd.f32 %v3147, %v3275
      %v3308 = vadd.f32 %v3148, %v3276
      %v3309 = vadd.f32 %v3149, %v3277
      %v3310 = vadd.f32 %v3150, %v3278
      %v3311 = vadd.f32 %v3151, %v3279
      %v3312 = vadd.f32 %v3152, %v3280
      %v3313 = vadd.f32 %v3153, %v3281
      %v3314 = vadd.f32 %v3154, %v3282
      %v3315 = vadd.f32 %v3155, %v3283
      %v3316 = vld [vmem:[#allocation2 + $0x2] sm:$0xff]
      %v3317 = vld [vmem:[#allocation2 + $0xa] sm:$0xff]
      %v3318 = vld [vmem:[#allocation2 + $0x1a] sm:$0xff]
      %v3319 = vld [vmem:[#allocation2 + $0x22] sm:$0xff]
      %v3320 = vld [vmem:[#allocation2 + $0x32] sm:$0xff]
      %v3321 = vld [vmem:[#allocation2 + $0x3a] sm:$0xff]
      %v3322 = vld [vmem:[#allocation2 + $0x4a] sm:$0xff]
      %v3323 = vld [vmem:[#allocation2 + $0x52] sm:$0xff]
      %v3324 = vld [vmem:[#allocation2 + $0x62] sm:$0xff]
      %v3325 = vld [vmem:[#allocation2 + $0x6a] sm:$0xff]
      %v3326 = vld [vmem:[#allocation2 + $0x7a] sm:$0xff]
      %v3327 = vld [vmem:[#allocation2 + $0x82] sm:$0xff]
      %v3328 = vld [vmem:[#allocation2 + $0x92] sm:$0xff]
      %v3329 = vld [vmem:[#allocation2 + $0x9a] sm:$0xff]
      %v3330 = vld [vmem:[#allocation2 + $0xaa] sm:$0xff]
      %v3331 = vld [vmem:[#allocation2 + $0xb2] sm:$0xff]
      %v3332 = vld [vmem:[#allocation2 + $0xc2] sm:$0xff]
      %v3333 = vld [vmem:[#allocation2 + $0xca] sm:$0xff]
      %v3334 = vld [vmem:[#allocation2 + $0xda] sm:$0xff]
      %v3335 = vld [vmem:[#allocation2 + $0xe2] sm:$0xff]
      %v3336 = vld [vmem:[#allocation2 + $0xf2] sm:$0xff]
      %v3337 = vld [vmem:[#allocation2 + $0xfa] sm:$0xff]
      %v3338 = vld [vmem:[#allocation2 + $0x10a] sm:$0xff]
      %v3339 = vld [vmem:[#allocation2 + $0x112] sm:$0xff]
      %v3340 = vld [vmem:[#allocation2 + $0x122] sm:$0xff]
      %v3341 = vld [vmem:[#allocation2 + $0x12a] sm:$0xff]
      %v3342 = vld [vmem:[#allocation2 + $0x13a] sm:$0xff]
      %v3343 = vld [vmem:[#allocation2 + $0x142] sm:$0xff]
      %v3344 = vld [vmem:[#allocation2 + $0x152] sm:$0xff]
      %v3345 = vld [vmem:[#allocation2 + $0x15a] sm:$0xff]
      %v3346 = vld [vmem:[#allocation2 + $0x16a] sm:$0xff]
      %v3347 = vld [vmem:[#allocation2 + $0x172] sm:$0xff]
      %3348 = vset.pattern.permute.xlu0 7
      %3349 = vperm.xlu0 %3348, %v1655
      %v3350 = vpop.permute.xlu0 %3349
      %3352 = vset.pattern.permute.xlu0 7
      %3353 = vperm.xlu0 %3352, %v1659
      %v3354 = vpop.permute.xlu0 %3353
      %3356 = vset.pattern.permute.xlu0 7
      %3357 = vperm.xlu0 %3356, %v1663
      %v3358 = vpop.permute.xlu0 %3357
      %3360 = vset.pattern.permute.xlu0 7
      %3361 = vperm.xlu0 %3360, %v1667
      %v3362 = vpop.permute.xlu0 %3361
      %3364 = vset.pattern.permute.xlu0 7
      %3365 = vperm.xlu0 %3364, %v1671
      %v3366 = vpop.permute.xlu0 %3365
      %3368 = vset.pattern.permute.xlu0 7
      %3369 = vperm.xlu0 %3368, %v1675
      %v3370 = vpop.permute.xlu0 %3369
      %3372 = vset.pattern.permute.xlu0 7
      %3373 = vperm.xlu0 %3372, %v1679
      %v3374 = vpop.permute.xlu0 %3373
      %3376 = vset.pattern.permute.xlu0 7
      %3377 = vperm.xlu0 %3376, %v1683
      %v3378 = vpop.permute.xlu0 %3377
      %3380 = vset.pattern.permute.xlu0 7
      %3381 = vperm.xlu0 %3380, %v1687
      %v3382 = vpop.permute.xlu0 %3381
      %3384 = vset.pattern.permute.xlu0 7
      %3385 = vperm.xlu0 %3384, %v1691
      %v3386 = vpop.permute.xlu0 %3385
      %3388 = vset.pattern.permute.xlu0 7
      %3389 = vperm.xlu0 %3388, %v1695
      %v3390 = vpop.permute.xlu0 %3389
      %3392 = vset.pattern.permute.xlu0 7
      %3393 = vperm.xlu0 %3392, %v1699
      %v3394 = vpop.permute.xlu0 %3393
      %3396 = vset.pattern.permute.xlu0 7
      %3397 = vperm.xlu0 %3396, %v1703
      %v3398 = vpop.permute.xlu0 %3397
      %3400 = vset.pattern.permute.xlu0 7
      %3401 = vperm.xlu0 %3400, %v1707
      %v3402 = vpop.permute.xlu0 %3401
      %3404 = vset.pattern.permute.xlu0 7
      %3405 = vperm.xlu0 %3404, %v1711
      %v3406 = vpop.permute.xlu0 %3405
      %3408 = vset.pattern.permute.xlu0 7
      %3409 = vperm.xlu0 %3408, %v1715
      %v3410 = vpop.permute.xlu0 %3409
      %v3412 = vmul.f32 %v3316, %v3350
      %v3413 = vmul.f32 %v3317, %v3350
      %v3414 = vmul.f32 %v3318, %v3354
      %v3415 = vmul.f32 %v3319, %v3354
      %v3416 = vmul.f32 %v3320, %v3358
      %v3417 = vmul.f32 %v3321, %v3358
      %v3418 = vmul.f32 %v3322, %v3362
      %v3419 = vmul.f32 %v3323, %v3362
      %v3420 = vmul.f32 %v3324, %v3366
      %v3421 = vmul.f32 %v3325, %v3366
      %v3422 = vmul.f32 %v3326, %v3370
      %v3423 = vmul.f32 %v3327, %v3370
      %v3424 = vmul.f32 %v3328, %v3374
      %v3425 = vmul.f32 %v3329, %v3374
      %v3426 = vmul.f32 %v3330, %v3378
      %v3427 = vmul.f32 %v3331, %v3378
      %v3428 = vmul.f32 %v3332, %v3382
      %v3429 = vmul.f32 %v3333, %v3382
      %v3430 = vmul.f32 %v3334, %v3386
      %v3431 = vmul.f32 %v3335, %v3386
      %v3432 = vmul.f32 %v3336, %v3390
      %v3433 = vmul.f32 %v3337, %v3390
      %v3434 = vmul.f32 %v3338, %v3394
      %v3435 = vmul.f32 %v3339, %v3394
      %v3436 = vmul.f32 %v3340, %v3398
      %v3437 = vmul.f32 %v3341, %v3398
      %v3438 = vmul.f32 %v3342, %v3402
      %v3439 = vmul.f32 %v3343, %v3402
      %v3440 = vmul.f32 %v3344, %v3406
      %v3441 = vmul.f32 %v3345, %v3406
      %v3442 = vmul.f32 %v3346, %v3410
      %v3443 = vmul.f32 %v3347, %v3410
      %3476 = vrot.lane.b32.xlu0 %v3412, 127
      %v3477 = vpop.permute.xlu0 %3476
      %3478 = vrot.lane.b32.xlu0 %v3413, 127
      %v3479 = vpop.permute.xlu0 %3478
      %3480 = vrot.lane.b32.xlu0 %v3414, 127
      %v3481 = vpop.permute.xlu0 %3480
      %3482 = vrot.lane.b32.xlu0 %v3415, 127
      %v3483 = vpop.permute.xlu0 %3482
      %3484 = vrot.lane.b32.xlu0 %v3416, 127
      %v3485 = vpop.permute.xlu0 %3484
      %3486 = vrot.lane.b32.xlu0 %v3417, 127
      %v3487 = vpop.permute.xlu0 %3486
      %3488 = vrot.lane.b32.xlu0 %v3418, 127
      %v3489 = vpop.permute.xlu0 %3488
      %3490 = vrot.lane.b32.xlu0 %v3419, 127
      %v3491 = vpop.permute.xlu0 %3490
      %3492 = vrot.lane.b32.xlu0 %v3420, 127
      %v3493 = vpop.permute.xlu0 %3492
      %3494 = vrot.lane.b32.xlu0 %v3421, 127
      %v3495 = vpop.permute.xlu0 %3494
      %3496 = vrot.lane.b32.xlu0 %v3422, 127
      %v3497 = vpop.permute.xlu0 %3496
      %3498 = vrot.lane.b32.xlu0 %v3423, 127
      %v3499 = vpop.permute.xlu0 %3498
      %3500 = vrot.lane.b32.xlu0 %v3424, 127
      %v3501 = vpop.permute.xlu0 %3500
      %3502 = vrot.lane.b32.xlu0 %v3425, 127
      %v3503 = vpop.permute.xlu0 %3502
      %3504 = vrot.lane.b32.xlu0 %v3426, 127
      %v3505 = vpop.permute.xlu0 %3504
      %3506 = vrot.lane.b32.xlu0 %v3427, 127
      %v3507 = vpop.permute.xlu0 %3506
      %3508 = vrot.lane.b32.xlu0 %v3428, 127
      %v3509 = vpop.permute.xlu0 %3508
      %3510 = vrot.lane.b32.xlu0 %v3429, 127
      %v3511 = vpop.permute.xlu0 %3510
      %3512 = vrot.lane.b32.xlu0 %v3430, 127
      %v3513 = vpop.permute.xlu0 %3512
      %3514 = vrot.lane.b32.xlu0 %v3431, 127
      %v3515 = vpop.permute.xlu0 %3514
      %3516 = vrot.lane.b32.xlu0 %v3432, 127
      %v3517 = vpop.permute.xlu0 %3516
      %3518 = vrot.lane.b32.xlu0 %v3433, 127
      %v3519 = vpop.permute.xlu0 %3518
      %3520 = vrot.lane.b32.xlu0 %v3434, 127
      %v3521 = vpop.permute.xlu0 %3520
      %3522 = vrot.lane.b32.xlu0 %v3435, 127
      %v3523 = vpop.permute.xlu0 %3522
      %3524 = vrot.lane.b32.xlu0 %v3436, 127
      %v3525 = vpop.permute.xlu0 %3524
      %3526 = vrot.lane.b32.xlu0 %v3437, 127
      %v3527 = vpop.permute.xlu0 %3526
      %3528 = vrot.lane.b32.xlu0 %v3438, 127
      %v3529 = vpop.permute.xlu0 %3528
      %3530 = vrot.lane.b32.xlu0 %v3439, 127
      %v3531 = vpop.permute.xlu0 %3530
      %3532 = vrot.lane.b32.xlu0 %v3440, 127
      %v3533 = vpop.permute.xlu0 %3532
      %3534 = vrot.lane.b32.xlu0 %v3441, 127
      %v3535 = vpop.permute.xlu0 %3534
      %3536 = vrot.lane.b32.xlu0 %v3442, 127
      %v3537 = vpop.permute.xlu0 %3536
      %3538 = vrot.lane.b32.xlu0 %v3443, 127
      %v3539 = vpop.permute.xlu0 %3538
      %v3572 = vadd.f32 %v3284, %v3477
      %v3573 = vadd.f32 %v3285, %v3479
      %v3574 = vadd.f32 %v3286, %v3481
      %v3575 = vadd.f32 %v3287, %v3483
      %v3576 = vadd.f32 %v3288, %v3485
      %v3577 = vadd.f32 %v3289, %v3487
      %v3578 = vadd.f32 %v3290, %v3489
      %v3579 = vadd.f32 %v3291, %v3491
      %v3580 = vadd.f32 %v3292, %v3493
      %v3581 = vadd.f32 %v3293, %v3495
      %v3582 = vadd.f32 %v3294, %v3497
      %v3583 = vadd.f32 %v3295, %v3499
      %v3584 = vadd.f32 %v3296, %v3501
      %v3585 = vadd.f32 %v3297, %v3503
      %v3586 = vadd.f32 %v3298, %v3505
      %v3587 = vadd.f32 %v3299, %v3507
      %v3588 = vadd.f32 %v3300, %v3509
      %v3589 = vadd.f32 %v3301, %v3511
      %v3590 = vadd.f32 %v3302, %v3513
      %v3591 = vadd.f32 %v3303, %v3515
      %v3592 = vadd.f32 %v3304, %v3517
      %v3593 = vadd.f32 %v3305, %v3519
      %v3594 = vadd.f32 %v3306, %v3521
      %v3595 = vadd.f32 %v3307, %v3523
      %v3596 = vadd.f32 %v3308, %v3525
      %v3597 = vadd.f32 %v3309, %v3527
      %v3598 = vadd.f32 %v3310, %v3529
      %v3599 = vadd.f32 %v3311, %v3531
      %v3600 = vadd.f32 %v3312, %v3533
      %v3601 = vadd.f32 %v3313, %v3535
      %v3602 = vadd.f32 %v3314, %v3537
      %v3603 = vadd.f32 %v3315, %v3539
      %v3604 = vld [vmem:[#allocation2 + $0x2] sm:$0xff]
      %v3605 = vld [vmem:[#allocation2 + $0xa] sm:$0xff]
      %v3606 = vld [vmem:[#allocation2 + $0x1a] sm:$0xff]
      %v3607 = vld [vmem:[#allocation2 + $0x22] sm:$0xff]
      %v3608 = vld [vmem:[#allocation2 + $0x32] sm:$0xff]
      %v3609 = vld [vmem:[#allocation2 + $0x3a] sm:$0xff]
      %v3610 = vld [vmem:[#allocation2 + $0x4a] sm:$0xff]
      %v3611 = vld [vmem:[#allocation2 + $0x52] sm:$0xff]
      %v3612 = vld [vmem:[#allocation2 + $0x62] sm:$0xff]
      %v3613 = vld [vmem:[#allocation2 + $0x6a] sm:$0xff]
      %v3614 = vld [vmem:[#allocation2 + $0x7a] sm:$0xff]
      %v3615 = vld [vmem:[#allocation2 + $0x82] sm:$0xff]
      %v3616 = vld [vmem:[#allocation2 + $0x92] sm:$0xff]
      %v3617 = vld [vmem:[#allocation2 + $0x9a] sm:$0xff]
      %v3618 = vld [vmem:[#allocation2 + $0xaa] sm:$0xff]
      %v3619 = vld [vmem:[#allocation2 + $0xb2] sm:$0xff]
      %v3620 = vld [vmem:[#allocation2 + $0xc2] sm:$0xff]
      %v3621 = vld [vmem:[#allocation2 + $0xca] sm:$0xff]
      %v3622 = vld [vmem:[#allocation2 + $0xda] sm:$0xff]
      %v3623 = vld [vmem:[#allocation2 + $0xe2] sm:$0xff]
      %v3624 = vld [vmem:[#allocation2 + $0xf2] sm:$0xff]
      %v3625 = vld [vmem:[#allocation2 + $0xfa] sm:$0xff]
      %v3626 = vld [vmem:[#allocation2 + $0x10a] sm:$0xff]
      %v3627 = vld [vmem:[#allocation2 + $0x112] sm:$0xff]
      %v3628 = vld [vmem:[#allocation2 + $0x122] sm:$0xff]
      %v3629 = vld [vmem:[#allocation2 + $0x12a] sm:$0xff]
      %v3630 = vld [vmem:[#allocation2 + $0x13a] sm:$0xff]
      %v3631 = vld [vmem:[#allocation2 + $0x142] sm:$0xff]
      %v3632 = vld [vmem:[#allocation2 + $0x152] sm:$0xff]
      %v3633 = vld [vmem:[#allocation2 + $0x15a] sm:$0xff]
      %v3634 = vld [vmem:[#allocation2 + $0x16a] sm:$0xff]
      %v3635 = vld [vmem:[#allocation2 + $0x172] sm:$0xff]
      %3636 = vset.pattern.permute.xlu0 8
      %3637 = vperm.xlu0 %3636, %v1655
      %v3638 = vpop.permute.xlu0 %3637
      %3640 = vset.pattern.permute.xlu0 8
      %3641 = vperm.xlu0 %3640, %v1659
      %v3642 = vpop.permute.xlu0 %3641
      %3644 = vset.pattern.permute.xlu0 8
      %3645 = vperm.xlu0 %3644, %v1663
      %v3646 = vpop.permute.xlu0 %3645
      %3648 = vset.pattern.permute.xlu0 8
      %3649 = vperm.xlu0 %3648, %v1667
      %v3650 = vpop.permute.xlu0 %3649
      %3652 = vset.pattern.permute.xlu0 8
      %3653 = vperm.xlu0 %3652, %v1671
      %v3654 = vpop.permute.xlu0 %3653
      %3656 = vset.pattern.permute.xlu0 8
      %3657 = vperm.xlu0 %3656, %v1675
      %v3658 = vpop.permute.xlu0 %3657
      %3660 = vset.pattern.permute.xlu0 8
      %3661 = vperm.xlu0 %3660, %v1679
      %v3662 = vpop.permute.xlu0 %3661
      %3664 = vset.pattern.permute.xlu0 8
      %3665 = vperm.xlu0 %3664, %v1683
      %v3666 = vpop.permute.xlu0 %3665
      %3668 = vset.pattern.permute.xlu0 8
      %3669 = vperm.xlu0 %3668, %v1687
      %v3670 = vpop.permute.xlu0 %3669
      %3672 = vset.pattern.permute.xlu0 8
      %3673 = vperm.xlu0 %3672, %v1691
      %v3674 = vpop.permute.xlu0 %3673
      %3676 = vset.pattern.permute.xlu0 8
      %3677 = vperm.xlu0 %3676, %v1695
      %v3678 = vpop.permute.xlu0 %3677
      %3680 = vset.pattern.permute.xlu0 8
      %3681 = vperm.xlu0 %3680, %v1699
      %v3682 = vpop.permute.xlu0 %3681
      %3684 = vset.pattern.permute.xlu0 8
      %3685 = vperm.xlu0 %3684, %v1703
      %v3686 = vpop.permute.xlu0 %3685
      %3688 = vset.pattern.permute.xlu0 8
      %3689 = vperm.xlu0 %3688, %v1707
      %v3690 = vpop.permute.xlu0 %3689
      %3692 = vset.pattern.permute.xlu0 8
      %3693 = vperm.xlu0 %3692, %v1711
      %v3694 = vpop.permute.xlu0 %3693
      %3696 = vset.pattern.permute.xlu0 8
      %3697 = vperm.xlu0 %3696, %v1715
      %v3698 = vpop.permute.xlu0 %3697
      %v3700 = vmul.f32 %v3604, %v3638
      %v3701 = vmul.f32 %v3605, %v3638
      %v3702 = vmul.f32 %v3606, %v3642
      %v3703 = vmul.f32 %v3607, %v3642
      %v3704 = vmul.f32 %v3608, %v3646
      %v3705 = vmul.f32 %v3609, %v3646
      %v3706 = vmul.f32 %v3610, %v3650
      %v3707 = vmul.f32 %v3611, %v3650
      %v3708 = vmul.f32 %v3612, %v3654
      %v3709 = vmul.f32 %v3613, %v3654
      %v3710 = vmul.f32 %v3614, %v3658
      %v3711 = vmul.f32 %v3615, %v3658
      %v3712 = vmul.f32 %v3616, %v3662
      %v3713 = vmul.f32 %v3617, %v3662
      %v3714 = vmul.f32 %v3618, %v3666
      %v3715 = vmul.f32 %v3619, %v3666
      %v3716 = vmul.f32 %v3620, %v3670
      %v3717 = vmul.f32 %v3621, %v3670
      %v3718 = vmul.f32 %v3622, %v3674
      %v3719 = vmul.f32 %v3623, %v3674
      %v3720 = vmul.f32 %v3624, %v3678
      %v3721 = vmul.f32 %v3625, %v3678
      %v3722 = vmul.f32 %v3626, %v3682
      %v3723 = vmul.f32 %v3627, %v3682
      %v3724 = vmul.f32 %v3628, %v3686
      %v3725 = vmul.f32 %v3629, %v3686
      %v3726 = vmul.f32 %v3630, %v3690
      %v3727 = vmul.f32 %v3631, %v3690
      %v3728 = vmul.f32 %v3632, %v3694
      %v3729 = vmul.f32 %v3633, %v3694
      %v3730 = vmul.f32 %v3634, %v3698
      %v3731 = vmul.f32 %v3635, %v3698
      %3764 = vrot.lane.b32.xlu0 %v3700, 126
      %v3765 = vpop.permute.xlu0 %3764
      %3766 = vrot.lane.b32.xlu0 %v3701, 126
      %v3767 = vpop.permute.xlu0 %3766
      %3768 = vrot.lane.b32.xlu0 %v3702, 126
      %v3769 = vpop.permute.xlu0 %3768
      %3770 = vrot.lane.b32.xlu0 %v3703, 126
      %v3771 = vpop.permute.xlu0 %3770
      %3772 = vrot.lane.b32.xlu0 %v3704, 126
      %v3773 = vpop.permute.xlu0 %3772
      %3774 = vrot.lane.b32.xlu0 %v3705, 126
      %v3775 = vpop.permute.xlu0 %3774
      %3776 = vrot.lane.b32.xlu0 %v3706, 126
      %v3777 = vpop.permute.xlu0 %3776
      %3778 = vrot.lane.b32.xlu0 %v3707, 126
      %v3779 = vpop.permute.xlu0 %3778
      %3780 = vrot.lane.b32.xlu0 %v3708, 126
      %v3781 = vpop.permute.xlu0 %3780
      %3782 = vrot.lane.b32.xlu0 %v3709, 126
      %v3783 = vpop.permute.xlu0 %3782
      %3784 = vrot.lane.b32.xlu0 %v3710, 126
      %v3785 = vpop.permute.xlu0 %3784
      %3786 = vrot.lane.b32.xlu0 %v3711, 126
      %v3787 = vpop.permute.xlu0 %3786
      %3788 = vrot.lane.b32.xlu0 %v3712, 126
      %v3789 = vpop.permute.xlu0 %3788
      %3790 = vrot.lane.b32.xlu0 %v3713, 126
      %v3791 = vpop.permute.xlu0 %3790
      %3792 = vrot.lane.b32.xlu0 %v3714, 126
      %v3793 = vpop.permute.xlu0 %3792
      %3794 = vrot.lane.b32.xlu0 %v3715, 126
      %v3795 = vpop.permute.xlu0 %3794
      %3796 = vrot.lane.b32.xlu0 %v3716, 126
      %v3797 = vpop.permute.xlu0 %3796
      %3798 = vrot.lane.b32.xlu0 %v3717, 126
      %v3799 = vpop.permute.xlu0 %3798
      %3800 = vrot.lane.b32.xlu0 %v3718, 126
      %v3801 = vpop.permute.xlu0 %3800
      %3802 = vrot.lane.b32.xlu0 %v3719, 126
      %v3803 = vpop.permute.xlu0 %3802
      %3804 = vrot.lane.b32.xlu0 %v3720, 126
      %v3805 = vpop.permute.xlu0 %3804
      %3806 = vrot.lane.b32.xlu0 %v3721, 126
      %v3807 = vpop.permute.xlu0 %3806
      %3808 = vrot.lane.b32.xlu0 %v3722, 126
      %v3809 = vpop.permute.xlu0 %3808
      %3810 = vrot.lane.b32.xlu0 %v3723, 126
      %v3811 = vpop.permute.xlu0 %3810
      %3812 = vrot.lane.b32.xlu0 %v3724, 126
      %v3813 = vpop.permute.xlu0 %3812
      %3814 = vrot.lane.b32.xlu0 %v3725, 126
      %v3815 = vpop.permute.xlu0 %3814
      %3816 = vrot.lane.b32.xlu0 %v3726, 126
      %v3817 = vpop.permute.xlu0 %3816
      %3818 = vrot.lane.b32.xlu0 %v3727, 126
      %v3819 = vpop.permute.xlu0 %3818
      %3820 = vrot.lane.b32.xlu0 %v3728, 126
      %v3821 = vpop.permute.xlu0 %3820
      %3822 = vrot.lane.b32.xlu0 %v3729, 126
      %v3823 = vpop.permute.xlu0 %3822
      %3824 = vrot.lane.b32.xlu0 %v3730, 126
      %v3825 = vpop.permute.xlu0 %3824
      %3826 = vrot.lane.b32.xlu0 %v3731, 126
      %v3827 = vpop.permute.xlu0 %3826
      %v3860 = vadd.f32 %v3572, %v3765
      %v3861 = vadd.f32 %v3573, %v3767
      %v3862 = vadd.f32 %v3574, %v3769
      %v3863 = vadd.f32 %v3575, %v3771
      %v3864 = vadd.f32 %v3576, %v3773
      %v3865 = vadd.f32 %v3577, %v3775
      %v3866 = vadd.f32 %v3578, %v3777
      %v3867 = vadd.f32 %v3579, %v3779
      %v3868 = vadd.f32 %v3580, %v3781
      %v3869 = vadd.f32 %v3581, %v3783
      %v3870 = vadd.f32 %v3582, %v3785
      %v3871 = vadd.f32 %v3583, %v3787
      %v3872 = vadd.f32 %v3584, %v3789
      %v3873 = vadd.f32 %v3585, %v3791
      %v3874 = vadd.f32 %v3586, %v3793
      %v3875 = vadd.f32 %v3587, %v3795
      %v3876 = vadd.f32 %v3588, %v3797
      %v3877 = vadd.f32 %v3589, %v3799
      %v3878 = vadd.f32 %v3590, %v3801
      %v3879 = vadd.f32 %v3591, %v3803
      %v3880 = vadd.f32 %v3592, %v3805
      %v3881 = vadd.f32 %v3593, %v3807
      %v3882 = vadd.f32 %v3594, %v3809
      %v3883 = vadd.f32 %v3595, %v3811
      %v3884 = vadd.f32 %v3596, %v3813
      %v3885 = vadd.f32 %v3597, %v3815
      %v3886 = vadd.f32 %v3598, %v3817
      %v3887 = vadd.f32 %v3599, %v3819
      %v3888 = vadd.f32 %v3600, %v3821
      %v3889 = vadd.f32 %v3601, %v3823
      %v3890 = vadd.f32 %v3602, %v3825
      %v3891 = vadd.f32 %v3603, %v3827
      %v3892 = vcombine.low %v3860, %v3864
      %v3893 = vcombine.high %v3860, %v3864
      %v3895 = vunpack.c.l.s4 1983009808
      %v3896 = vunpack.c.0.s8 %v3895
      %v3897 = vlaneseq
      %v3898 = vshrl.u32 %v3897, 7
      %v3899 = vsub.s32 %v3896, %v3898
      %v3900 = vrot.slane %v3892, %v3899
      %v3902 = vunpack.c.l.s4 1983009808
      %v3903 = vunpack.c.0.s8 %v3902
      %v3904 = vlaneseq
      %v3905 = vshrl.u32 %v3904, 7
      %v3906 = vsub.s32 %v3903, %v3905
      %v3907 = vrot.slane %v3893, %v3906
      %v3908 = vcombine.low %v3862, %v3866
      %v3909 = vcombine.high %v3862, %v3866
      %v3911 = vunpack.c.l.s4 1983009808
      %v3912 = vunpack.c.0.s8 %v3911
      %v3913 = vlaneseq
      %v3914 = vshrl.u32 %v3913, 7
      %v3915 = vsub.s32 %v3912, %v3914
      %v3916 = vrot.slane %v3908, %v3915
      %v3918 = vunpack.c.l.s4 1983009808
      %v3919 = vunpack.c.0.s8 %v3918
      %v3920 = vlaneseq
      %v3921 = vshrl.u32 %v3920, 7
      %v3922 = vsub.s32 %v3919, %v3921
      %v3923 = vrot.slane %v3909, %v3922
      %v3924 = vcombine.low %v3868, %v3872
      %v3925 = vcombine.high %v3868, %v3872
      %v3927 = vunpack.c.l.s4 1983009808
      %v3928 = vunpack.c.0.s8 %v3927
      %v3929 = vlaneseq
      %v3930 = vshrl.u32 %v3929, 7
      %v3931 = vsub.s32 %v3928, %v3930
      %v3932 = vrot.slane %v3924, %v3931
      %v3934 = vunpack.c.l.s4 1983009808
      %v3935 = vunpack.c.0.s8 %v3934
      %v3936 = vlaneseq
      %v3937 = vshrl.u32 %v3936, 7
      %v3938 = vsub.s32 %v3935, %v3937
      %v3939 = vrot.slane %v3925, %v3938
      %v3940 = vcombine.low %v3870, %v3874
      %v3941 = vcombine.high %v3870, %v3874
      %v3943 = vunpack.c.l.s4 1983009808
      %v3944 = vunpack.c.0.s8 %v3943
      %v3945 = vlaneseq
      %v3946 = vshrl.u32 %v3945, 7
      %v3947 = vsub.s32 %v3944, %v3946
      %v3948 = vrot.slane %v3940, %v3947
      %v3950 = vunpack.c.l.s4 1983009808
      %v3951 = vunpack.c.0.s8 %v3950
      %v3952 = vlaneseq
      %v3953 = vshrl.u32 %v3952, 7
      %v3954 = vsub.s32 %v3951, %v3953
      %v3955 = vrot.slane %v3941, %v3954
      %v3956 = vcombine.low %v3900, %v3916
      %v3957 = vcombine.high %v3900, %v3916
      %v3959 = vunpack.c.l.s4 1934713408
      %v3960 = vunpack.c.0.s8 %v3959
      %v3961 = vlaneseq
      %v3962 = vshrl.u32 %v3961, 7
      %v3963 = vsub.s32 %v3960, %v3962
      %v3964 = vrot.slane %v3956, %v3963
      %v3966 = vunpack.c.l.s4 1934713408
      %v3967 = vunpack.c.0.s8 %v3966
      %v3968 = vlaneseq
      %v3969 = vshrl.u32 %v3968, 7
      %v3970 = vsub.s32 %v3967, %v3969
      %v3971 = vrot.slane %v3957, %v3970
      %v3972 = vcombine.low %v3907, %v3923
      %v3973 = vcombine.high %v3907, %v3923
      %v3975 = vunpack.c.l.s4 1934713408
      %v3976 = vunpack.c.0.s8 %v3975
      %v3977 = vlaneseq
      %v3978 = vshrl.u32 %v3977, 7
      %v3979 = vsub.s32 %v3976, %v3978
      %v3980 = vrot.slane %v3972, %v3979
      %v3982 = vunpack.c.l.s4 1934713408
      %v3983 = vunpack.c.0.s8 %v3982
      %v3984 = vlaneseq
      %v3985 = vshrl.u32 %v3984, 7
      %v3986 = vsub.s32 %v3983, %v3985
      %v3987 = vrot.slane %v3973, %v3986
      %v3988 = vcombine.low %v3932, %v3948
      %v3989 = vcombine.high %v3932, %v3948
      %v3991 = vunpack.c.l.s4 1934713408
      %v3992 = vunpack.c.0.s8 %v3991
      %v3993 = vlaneseq
      %v3994 = vshrl.u32 %v3993, 7
      %v3995 = vsub.s32 %v3992, %v3994
      %v3996 = vrot.slane %v3988, %v3995
      %v3998 = vunpack.c.l.s4 1934713408
      %v3999 = vunpack.c.0.s8 %v3998
      %v4000 = vlaneseq
      %v4001 = vshrl.u32 %v4000, 7
      %v4002 = vsub.s32 %v3999, %v4001
      %v4003 = vrot.slane %v3989, %v4002
      %v4004 = vcombine.low %v3939, %v3955
      %v4005 = vcombine.high %v3939, %v3955
      %v4007 = vunpack.c.l.s4 1934713408
      %v4008 = vunpack.c.0.s8 %v4007
      %v4009 = vlaneseq
      %v4010 = vshrl.u32 %v4009, 7
      %v4011 = vsub.s32 %v4008, %v4010
      %v4012 = vrot.slane %v4004, %v4011
      %v4014 = vunpack.c.l.s4 1934713408
      %v4015 = vunpack.c.0.s8 %v4014
      %v4016 = vlaneseq
      %v4017 = vshrl.u32 %v4016, 7
      %v4018 = vsub.s32 %v4015, %v4017
      %v4019 = vrot.slane %v4005, %v4018
      %v4020 = vcombine.low %v3964, %v3996
      %v4021 = vcombine.high %v3964, %v3996
      %v4022 = vcombine.low %v3971, %v4003
      %v4023 = vcombine.high %v3971, %v4003
      %v4024 = vcombine.low %v3980, %v4012
      %v4025 = vcombine.high %v3980, %v4012
      %v4026 = vcombine.low %v3987, %v4019
      %v4027 = vcombine.high %v3987, %v4019
      %v4028 = vcombine.low %v3876, %v3880
      %v4029 = vcombine.high %v3876, %v3880
      %v4031 = vunpack.c.l.s4 1983009808
      %v4032 = vunpack.c.0.s8 %v4031
      %v4033 = vlaneseq
      %v4034 = vshrl.u32 %v4033, 7
      %v4035 = vsub.s32 %v4032, %v4034
      %v4036 = vrot.slane %v4028, %v4035
      %v4038 = vunpack.c.l.s4 1983009808
      %v4039 = vunpack.c.0.s8 %v4038
      %v4040 = vlaneseq
      %v4041 = vshrl.u32 %v4040, 7
      %v4042 = vsub.s32 %v4039, %v4041
      %v4043 = vrot.slane %v4029, %v4042
      %v4044 = vcombine.low %v3878, %v3882
      %v4045 = vcombine.high %v3878, %v3882
      %v4047 = vunpack.c.l.s4 1983009808
      %v4048 = vunpack.c.0.s8 %v4047
      %v4049 = vlaneseq
      %v4050 = vshrl.u32 %v4049, 7
      %v4051 = vsub.s32 %v4048, %v4050
      %v4052 = vrot.slane %v4044, %v4051
      %v4054 = vunpack.c.l.s4 1983009808
      %v4055 = vunpack.c.0.s8 %v4054
      %v4056 = vlaneseq
      %v4057 = vshrl.u32 %v4056, 7
      %v4058 = vsub.s32 %v4055, %v4057
      %v4059 = vrot.slane %v4045, %v4058
      %v4060 = vcombine.low %v3884, %v3888
      %v4061 = vcombine.high %v3884, %v3888
      %v4063 = vunpack.c.l.s4 1983009808
      %v4064 = vunpack.c.0.s8 %v4063
      %v4065 = vlaneseq
      %v4066 = vshrl.u32 %v4065, 7
      %v4067 = vsub.s32 %v4064, %v4066
      %v4068 = vrot.slane %v4060, %v4067
      %v4070 = vunpack.c.l.s4 1983009808
      %v4071 = vunpack.c.0.s8 %v4070
      %v4072 = vlaneseq
      %v4073 = vshrl.u32 %v4072, 7
      %v4074 = vsub.s32 %v4071, %v4073
      %v4075 = vrot.slane %v4061, %v4074
      %v4076 = vcombine.low %v3886, %v3890
      %v4077 = vcombine.high %v3886, %v3890
      %v4079 = vunpack.c.l.s4 1983009808
      %v4080 = vunpack.c.0.s8 %v4079
      %v4081 = vlaneseq
      %v4082 = vshrl.u32 %v4081, 7
      %v4083 = vsub.s32 %v4080, %v4082
      %v4084 = vrot.slane %v4076, %v4083
      %v4086 = vunpack.c.l.s4 1983009808
      %v4087 = vunpack.c.0.s8 %v4086
      %v4088 = vlaneseq
      %v4089 = vshrl.u32 %v4088, 7
      %v4090 = vsub.s32 %v4087, %v4089
      %v4091 = vrot.slane %v4077, %v4090
      %v4092 = vcombine.low %v4036, %v4052
      %v4093 = vcombine.high %v4036, %v4052
      %v4095 = vunpack.c.l.s4 1934713408
      %v4096 = vunpack.c.0.s8 %v4095
      %v4097 = vlaneseq
      %v4098 = vshrl.u32 %v4097, 7
      %v4099 = vsub.s32 %v4096, %v4098
      %v4100 = vrot.slane %v4092, %v4099
      %v4102 = vunpack.c.l.s4 1934713408
      %v4103 = vunpack.c.0.s8 %v4102
      %v4104 = vlaneseq
      %v4105 = vshrl.u32 %v4104, 7
      %v4106 = vsub.s32 %v4103, %v4105
      %v4107 = vrot.slane %v4093, %v4106
      %v4108 = vcombine.low %v4043, %v4059
      %v4109 = vcombine.high %v4043, %v4059
      %v4111 = vunpack.c.l.s4 1934713408
      %v4112 = vunpack.c.0.s8 %v4111
      %v4113 = vlaneseq
      %v4114 = vshrl.u32 %v4113, 7
      %v4115 = vsub.s32 %v4112, %v4114
      %v4116 = vrot.slane %v4108, %v4115
      %v4118 = vunpack.c.l.s4 1934713408
      %v4119 = vunpack.c.0.s8 %v4118
      %v4120 = vlaneseq
      %v4121 = vshrl.u32 %v4120, 7
      %v4122 = vsub.s32 %v4119, %v4121
      %v4123 = vrot.slane %v4109, %v4122
      %v4124 = vcombine.low %v4068, %v4084
      %v4125 = vcombine.high %v4068, %v4084
      %v4127 = vunpack.c.l.s4 1934713408
      %v4128 = vunpack.c.0.s8 %v4127
      %v4129 = vlaneseq
      %v4130 = vshrl.u32 %v4129, 7
      %v4131 = vsub.s32 %v4128, %v4130
      %v4132 = vrot.slane %v4124, %v4131
      %v4134 = vunpack.c.l.s4 1934713408
      %v4135 = vunpack.c.0.s8 %v4134
      %v4136 = vlaneseq
      %v4137 = vshrl.u32 %v4136, 7
      %v4138 = vsub.s32 %v4135, %v4137
      %v4139 = vrot.slane %v4125, %v4138
      %v4140 = vcombine.low %v4075, %v4091
      %v4141 = vcombine.high %v4075, %v4091
      %v4143 = vunpack.c.l.s4 1934713408
      %v4144 = vunpack.c.0.s8 %v4143
      %v4145 = vlaneseq
      %v4146 = vshrl.u32 %v4145, 7
      %v4147 = vsub.s32 %v4144, %v4146
      %v4148 = vrot.slane %v4140, %v4147
      %v4150 = vunpack.c.l.s4 1934713408
      %v4151 = vunpack.c.0.s8 %v4150
      %v4152 = vlaneseq
      %v4153 = vshrl.u32 %v4152, 7
      %v4154 = vsub.s32 %v4151, %v4153
      %v4155 = vrot.slane %v4141, %v4154
      %v4156 = vcombine.low %v4100, %v4132
      %v4157 = vcombine.high %v4100, %v4132
      %v4158 = vcombine.low %v4107, %v4139
      %v4159 = vcombine.high %v4107, %v4139
      %v4160 = vcombine.low %v4116, %v4148
      %v4161 = vcombine.high %v4116, %v4148
      %v4162 = vcombine.low %v4123, %v4155
      %v4163 = vcombine.high %v4123, %v4155
      %v4164 = vcombine.low %v3861, %v3865
      %v4165 = vcombine.high %v3861, %v3865
      %v4167 = vunpack.c.l.s4 1983009808
      %v4168 = vunpack.c.0.s8 %v4167
      %v4169 = vlaneseq
      %v4170 = vshrl.u32 %v4169, 7
      %v4171 = vsub.s32 %v4168, %v4170
      %v4172 = vrot.slane %v4164, %v4171
      %v4174 = vunpack.c.l.s4 1983009808
      %v4175 = vunpack.c.0.s8 %v4174
      %v4176 = vlaneseq
      %v4177 = vshrl.u32 %v4176, 7
      %v4178 = vsub.s32 %v4175, %v4177
      %v4179 = vrot.slane %v4165, %v4178
      %v4180 = vcombine.low %v3863, %v3867
      %v4181 = vcombine.high %v3863, %v3867
      %v4183 = vunpack.c.l.s4 1983009808
      %v4184 = vunpack.c.0.s8 %v4183
      %v4185 = vlaneseq
      %v4186 = vshrl.u32 %v4185, 7
      %v4187 = vsub.s32 %v4184, %v4186
      %v4188 = vrot.slane %v4180, %v4187
      %v4190 = vunpack.c.l.s4 1983009808
      %v4191 = vunpack.c.0.s8 %v4190
      %v4192 = vlaneseq
      %v4193 = vshrl.u32 %v4192, 7
      %v4194 = vsub.s32 %v4191, %v4193
      %v4195 = vrot.slane %v4181, %v4194
      %v4196 = vcombine.low %v3869, %v3873
      %v4197 = vcombine.high %v3869, %v3873
      %v4199 = vunpack.c.l.s4 1983009808
      %v4200 = vunpack.c.0.s8 %v4199
      %v4201 = vlaneseq
      %v4202 = vshrl.u32 %v4201, 7
      %v4203 = vsub.s32 %v4200, %v4202
      %v4204 = vrot.slane %v4196, %v4203
      %v4206 = vunpack.c.l.s4 1983009808
      %v4207 = vunpack.c.0.s8 %v4206
      %v4208 = vlaneseq
      %v4209 = vshrl.u32 %v4208, 7
      %v4210 = vsub.s32 %v4207, %v4209
      %v4211 = vrot.slane %v4197, %v4210
      %v4212 = vcombine.low %v3871, %v3875
      %v4213 = vcombine.high %v3871, %v3875
      %v4215 = vunpack.c.l.s4 1983009808
      %v4216 = vunpack.c.0.s8 %v4215
      %v4217 = vlaneseq
      %v4218 = vshrl.u32 %v4217, 7
      %v4219 = vsub.s32 %v4216, %v4218
      %v4220 = vrot.slane %v4212, %v4219
      %v4222 = vunpack.c.l.s4 1983009808
      %v4223 = vunpack.c.0.s8 %v4222
      %v4224 = vlaneseq
      %v4225 = vshrl.u32 %v4224, 7
      %v4226 = vsub.s32 %v4223, %v4225
      %v4227 = vrot.slane %v4213, %v4226
      %v4228 = vcombine.low %v4172, %v4188
      %v4229 = vcombine.high %v4172, %v4188
      %v4231 = vunpack.c.l.s4 1934713408
      %v4232 = vunpack.c.0.s8 %v4231
      %v4233 = vlaneseq
      %v4234 = vshrl.u32 %v4233, 7
      %v4235 = vsub.s32 %v4232, %v4234
      %v4236 = vrot.slane %v4228, %v4235
      %v4238 = vunpack.c.l.s4 1934713408
      %v4239 = vunpack.c.0.s8 %v4238
      %v4240 = vlaneseq
      %v4241 = vshrl.u32 %v4240, 7
      %v4242 = vsub.s32 %v4239, %v4241
      %v4243 = vrot.slane %v4229, %v4242
      %v4244 = vcombine.low %v4179, %v4195
      %v4245 = vcombine.high %v4179, %v4195
      %v4247 = vunpack.c.l.s4 1934713408
      %v4248 = vunpack.c.0.s8 %v4247
      %v4249 = vlaneseq
      %v4250 = vshrl.u32 %v4249, 7
      %v4251 = vsub.s32 %v4248, %v4250
      %v4252 = vrot.slane %v4244, %v4251
      %v4254 = vunpack.c.l.s4 1934713408
      %v4255 = vunpack.c.0.s8 %v4254
      %v4256 = vlaneseq
      %v4257 = vshrl.u32 %v4256, 7
      %v4258 = vsub.s32 %v4255, %v4257
      %v4259 = vrot.slane %v4245, %v4258
      %v4260 = vcombine.low %v4204, %v4220
      %v4261 = vcombine.high %v4204, %v4220
      %v4263 = vunpack.c.l.s4 1934713408
      %v4264 = vunpack.c.0.s8 %v4263
      %v4265 = vlaneseq
      %v4266 = vshrl.u32 %v4265, 7
      %v4267 = vsub.s32 %v4264, %v4266
      %v4268 = vrot.slane %v4260, %v4267
      %v4270 = vunpack.c.l.s4 1934713408
      %v4271 = vunpack.c.0.s8 %v4270
      %v4272 = vlaneseq
      %v4273 = vshrl.u32 %v4272, 7
      %v4274 = vsub.s32 %v4271, %v4273
      %v4275 = vrot.slane %v4261, %v4274
      %v4276 = vcombine.low %v4211, %v4227
      %v4277 = vcombine.high %v4211, %v4227
      %v4279 = vunpack.c.l.s4 1934713408
      %v4280 = vunpack.c.0.s8 %v4279
      %v4281 = vlaneseq
      %v4282 = vshrl.u32 %v4281, 7
      %v4283 = vsub.s32 %v4280, %v4282
      %v4284 = vrot.slane %v4276, %v4283
      %v4286 = vunpack.c.l.s4 1934713408
      %v4287 = vunpack.c.0.s8 %v4286
      %v4288 = vlaneseq
      %v4289 = vshrl.u32 %v4288, 7
      %v4290 = vsub.s32 %v4287, %v4289
      %v4291 = vrot.slane %v4277, %v4290
      %v4292 = vcombine.low %v4236, %v4268
      %v4293 = vcombine.high %v4236, %v4268
      %v4294 = vcombine.low %v4243, %v4275
      %v4295 = vcombine.high %v4243, %v4275
      %v4296 = vcombine.low %v4252, %v4284
      %v4297 = vcombine.high %v4252, %v4284
      %v4298 = vcombine.low %v4259, %v4291
      %v4299 = vcombine.high %v4259, %v4291
      %v4300 = vcombine.low %v3877, %v3881
      %v4301 = vcombine.high %v3877, %v3881
      %v4303 = vunpack.c.l.s4 1983009808
      %v4304 = vunpack.c.0.s8 %v4303
      %v4305 = vlaneseq
      %v4306 = vshrl.u32 %v4305, 7
      %v4307 = vsub.s32 %v4304, %v4306
      %v4308 = vrot.slane %v4300, %v4307
      %v4310 = vunpack.c.l.s4 1983009808
      %v4311 = vunpack.c.0.s8 %v4310
      %v4312 = vlaneseq
      %v4313 = vshrl.u32 %v4312, 7
      %v4314 = vsub.s32 %v4311, %v4313
      %v4315 = vrot.slane %v4301, %v4314
      %v4316 = vcombine.low %v3879, %v3883
      %v4317 = vcombine.high %v3879, %v3883
      %v4319 = vunpack.c.l.s4 1983009808
      %v4320 = vunpack.c.0.s8 %v4319
      %v4321 = vlaneseq
      %v4322 = vshrl.u32 %v4321, 7
      %v4323 = vsub.s32 %v4320, %v4322
      %v4324 = vrot.slane %v4316, %v4323
      %v4326 = vunpack.c.l.s4 1983009808
      %v4327 = vunpack.c.0.s8 %v4326
      %v4328 = vlaneseq
      %v4329 = vshrl.u32 %v4328, 7
      %v4330 = vsub.s32 %v4327, %v4329
      %v4331 = vrot.slane %v4317, %v4330
      %v4332 = vcombine.low %v3885, %v3889
      %v4333 = vcombine.high %v3885, %v3889
      %v4335 = vunpack.c.l.s4 1983009808
      %v4336 = vunpack.c.0.s8 %v4335
      %v4337 = vlaneseq
      %v4338 = vshrl.u32 %v4337, 7
      %v4339 = vsub.s32 %v4336, %v4338
      %v4340 = vrot.slane %v4332, %v4339
      %v4342 = vunpack.c.l.s4 1983009808
      %v4343 = vunpack.c.0.s8 %v4342
      %v4344 = vlaneseq
      %v4345 = vshrl.u32 %v4344, 7
      %v4346 = vsub.s32 %v4343, %v4345
      %v4347 = vrot.slane %v4333, %v4346
      %v4348 = vcombine.low %v3887, %v3891
      %v4349 = vcombine.high %v3887, %v3891
      %v4351 = vunpack.c.l.s4 1983009808
      %v4352 = vunpack.c.0.s8 %v4351
      %v4353 = vlaneseq
      %v4354 = vshrl.u32 %v4353, 7
      %v4355 = vsub.s32 %v4352, %v4354
      %v4356 = vrot.slane %v4348, %v4355
      %v4358 = vunpack.c.l.s4 1983009808
      %v4359 = vunpack.c.0.s8 %v4358
      %v4360 = vlaneseq
      %v4361 = vshrl.u32 %v4360, 7
      %v4362 = vsub.s32 %v4359, %v4361
      %v4363 = vrot.slane %v4349, %v4362
      %v4364 = vcombine.low %v4308, %v4324
      %v4365 = vcombine.high %v4308, %v4324
      %v4367 = vunpack.c.l.s4 1934713408
      %v4368 = vunpack.c.0.s8 %v4367
      %v4369 = vlaneseq
      %v4370 = vshrl.u32 %v4369, 7
      %v4371 = vsub.s32 %v4368, %v4370
      %v4372 = vrot.slane %v4364, %v4371
      %v4374 = vunpack.c.l.s4 1934713408
      %v4375 = vunpack.c.0.s8 %v4374
      %v4376 = vlaneseq
      %v4377 = vshrl.u32 %v4376, 7
      %v4378 = vsub.s32 %v4375, %v4377
      %v4379 = vrot.slane %v4365, %v4378
      %v4380 = vcombine.low %v4315, %v4331
      %v4381 = vcombine.high %v4315, %v4331
      %v4383 = vunpack.c.l.s4 1934713408
      %v4384 = vunpack.c.0.s8 %v4383
      %v4385 = vlaneseq
      %v4386 = vshrl.u32 %v4385, 7
      %v4387 = vsub.s32 %v4384, %v4386
      %v4388 = vrot.slane %v4380, %v4387
      %v4390 = vunpack.c.l.s4 1934713408
      %v4391 = vunpack.c.0.s8 %v4390
      %v4392 = vlaneseq
      %v4393 = vshrl.u32 %v4392, 7
      %v4394 = vsub.s32 %v4391, %v4393
      %v4395 = vrot.slane %v4381, %v4394
      %v4396 = vcombine.low %v4340, %v4356
      %v4397 = vcombine.high %v4340, %v4356
      %v4399 = vunpack.c.l.s4 1934713408
      %v4400 = vunpack.c.0.s8 %v4399
      %v4401 = vlaneseq
      %v4402 = vshrl.u32 %v4401, 7
      %v4403 = vsub.s32 %v4400, %v4402
      %v4404 = vrot.slane %v4396, %v4403
      %v4406 = vunpack.c.l.s4 1934713408
      %v4407 = vunpack.c.0.s8 %v4406
      %v4408 = vlaneseq
      %v4409 = vshrl.u32 %v4408, 7
      %v4410 = vsub.s32 %v4407, %v4409
      %v4411 = vrot.slane %v4397, %v4410
      %v4412 = vcombine.low %v4347, %v4363
      %v4413 = vcombine.high %v4347, %v4363
      %v4415 = vunpack.c.l.s4 1934713408
      %v4416 = vunpack.c.0.s8 %v4415
      %v4417 = vlaneseq
      %v4418 = vshrl.u32 %v4417, 7
      %v4419 = vsub.s32 %v4416, %v4418
      %v4420 = vrot.slane %v4412, %v4419
      %v4422 = vunpack.c.l.s4 1934713408
      %v4423 = vunpack.c.0.s8 %v4422
      %v4424 = vlaneseq
      %v4425 = vshrl.u32 %v4424, 7
      %v4426 = vsub.s32 %v4423, %v4425
      %v4427 = vrot.slane %v4413, %v4426
      %v4428 = vcombine.low %v4372, %v4404
      %v4429 = vcombine.high %v4372, %v4404
      %v4430 = vcombine.low %v4379, %v4411
      %v4431 = vcombine.high %v4379, %v4411
      %v4432 = vcombine.low %v4388, %v4420
      %v4433 = vcombine.high %v4388, %v4420
      %v4434 = vcombine.low %v4395, %v4427
      %v4435 = vcombine.high %v4395, %v4427
      %4438 = vrot.lane.b32.xlu0 %v4021, 16
      %v4439 = vpop.permute.xlu0 %4438
      %4440 = vrot.lane.b32.xlu0 %v4157, 16
      %v4441 = vpop.permute.xlu0 %4440
      %4446 = vrot.lane.b32.xlu0 %v4022, 32
      %v4447 = vpop.permute.xlu0 %4446
      %4448 = vrot.lane.b32.xlu0 %v4158, 32
      %v4449 = vpop.permute.xlu0 %4448
      %4454 = vrot.lane.b32.xlu0 %v4023, 48
      %v4455 = vpop.permute.xlu0 %4454
      %4456 = vrot.lane.b32.xlu0 %v4159, 48
      %v4457 = vpop.permute.xlu0 %4456
      %4462 = vrot.lane.b32.xlu0 %v4024, 64
      %v4463 = vpop.permute.xlu0 %4462
      %4464 = vrot.lane.b32.xlu0 %v4160, 64
      %v4465 = vpop.permute.xlu0 %4464
      %4470 = vrot.lane.b32.xlu0 %v4025, 80
      %v4471 = vpop.permute.xlu0 %4470
      %4472 = vrot.lane.b32.xlu0 %v4161, 80
      %v4473 = vpop.permute.xlu0 %4472
      %4478 = vrot.lane.b32.xlu0 %v4026, 96
      %v4479 = vpop.permute.xlu0 %4478
      %4480 = vrot.lane.b32.xlu0 %v4162, 96
      %v4481 = vpop.permute.xlu0 %4480
      %4486 = vrot.lane.b32.xlu0 %v4027, 112
      %v4487 = vpop.permute.xlu0 %4486
      %4488 = vrot.lane.b32.xlu0 %v4163, 112
      %v4489 = vpop.permute.xlu0 %4488
      %4494 = vrot.lane.b32.xlu0 %v4293, 16
      %v4495 = vpop.permute.xlu0 %4494
      %4496 = vrot.lane.b32.xlu0 %v4429, 16
      %v4497 = vpop.permute.xlu0 %4496
      %4502 = vrot.lane.b32.xlu0 %v4294, 32
      %v4503 = vpop.permute.xlu0 %4502
      %4504 = vrot.lane.b32.xlu0 %v4430, 32
      %v4505 = vpop.permute.xlu0 %4504
      %4510 = vrot.lane.b32.xlu0 %v4295, 48
      %v4511 = vpop.permute.xlu0 %4510
      %4512 = vrot.lane.b32.xlu0 %v4431, 48
      %v4513 = vpop.permute.xlu0 %4512
      %4518 = vrot.lane.b32.xlu0 %v4296, 64
      %v4519 = vpop.permute.xlu0 %4518
      %4520 = vrot.lane.b32.xlu0 %v4432, 64
      %v4521 = vpop.permute.xlu0 %4520
      %4526 = vrot.lane.b32.xlu0 %v4297, 80
      %v4527 = vpop.permute.xlu0 %4526
      %4528 = vrot.lane.b32.xlu0 %v4433, 80
      %v4529 = vpop.permute.xlu0 %4528
      %4534 = vrot.lane.b32.xlu0 %v4298, 96
      %v4535 = vpop.permute.xlu0 %4534
      %4536 = vrot.lane.b32.xlu0 %v4434, 96
      %v4537 = vpop.permute.xlu0 %4536
      %4542 = vrot.lane.b32.xlu0 %v4299, 112
      %v4543 = vpop.permute.xlu0 %4542
      %4544 = vrot.lane.b32.xlu0 %v4435, 112
      %v4545 = vpop.permute.xlu0 %4544
      %vm4548 = vcmask 130048
      %v4549 = vsel %vm4548, %v4020, %v4439
      %v4550 = vsel %vm4548, %v4156, %v4441
      %vm4551 = vcmask 261120
      %v4552 = vsel %vm4551, %v4549, %v4447
      %v4553 = vsel %vm4551, %v4550, %v4449
      %vm4554 = vcmask 392192
      %v4555 = vsel %vm4554, %v4552, %v4455
      %v4556 = vsel %vm4554, %v4553, %v4457
      %vm4557 = vcmask 523264
      %v4558 = vsel %vm4557, %v4555, %v4463
      %v4559 = vsel %vm4557, %v4556, %v4465
      %vm4560 = vcmask 654336
      %v4561 = vsel %vm4560, %v4558, %v4471
      %v4562 = vsel %vm4560, %v4559, %v4473
      %vm4563 = vcmask 785408
      %v4564 = vsel %vm4563, %v4561, %v4479
      %v4565 = vsel %vm4563, %v4562, %v4481
      %vm4566 = vcmask 916480
      %v4567 = vsel %vm4566, %v4564, %v4487
      %v4568 = vsel %vm4566, %v4565, %v4489
      %v4569 = vsel %vm4548, %v4292, %v4495
      %v4570 = vsel %vm4548, %v4428, %v4497
      %v4571 = vsel %vm4551, %v4569, %v4503
      %v4572 = vsel %vm4551, %v4570, %v4505
      %v4573 = vsel %vm4554, %v4571, %v4511
      %v4574 = vsel %vm4554, %v4572, %v4513
      %v4575 = vsel %vm4557, %v4573, %v4519
      %v4576 = vsel %vm4557, %v4574, %v4521
      %v4577 = vsel %vm4560, %v4575, %v4527
      %v4578 = vsel %vm4560, %v4576, %v4529
      %v4579 = vsel %vm4563, %v4577, %v4535
      %v4580 = vsel %vm4563, %v4578, %v4537
      %v4581 = vsel %vm4566, %v4579, %v4543
      %v4582 = vsel %vm4566, %v4580, %v4545
      %v4583 = vld [vmem:[%s5] sm:$0xff]
      %v4584 = vld [vmem:[%s5 + $0x8] sm:$0xff]
      %4586 = vset.pattern.permute.xlu0 0
      %4587 = vperm.xlu0 %4586, %v4583
      %v4588 = vpop.permute.xlu0 %4587
      %4591 = vset.pattern.permute.xlu0 0
      %4592 = vperm.xlu0 %4591, %v4584
      %v4593 = vpop.permute.xlu0 %4592
      %v4595 = vmul.f32 %v4567, %v4588
      %v4596 = vmul.f32 %v4581, %v4588
      %v4597 = vmul.f32 %v4568, %v4593
      %v4598 = vmul.f32 %v4582, %v4593
      %v4599 = vld [vmem:[%s6] sm:$0xff]
      %v4600 = vld [vmem:[%s6 + $0x8] sm:$0xff]
      %4602 = vset.pattern.permute.xlu0 0
      %4603 = vperm.xlu0 %4602, %v4599
      %v4604 = vpop.permute.xlu0 %4603
      %4607 = vset.pattern.permute.xlu0 0
      %4608 = vperm.xlu0 %4607, %v4600
      %v4609 = vpop.permute.xlu0 %4608
      %v4611 = vadd.f32 %v4595, %v4604
      %v4612 = vadd.f32 %v4596, %v4604
      %v4613 = vadd.f32 %v4597, %v4609
      %v4614 = vadd.f32 %v4598, %v4609
      %v4615 = vmax.f32 %v4611, 0.0
      %v4616 = vmax.f32 %v4612, 0.0
      %v4617 = vmax.f32 %v4613, 0.0
      %v4618 = vmax.f32 %v4614, 0.0
      %v4619 = vadd.f32 %v4615, %v4616
      %4620 = vadd.xlane.f32.xlu0 %v4619
      %v4621 = vpop.xlane.xlu0 %4620
      %v4622 = vadd.f32 %v4617, %v4618
      %4623 = vadd.xlane.f32.xlu0 %v4622
      %v4624 = vpop.xlane.xlu0 %4623
      %v4625 = vrcp.pop 256.0
      %v4626 = vmul.f32 %v4621, %v4625
      %v4627 = vmul.f32 %v4624, %v4625
      %v4628 = vld [vmem:[%s7] sm:$0xff]
      %v4629 = vld [vmem:[%s8] sm:$0xff]
      %v4631 = vsel %vm4548, %v4628, 0
      %4633 = vmatprep.subr.mxu0 0.0
      %4634 = vmatpush1.msra.mxu0 %v4626
      %4635 = vmatprep.subr.mxu0 0.0
      %4636 = vmatpush1.msra.mxu0 %v4627
      %4637 = vmatprep.subr.mxu0 0.0
      %4638 = vmatpush1.msra.mxu0 0.0
      %4639 = vmatprep.subr.mxu0 0.0
      %4640 = vmatpush1.msra.mxu0 0.0
      %4641 = vmatprep.subr.mxu0 0.0
      %4642 = vmatpush1.msra.mxu0 0.0
      %4643 = vmatprep.subr.mxu0 0.0
      %4644 = vmatpush1.msra.mxu0 0.0
      %4645 = vmatprep.subr.mxu0 0.0
      %4646 = vmatpush1.msra.mxu0 0.0
      %4647 = vmatprep.subr.mxu0 0.0
      %4648 = vmatpush1.msra.mxu0 0.0
      %4649 = vmatprep.subr.mxu0 0.0
      %4650 = vmatpush1.msra.mxu0 0.0
      %4651 = vmatprep.subr.mxu0 0.0
      %4652 = vmatpush1.msra.mxu0 0.0
      %4653 = vmatprep.subr.mxu0 0.0
      %4654 = vmatpush1.msra.mxu0 0.0
      %4655 = vmatprep.subr.mxu0 0.0
      %4656 = vmatpush1.msra.mxu0 0.0
      %4657 = vmatprep.subr.mxu0 0.0
      %4658 = vmatpush1.msra.mxu0 0.0
      %4659 = vmatprep.subr.mxu0 0.0
      %4660 = vmatpush1.msra.mxu0 0.0
      %4661 = vmatprep.subr.mxu0 0.0
      %4662 = vmatpush1.msra.mxu0 0.0
      %4663 = vmatprep.subr.mxu0 0.0
      %4664 = vmatpush1.msra.mxu0 0.0
      %4665 = vmatprep.subr.mxu0 0.0
      %4666 = vmatpush1.msra.mxu0 0.0
      %4667 = vmatprep.subr.mxu0 0.0
      %4668 = vmatpush1.msra.mxu0 0.0
      %4669 = vmatprep.subr.mxu0 0.0
      %4670 = vmatpush1.msra.mxu0 0.0
      %4671 = vmatprep.subr.mxu0 0.0
      %4672 = vmatpush1.msra.mxu0 0.0
      %4673 = vmatprep.subr.mxu0 0.0
      %4674 = vmatpush1.msra.mxu0 0.0
      %4675 = vmatprep.subr.mxu0 0.0
      %4676 = vmatpush1.msra.mxu0 0.0
      %4677 = vmatprep.subr.mxu0 0.0
      %4678 = vmatpush1.msra.mxu0 0.0
      %4679 = vmatprep.subr.mxu0 0.0
      %4680 = vmatpush1.msra.mxu0 0.0
      %4681 = vmatprep.subr.mxu0 0.0
      %4682 = vmatpush1.msra.mxu0 0.0
      %4683 = vmatprep.subr.mxu0 0.0
      %4684 = vmatpush1.msra.mxu0 0.0
      %4685 = vmatprep.subr.mxu0 0.0
      %4686 = vmatpush1.msra.mxu0 0.0
      %4687 = vmatprep.subr.mxu0 0.0
      %4688 = vmatpush1.msra.mxu0 0.0
      %4689 = vmatprep.subr.mxu0 0.0
      %4690 = vmatpush1.msra.mxu0 0.0
      %4691 = vmatprep.subr.mxu0 0.0
      %4692 = vmatpush1.msra.mxu0 0.0
      %4693 = vmatprep.subr.mxu0 0.0
      %4694 = vmatpush1.msra.mxu0 0.0
      %4695 = vmatprep.subr.mxu0 0.0
      %4696 = vmatpush1.msra.mxu0 0.0
      %4697 = vmatprep.mubr.f32.mxu0 0.0
      %4698 = vmatmul.mubr.f32.gmra.mrb[0].mxu0 %v4631
      %v4699 = vpop.f32.mrb[0].mxu0
      %v4700 = vadd.f32 %v4629, %v4699
      %v4701 = vpop.f32.mrb[0].mxu0
      %4702 = vdwg.mxu0
      %v4703 = vmax.f32 %v4700, 0.0
      %v4704 = vld [vmem:[%s9] sm:$0xff]
      %v4705 = vld [vmem:[%s9 + $0x8] sm:$0xff]
      %v4706 = vld [vmem:[%s10] sm:$0xff]
      %v4707 = vld [vmem:[%s10 + $0x8] sm:$0xff]
      %v4709 = vsel %vm472, %v4704, 0
      %v4712 = vsel %vm472, %v4705, 0
      %4714 = vmatprep.subr.mxu0 0.0
      %4715 = vmatpush1.msra.mxu0 %v4703
      %4716 = vmatprep.subr.mxu0 0.0
      %4717 = vmatpush1.msra.mxu0 0.0
      %4718 = vmatprep.subr.mxu0 0.0
      %4719 = vmatpush1.msra.mxu0 0.0
      %4720 = vmatprep.subr.mxu0 0.0
      %4721 = vmatpush1.msra.mxu0 0.0
      %4722 = vmatprep.subr.mxu0 0.0
      %4723 = vmatpush1.msra.mxu0 0.0
      %4724 = vmatprep.subr.mxu0 0.0
      %4725 = vmatpush1.msra.mxu0 0.0
      %4726 = vmatprep.subr.mxu0 0.0
      %4727 = vmatpush1.msra.mxu0 0.0
      %4728 = vmatprep.subr.mxu0 0.0
      %4729 = vmatpush1.msra.mxu0 0.0
      %4730 = vmatprep.subr.mxu0 0.0
      %4731 = vmatpush1.msra.mxu0 0.0
      %4732 = vmatprep.subr.mxu0 0.0
      %4733 = vmatpush1.msra.mxu0 0.0
      %4734 = vmatprep.subr.mxu0 0.0
      %4735 = vmatpush1.msra.mxu0 0.0
      %4736 = vmatprep.subr.mxu0 0.0
      %4737 = vmatpush1.msra.mxu0 0.0
      %4738 = vmatprep.subr.mxu0 0.0
      %4739 = vmatpush1.msra.mxu0 0.0
      %4740 = vmatprep.subr.mxu0 0.0
      %4741 = vmatpush1.msra.mxu0 0.0
      %4742 = vmatprep.subr.mxu0 0.0
      %4743 = vmatpush1.msra.mxu0 0.0
      %4744 = vmatprep.subr.mxu0 0.0
      %4745 = vmatpush1.msra.mxu0 0.0
      %4746 = vmatprep.subr.mxu0 0.0
      %4747 = vmatpush1.msra.mxu0 0.0
      %4748 = vmatprep.subr.mxu0 0.0
      %4749 = vmatpush1.msra.mxu0 0.0
      %4750 = vmatprep.subr.mxu0 0.0
      %4751 = vmatpush1.msra.mxu0 0.0
      %4752 = vmatprep.subr.mxu0 0.0
      %4753 = vmatpush1.msra.mxu0 0.0
      %4754 = vmatprep.subr.mxu0 0.0
      %4755 = vmatpush1.msra.mxu0 0.0
      %4756 = vmatprep.subr.mxu0 0.0
      %4757 = vmatpush1.msra.mxu0 0.0
      %4758 = vmatprep.subr.mxu0 0.0
      %4759 = vmatpush1.msra.mxu0 0.0
      %4760 = vmatprep.subr.mxu0 0.0
      %4761 = vmatpush1.msra.mxu0 0.0
      %4762 = vmatprep.subr.mxu0 0.0
      %4763 = vmatpush1.msra.mxu0 0.0
      %4764 = vmatprep.subr.mxu0 0.0
      %4765 = vmatpush1.msra.mxu0 0.0
      %4766 = vmatprep.subr.mxu0 0.0
      %4767 = vmatpush1.msra.mxu0 0.0
      %4768 = vmatprep.subr.mxu0 0.0
      %4769 = vmatpush1.msra.mxu0 0.0
      %4770 = vmatprep.subr.mxu0 0.0
      %4771 = vmatpush1.msra.mxu0 0.0
      %4772 = vmatprep.subr.mxu0 0.0
      %4773 = vmatpush1.msra.mxu0 0.0
      %4774 = vmatprep.subr.mxu0 0.0
      %4775 = vmatpush1.msra.mxu0 0.0
      %4776 = vmatprep.subr.mxu0 0.0
      %4777 = vmatpush1.msra.mxu0 0.0
      %4778 = vmatprep.mubr.f32.mxu0 0.0
      %4779 = vmatmul.mubr.f32.gmra.mrb[0].mxu0 %v4709
      %v4780 = vpop.f32.mrb[0].mxu0
      %v4781 = vadd.f32 %v4706, %v4780
      %v4782 = vpop.f32.mrb[0].mxu0
      %4783 = vmatprep.mubr.f32.mxu0 0.0
      %4784 = vmatmul.mubr.f32.gmra.mrb[0].mxu0 %v4712
      %v4785 = vpop.f32.mrb[0].mxu0
      %v4786 = vadd.f32 %v4707, %v4785
      %v4787 = vpop.f32.mrb[0].mxu0
      %4788 = vdwg.mxu0
      %v4789 = vrcp.pop 6.0
      %v4790 = vmul.f32 %v4781, %v4789
      %v4791 = vmul.f32 %v4786, %v4789
      %v4792 = vadd.f32 %v4790, 0.5
      %v4793 = vadd.f32 %v4791, 0.5
      %v4794 = vmax.f32 %v4792, 0.0
      %v4795 = vmax.f32 %v4793, 0.0
      %v4796 = vmin.f32 %v4794, 1.0
      %v4797 = vmin.f32 %v4795, 1.0
      %4799 = vset.pattern.permute.xlu0 0
      %4800 = vperm.xlu0 %4799, %v4796
      %v4801 = vpop.permute.xlu0 %4800
      %4804 = vset.pattern.permute.xlu0 0
      %4805 = vperm.xlu0 %4804, %v4797
      %v4806 = vpop.permute.xlu0 %4805
      %v4808 = vmul.f32 %v4615, %v4801
      %v4809 = vmul.f32 %v4616, %v4801
      %v4810 = vmul.f32 %v4617, %v4806
      %v4811 = vmul.f32 %v4618, %v4806
      %v4812 = vld [vmem:[%s11] sm:$0xff]
      %v4814 = vsel %vm4548, %v4812, 0
      %4816 = vmatprep.subr.mxu0 %v4809
      %4817 = vmatpush1.msra.mxu0 %v4808
      %4818 = vmatprep.subr.mxu0 %v4811
      %4819 = vmatpush1.msra.mxu0 %v4810
      %4820 = vmatprep.subr.mxu0 0.0
      %4821 = vmatpush1.msra.mxu0 0.0
      %4822 = vmatprep.subr.mxu0 0.0
      %4823 = vmatpush1.msra.mxu0 0.0
      %4824 = vmatprep.subr.mxu0 0.0
      %4825 = vmatpush1.msra.mxu0 0.0
      %4826 = vmatprep.subr.mxu0 0.0
      %4827 = vmatpush1.msra.mxu0 0.0
      %4828 = vmatprep.subr.mxu0 0.0
      %4829 = vmatpush1.msra.mxu0 0.0
      %4830 = vmatprep.subr.mxu0 0.0
      %4831 = vmatpush1.msra.mxu0 0.0
      %4832 = vmatprep.subr.mxu0 0.0
      %4833 = vmatpush1.msra.mxu0 0.0
      %4834 = vmatprep.subr.mxu0 0.0
      %4835 = vmatpush1.msra.mxu0 0.0
      %4836 = vmatprep.subr.mxu0 0.0
      %4837 = vmatpush1.msra.mxu0 0.0
      %4838 = vmatprep.subr.mxu0 0.0
      %4839 = vmatpush1.msra.mxu0 0.0
      %4840 = vmatprep.subr.mxu0 0.0
      %4841 = vmatpush1.msra.mxu0 0.0
      %4842 = vmatprep.subr.mxu0 0.0
      %4843 = vmatpush1.msra.mxu0 0.0
      %4844 = vmatprep.subr.mxu0 0.0
      %4845 = vmatpush1.msra.mxu0 0.0
      %4846 = vmatprep.subr.mxu0 0.0
      %4847 = vmatpush1.msra.mxu0 0.0
      %4848 = vmatprep.subr.mxu0 0.0
      %4849 = vmatpush1.msra.mxu0 0.0
      %4850 = vmatprep.subr.mxu0 0.0
      %4851 = vmatpush1.msra.mxu0 0.0
      %4852 = vmatprep.subr.mxu0 0.0
      %4853 = vmatpush1.msra.mxu0 0.0
      %4854 = vmatprep.subr.mxu0 0.0
      %4855 = vmatpush1.msra.mxu0 0.0
      %4856 = vmatprep.subr.mxu0 0.0
      %4857 = vmatpush1.msra.mxu0 0.0
      %4858 = vmatprep.subr.mxu0 0.0
      %4859 = vmatpush1.msra.mxu0 0.0
      %4860 = vmatprep.subr.mxu0 0.0
      %4861 = vmatpush1.msra.mxu0 0.0
      %4862 = vmatprep.subr.mxu0 0.0
      %4863 = vmatpush1.msra.mxu0 0.0
      %4864 = vmatprep.subr.mxu0 0.0
      %4865 = vmatpush1.msra.mxu0 0.0
      %4866 = vmatprep.subr.mxu0 0.0
      %4867 = vmatpush1.msra.mxu0 0.0
      %4868 = vmatprep.subr.mxu0 0.0
      %4869 = vmatpush1.msra.mxu0 0.0
      %4870 = vmatprep.subr.mxu0 0.0
      %4871 = vmatpush1.msra.mxu0 0.0
      %4872 = vmatprep.subr.mxu0 0.0
      %4873 = vmatpush1.msra.mxu0 0.0
      %4874 = vmatprep.subr.mxu0 0.0
      %4875 = vmatpush1.msra.mxu0 0.0
      %4876 = vmatprep.subr.mxu0 0.0
      %4877 = vmatpush1.msra.mxu0 0.0
      %4878 = vmatprep.subr.mxu0 0.0
      %4879 = vmatpush1.msra.mxu0 0.0
      %4880 = vmatprep.mubr.f32.mxu0 0.0
      %4881 = vmatmul.mubr.f32.gmra.mrb[0].mxu0 %v4814
      %v4882 = vpop.f32.mrb[0].mxu0
      %v4883 = vadd.f32 0.0, %v4882
      %v4884 = vpop.f32.mrb[0].mxu0
      %v4885 = vadd.f32 0.0, %v4884
      %4886 = vdwg.mxu0
      %v4887 = vld [vmem:[%s12] sm:$0xff]
      %4889 = vset.pattern.permute.xlu0 0
      %4890 = vperm.xlu0 %4889, %v4887
      %v4891 = vpop.permute.xlu0 %4890
      %v4893 = vmul.f32 %v4883, %v4891
      %v4894 = vmul.f32 %v4885, %v4891
      %v4895 = vld [vmem:[%s13] sm:$0xff]
      %4897 = vset.pattern.permute.xlu0 0
      %4898 = vperm.xlu0 %4897, %v4895
      %v4899 = vpop.permute.xlu0 %4898
      %v4901 = vadd.f32 %v4893, %v4899
      %v4902 = vadd.f32 %v4894, %v4899
      %v4903 = vadd.f32 %v4901, %v468
      %v4904 = vadd.f32 %v4902, %v469
      %4905 = vst [vmem:[%s467] sm:$0xff] %v4903
      %4906 = vst [vmem:[%s467 + $0x8] sm:$0xff] %v4904
      %p4907 = scmp.lt.s32.totalorder %s25, 1
      %s4908 = scalar_select %p4907, %s25, 1
      %s4909 = smul.addr %s4908, 2
      %s4910 = smul.addr %s4909, 8
      %s4911 = scalar_lea.vmem %s14, %s4910
      // Predicated region
      $region77: #{inverted_residual_pallas.1} parent=75 // pred_check
        %p4912 = pneg %p342
      $region78: #{inverted_residual_pallas.1} parent=75 // pred_check_branch
        %4914 = sbr.rel (%p4912) target = $region80
      $region79: #{inverted_residual_pallas.1} parent=75 // pred_region
        _
      $region80: #{inverted_residual_pallas.1} parent=75 // pred_fallthru
        _
    $region76: #{inverted_residual_pallas.1} parent=5 // pred_fallthru
      _
    %p4915 = scmp.le.s32.totalorder 2, %s20
    // Predicated region
    $region81: #{inverted_residual_pallas.1} parent=5 // pred_check
      %p4916 = pneg %p4915
    $region82: #{inverted_residual_pallas.1} parent=5 // pred_check_branch
      %4918 = sbr.rel (%p4916) target = $region84
    $region83: #{inverted_residual_pallas.1} parent=5 // pred_region
      %s4919 = ssub.s32 %s20, 2
      // Predicated region
      $region85: #{inverted_residual_pallas.1} parent=83 // pred_check
        %p4920 = pneg %p348
      $region86: #{inverted_residual_pallas.1} parent=83 // pred_check_branch
        %4922 = sbr.rel (%p4920) target = $region88
      $region87: #{inverted_residual_pallas.1} parent=83 // pred_region
        %p4923 = scmp.lt.s32.totalorder %s26, 1
        %s4924 = scalar_select %p4923, %s26, 1
        %s4925 = smul.addr %s4924, 2
        %s4926 = smul.addr %s4925, 8
        %s4927 = scalar_lea.vmem %s14, %s4926
      $region88: #{inverted_residual_pallas.1} parent=83 // pred_fallthru
        _
    $region84: #{inverted_residual_pallas.1} parent=5 // pred_fallthru
      _
  $region6: #{inverted_residual_pallas.1} parent=0 // loop_footer
    %s24 = sadd.s32 1, %s20
  $region7: #{inverted_residual_pallas.1} parent=0 // loop_footer_branch
    %19 = sbr.rel target = $region3
  $region8: #{inverted_residual_pallas.1} parent=0 // loop_exit
    _

</llo_original>
